<compile_context>
chip_gen: v5e
topology: v5e:2x2
jax: 0.10.0
libtpu: 0.0.40
codegen_flags: <defaults>
</compile_context>

<pallas_src>
import numpy as np
import jax
import jax.numpy as jnp
from jax.experimental import pallas as pl
from jax.experimental.pallas import tpu as pltpu

BN_EPS = 1e-5
LANE = 128


def _round_up(x, m):
    return ((x + m - 1) // m) * m


def _conv_out(size, k, stride, pad):
    return (size + 2 * pad - k) // stride + 1


# ---------------------------------------------------------------------------
# Fused Pallas kernel (built as a closure over the static layer configuration)
# ---------------------------------------------------------------------------
def _bias_relu_bn(y, b, gamma, beta):
    """Conv2d bias + ReLU + BatchNorm2d with training-mode batch statistics, all in f32."""
    y = jnp.maximum(y + b, 0.0)
    mean = jnp.mean(y, axis=0, keepdims=True)                       # per-channel over N*H*W
    var = jnp.mean(jnp.square(y - mean), axis=0, keepdims=True)     # biased variance
    return (y - mean) * jax.lax.rsqrt(var + BN_EPS) * gamma + beta


def _make_fused_kernel(layer_meta, n_batch, s_final, c_final):
    """layer_meta: per layer 2..5 tuple (kk, cin, cout_pad, m_out, m_blk)."""

    def kernel(*refs):
        p1_ref, w1_ref, b1_ref, g1_ref, be1_ref = refs[:5]
        rest = refs[5:-1]
        o_ref = refs[-1]

        # ---- layer 1: patches arrive already in lane-dense im2col/MXU layout ----
        y = jnp.dot(p1_ref[...], w1_ref[...], preferred_element_type=jnp.float32)
        x = _bias_relu_bn(y, b1_ref[...], g1_ref[...], be1_ref[...])          # (M1, 128) f32

        # ---- layers 2..5: in-kernel gather-matmul convolution ----
        for li, (kk, cin, cout, m_out, m_blk) in enumerate(layer_meta):
            gsel_ref, w_ref, b_ref, gm_ref, be_ref = rest[5 * li:5 * li + 5]
            xb = x.astype(jnp.bfloat16)                                       # (R, cin)
            # gather padded/strided patches on the MXU: (kk*m_blk, R) @ (R, cin)
            p = jnp.dot(gsel_ref[...], xb, preferred_element_type=jnp.float32)
            pb = p.astype(jnp.bfloat16)
            acc = jnp.zeros((m_blk, cout), jnp.float32)
            for k in range(kk):                                               # sum of tap matmuls
                acc = acc + jnp.dot(pb[k * m_blk:(k + 1) * m_blk, :],
                                    w_ref[k * cin:(k + 1) * cin, :],
                                    preferred_element_type=jnp.float32)
            x = _bias_relu_bn(acc[:m_out, :], b_ref[...], gm_ref[...], be_ref[...])

        # ---- fused global average pool (AdaptiveAvgPool2d(1)) ----
        if s_final == 1:
            o_ref[...] = x
        else:
            o_ref[...] = jnp.mean(x.reshape(n_batch, s_final, c_final), axis=1)

    return kernel


# ---------------------------------------------------------------------------
# Host-side constant construction (gather matrices, parameters) and wrapper
# ---------------------------------------------------------------------------
def _gather_matrix(n, h, w, kh, kw, stride, pad):
    """0/1 matrix G with G[(ki*kw+kj)*m_blk + m, r] = 1 iff flattened input row r feeds kernel
    tap (ki, kj) of flattened output row m.  Rows are ordered batch-major / spatially row-major;
    out-of-bounds (zero-padding) taps are all-zero rows.  The per-tap block height is padded to a
    multiple of 8 so in-kernel row slices stay sublane-aligned."""
    oh, ow = _conv_out(h, kh, stride, pad), _conv_out(w, kw, stride, pad)
    m = n * oh * ow
    m_blk = max(_round_up(m, 8), 8)
    g = np.zeros((kh * kw * m_blk, n * h * w), np.float32)
    for bi in range(n):
        for oy in range(oh):
            for ox in range(ow):
                mm = (bi * oh + oy) * ow + ox
                for ki in range(kh):
                    for kj in range(kw):
                        iy = oy * stride + ki - pad
                        ix = ox * stride + kj - pad
                        if 0 <= iy < h and 0 <= ix < w:
                            rr = (bi * h + iy) * w + ix
                            g[(ki * kw + kj) * m_blk + mm, rr] = 1.0
    return g, oh, ow, m, m_blk


def _im2col_layer1(x_nhwc, kh, kw, stride, pad, k_pad):
    """One-time layout plumbing for layer 1: (N,H,W,Cin=4) -> lane-dense (N*OH*OW, k_pad) bf16."""
    n, h, w, c = x_nhwc.shape
    oh, ow = _conv_out(h, kh, stride, pad), _conv_out(w, kw, stride, pad)
    xp = jnp.pad(x_nhwc, ((0, 0), (pad, pad), (pad, pad), (0, 0)))
    cols = [xp[:, i:i + stride * oh:stride, j:j + stride * ow:stride, :]
            for i in range(kh) for j in range(kw)]
    patches = jnp.stack(cols, axis=3).reshape(n * oh * ow, kh * kw * c)
    patches = jnp.pad(patches, ((0, 0), (0, k_pad - kh * kw * c)))            # K: 100 -> 128
    return patches.astype(jnp.bfloat16)


def build_feature_extractor(key, ch_in, concat, n, h, w):
    """Synthetic parameters + static metadata, specialized to input shape (n, ch_in, h, w)."""
    ch_fin = ch_in * 2 * 2 if concat else ch_in * 2
    cfg = [
        (ch_in, 128, 5, 2, 2),      # (cin, cout, kernel, stride, pad)
        (128, 128, 3, 2, 1),
        (128, 128, 3, 2, 1),
        (128, 128, 3, 2, 1),
        (128, ch_fin, 3, 1, 1),
    ]

    # ---- layer 1: weight stored pre-reshaped for the im2col matmul, K padded 100 -> 128 ----
    cin1, cout1, k1, s1, pd1 = cfg[0]
    key, kw_, kb_ = jax.random.split(key, 3)
    k_dim = k1 * k1 * cin1
    k_dim_pad = _round_up(k_dim, LANE)
    w1 = jax.random.normal(kw_, (k1, k1, cin1, cout1), jnp.float32) / float(np.sqrt(k_dim))
    w1 = jnp.pad(w1.reshape(k_dim, cout1), ((0, k_dim_pad - k_dim), (0, 0))).astype(jnp.bfloat16)
    b1 = jax.random.normal(kb_, (1, cout1), jnp.float32) * 0.01
    g1 = jnp.ones((1, cout1), jnp.float32)     # BatchNorm2d default weight
    be1 = jnp.zeros((1, cout1), jnp.float32)   # BatchNorm2d default bias

    cur_h, cur_w = _conv_out(h, k1, s1, pd1), _conv_out(w, k1, s1, pd1)
    prev_cout = cout1

    layers, layer_meta = [], []
    for (cin, cout, ksz, st, pd) in cfg[1:]:
        assert cin == prev_cout
        key, kw_, kb_ = jax.random.split(key, 3)
        cout_pad = _round_up(cout, LANE)       # lane-dense output channels (16 -> 128 on layer 5)
        g_np, oh, ow, m_out, m_blk = _gather_matrix(n, cur_h, cur_w, ksz, ksz, st, pd)
        wl = (jax.random.normal(kw_, (ksz, ksz, cin, cout), jnp.float32)
              / float(np.sqrt(ksz * ksz * cin)))
        wl = jnp.pad(wl.reshape(ksz * ksz * cin, cout),
                     ((0, 0), (0, cout_pad - cout))).astype(jnp.bfloat16)
        bl = jnp.pad(jax.random.normal(kb_, (1, cout), jnp.float32) * 0.01,
                     ((0, 0), (0, cout_pad - cout)))
        gl = jnp.ones((1, cout_pad), jnp.float32)
        bel = jnp.zeros((1, cout_pad), jnp.float32)
        layers.append((jnp.asarray(g_np, dtype=jnp.bfloat16), wl, bl, gl, bel))
        layer_meta.append((ksz * ksz, cin, cout_pad, m_out, m_blk))
        cur_h, cur_w, prev_cout = oh, ow, cout_pad

    return {
        "layer1": (w1, b1, g1, be1),
        "layers": layers,
        "layer_meta": tuple(layer_meta),
        "conv1": (k1, s1, pd1, k_dim_pad),
        "n": n,
        "s_final": cur_h * cur_w,
        "c_final": prev_cout,       # padded channel count of the last layer (128)
        "ch_fin": ch_fin,           # real channel count (16)
    }


def feature_extractor(x_nchw, model):
    """Forward pass of FeatureExtractor: NCHW input -> (N, ch_fin, 1, 1), one fused kernel."""
    w1, b1, g1, be1 = model["layer1"]
    k1, s1, pd1, k_dim_pad = model["conv1"]
    n, s_final = model["n"], model["s_final"]
    c_final, ch_fin = model["c_final"], model["ch_fin"]

    x = jnp.transpose(x_nchw, (0, 2, 3, 1)).astype(jnp.float32)       # NCHW -> NHWC
    patches = _im2col_layer1(x, k1, k1, s1, pd1, k_dim_pad)           # (N*OH*OW, 128) bf16

    inputs = [patches, w1, b1, g1, be1]
    for layer in model["layers"]:
        inputs.extend(layer)

    kernel = _make_fused_kernel(model["layer_meta"], n, s_final, c_final)

    pooled = pl.pallas_call(
        kernel,
        grid=(1,),
        in_specs=[pl.BlockSpec(a.shape, lambda i: (0, 0)) for a in inputs],
        out_specs=pl.BlockSpec((n, c_final), lambda i: (0, 0)),
        out_shape=jax.ShapeDtypeStruct((n, c_final), jnp.float32),
        compiler_params=pltpu.CompilerParams(dimension_semantics=("arbitrary",)),
    )(*inputs)

    return pooled[:, :ch_fin, None, None]                             # (N, ch_fin, 1, 1)


# TODO(synk): BatchNorm2d running_mean/running_var buffer updates (training-time side effect)
#             are not tracked; they do not affect the forward output.

if __name__ == "__main__":
    key = jax.random.PRNGKey(0)
    kx, kp = jax.random.split(key)

    ch_in, concat = 4, True
    N, H, W = 2, 16, 16
    x = jax.random.normal(kx, (N, ch_in, H, W), jnp.float32)          # NCHW, like PyTorch input

    model = build_feature_extractor(kp, ch_in, concat, N, H, W)

    fwd = jax.jit(lambda inp: feature_extractor(inp, model))
    out = jax.block_until_ready(fwd(x))

    assert out.shape == (N, model["ch_fin"], 1, 1), out.shape
    assert bool(jnp.all(jnp.isfinite(out)))
    print("KERNEL_OK")
</pallas_src>

<mosaic_0001>
module attributes {stable_mosaic.version = 11 : i64} {
  func.func @kernel(%arg0: i32, %arg1: memref<128x128xbf16, #tpu.memory_space<vmem>>, %arg2: memref<128x128xbf16, #tpu.memory_space<vmem>>, %arg3: memref<1x128xf32, #tpu.memory_space<vmem>>, %arg4: memref<1x128xf32, #tpu.memory_space<vmem>>, %arg5: memref<1x128xf32, #tpu.memory_space<vmem>>, %arg6: memref<288x128xbf16, #tpu.memory_space<vmem>>, %arg7: memref<1152x128xbf16, #tpu.memory_space<vmem>>, %arg8: memref<1x128xf32, #tpu.memory_space<vmem>>, %arg9: memref<1x128xf32, #tpu.memory_space<vmem>>, %arg10: memref<1x128xf32, #tpu.memory_space<vmem>>, %arg11: memref<72x32xbf16, #tpu.memory_space<vmem>>, %arg12: memref<1152x128xbf16, #tpu.memory_space<vmem>>, %arg13: memref<1x128xf32, #tpu.memory_space<vmem>>, %arg14: memref<1x128xf32, #tpu.memory_space<vmem>>, %arg15: memref<1x128xf32, #tpu.memory_space<vmem>>, %arg16: memref<72x8xbf16, #tpu.memory_space<vmem>>, %arg17: memref<1152x128xbf16, #tpu.memory_space<vmem>>, %arg18: memref<1x128xf32, #tpu.memory_space<vmem>>, %arg19: memref<1x128xf32, #tpu.memory_space<vmem>>, %arg20: memref<1x128xf32, #tpu.memory_space<vmem>>, %arg21: memref<72x2xbf16, #tpu.memory_space<vmem>>, %arg22: memref<1152x128xbf16, #tpu.memory_space<vmem>>, %arg23: memref<1x128xf32, #tpu.memory_space<vmem>>, %arg24: memref<1x128xf32, #tpu.memory_space<vmem>>, %arg25: memref<1x128xf32, #tpu.memory_space<vmem>>, %arg26: memref<2x128xf32, #tpu.memory_space<vmem>>) attributes {dimension_semantics = [#tpu.dimension_semantics<arbitrary>], iteration_bounds = array<i64: 1>, scalar_prefetch = 0 : i64, scratch_operands = 0 : i64, tpu.core_type = #tpu.core_type<tc>, window_params = [{pipeline_mode = #tpu.pipeline_mode<synchronous>, transform_indices = @transform_0, window_bounds = array<i64: 128, 128>}, {pipeline_mode = #tpu.pipeline_mode<synchronous>, transform_indices = @transform_1, window_bounds = array<i64: 128, 128>}, {pipeline_mode = #tpu.pipeline_mode<synchronous>, transform_indices = @transform_2, window_bounds = array<i64: 1, 128>}, {pipeline_mode = #tpu.pipeline_mode<synchronous>, transform_indices = @transform_3, window_bounds = array<i64: 1, 128>}, {pipeline_mode = #tpu.pipeline_mode<synchronous>, transform_indices = @transform_4, window_bounds = array<i64: 1, 128>}, {pipeline_mode = #tpu.pipeline_mode<synchronous>, transform_indices = @transform_5, window_bounds = array<i64: 288, 128>}, {pipeline_mode = #tpu.pipeline_mode<synchronous>, transform_indices = @transform_6, window_bounds = array<i64: 1152, 128>}, {pipeline_mode = #tpu.pipeline_mode<synchronous>, transform_indices = @transform_7, window_bounds = array<i64: 1, 128>}, {pipeline_mode = #tpu.pipeline_mode<synchronous>, transform_indices = @transform_8, window_bounds = array<i64: 1, 128>}, {pipeline_mode = #tpu.pipeline_mode<synchronous>, transform_indices = @transform_9, window_bounds = array<i64: 1, 128>}, {pipeline_mode = #tpu.pipeline_mode<synchronous>, transform_indices = @transform_10, window_bounds = array<i64: 72, 32>}, {pipeline_mode = #tpu.pipeline_mode<synchronous>, transform_indices = @transform_11, window_bounds = array<i64: 1152, 128>}, {pipeline_mode = #tpu.pipeline_mode<synchronous>, transform_indices = @transform_12, window_bounds = array<i64: 1, 128>}, {pipeline_mode = #tpu.pipeline_mode<synchronous>, transform_indices = @transform_13, window_bounds = array<i64: 1, 128>}, {pipeline_mode = #tpu.pipeline_mode<synchronous>, transform_indices = @transform_14, window_bounds = array<i64: 1, 128>}, {pipeline_mode = #tpu.pipeline_mode<synchronous>, transform_indices = @transform_15, window_bounds = array<i64: 72, 8>}, {pipeline_mode = #tpu.pipeline_mode<synchronous>, transform_indices = @transform_16, window_bounds = array<i64: 1152, 128>}, {pipeline_mode = #tpu.pipeline_mode<synchronous>, transform_indices = @transform_17, window_bounds = array<i64: 1, 128>}, {pipeline_mode = #tpu.pipeline_mode<synchronous>, transform_indices = @transform_18, window_bounds = array<i64: 1, 128>}, {pipeline_mode = #tpu.pipeline_mode<synchronous>, transform_indices = @transform_19, window_bounds = array<i64: 1, 128>}, {pipeline_mode = #tpu.pipeline_mode<synchronous>, transform_indices = @transform_20, window_bounds = array<i64: 72, 2>}, {pipeline_mode = #tpu.pipeline_mode<synchronous>, transform_indices = @transform_21, window_bounds = array<i64: 1152, 128>}, {pipeline_mode = #tpu.pipeline_mode<synchronous>, transform_indices = @transform_22, window_bounds = array<i64: 1, 128>}, {pipeline_mode = #tpu.pipeline_mode<synchronous>, transform_indices = @transform_23, window_bounds = array<i64: 1, 128>}, {pipeline_mode = #tpu.pipeline_mode<synchronous>, transform_indices = @transform_24, window_bounds = array<i64: 1, 128>}, {pipeline_mode = #tpu.pipeline_mode<synchronous>, transform_indices = @transform_25, window_bounds = array<i64: 2, 128>}]} {
    %c0 = arith.constant 0 : index
    %c0_0 = arith.constant 0 : index
    %0 = vector.load %arg1[%c0, %c0_0] : memref<128x128xbf16, #tpu.memory_space<vmem>>, vector<128x128xbf16>
    %c0_1 = arith.constant 0 : index
    %c0_2 = arith.constant 0 : index
    %1 = vector.load %arg2[%c0_1, %c0_2] : memref<128x128xbf16, #tpu.memory_space<vmem>>, vector<128x128xbf16>
    %cst = arith.constant dense<0.000000e+00> : vector<128x128xf32>
    %2 = tpu.matmul %0, %1, %cst {dimension_numbers = #tpu.dot_dimension_numbers<[1], [0], [0], [1], [0, 0, 1, 1], [], []>} : vector<128x128xbf16>, vector<128x128xbf16>, vector<128x128xf32> -> vector<128x128xf32>
    %c0_3 = arith.constant 0 : index
    %c0_4 = arith.constant 0 : index
    %3 = vector.load %arg3[%c0_3, %c0_4] : memref<1x128xf32, #tpu.memory_space<vmem>>, vector<1x128xf32>
    %c0_5 = arith.constant 0 : index
    %c0_6 = arith.constant 0 : index
    %4 = vector.load %arg4[%c0_5, %c0_6] : memref<1x128xf32, #tpu.memory_space<vmem>>, vector<1x128xf32>
    %c0_7 = arith.constant 0 : index
    %c0_8 = arith.constant 0 : index
    %5 = vector.load %arg5[%c0_7, %c0_8] : memref<1x128xf32, #tpu.memory_space<vmem>>, vector<1x128xf32>
    %6 = vector.broadcast %3 : vector<1x128xf32> to vector<128x128xf32>
    %7 = arith.addf %2, %6 : vector<128x128xf32>
    %cst_9 = arith.constant 0.000000e+00 : f32
    %8 = vector.broadcast %cst_9 : f32 to vector<128x128xf32>
    %9 = arith.maximumf %7, %8 : vector<128x128xf32>
    %cst_10 = arith.constant dense<0.000000e+00> : vector<128xf32>
    %10 = vector.multi_reduction <add>, %9, %cst_10 [0] : vector<128x128xf32> to vector<128xf32>
    %11 = vector.shape_cast %10 : vector<128xf32> to vector<1x128xf32>
    %cst_11 = arith.constant 1.280000e+02 : f32
    %12 = vector.broadcast %cst_11 : f32 to vector<1x128xf32>
    %13 = arith.divf %11, %12 : vector<1x128xf32>
    %14 = vector.broadcast %13 : vector<1x128xf32> to vector<128x128xf32>
    %15 = arith.subf %9, %14 : vector<128x128xf32>
    %16 = arith.mulf %15, %15 : vector<128x128xf32>
    %cst_12 = arith.constant dense<0.000000e+00> : vector<128xf32>
    %17 = vector.multi_reduction <add>, %16, %cst_12 [0] : vector<128x128xf32> to vector<128xf32>
    %18 = vector.shape_cast %17 : vector<128xf32> to vector<1x128xf32>
    %cst_13 = arith.constant 1.280000e+02 : f32
    %19 = vector.broadcast %cst_13 : f32 to vector<1x128xf32>
    %20 = arith.divf %18, %19 : vector<1x128xf32>
    %21 = vector.broadcast %13 : vector<1x128xf32> to vector<128x128xf32>
    %22 = arith.subf %9, %21 : vector<128x128xf32>
    %cst_14 = arith.constant 9.99999974E-6 : f32
    %23 = vector.broadcast %cst_14 : f32 to vector<1x128xf32>
    %24 = arith.addf %20, %23 : vector<1x128xf32>
    %25 = math.rsqrt %24 : vector<1x128xf32>
    %26 = vector.broadcast %25 : vector<1x128xf32> to vector<128x128xf32>
    %27 = arith.mulf %22, %26 : vector<128x128xf32>
    %28 = vector.broadcast %4 : vector<1x128xf32> to vector<128x128xf32>
    %29 = arith.mulf %27, %28 : vector<128x128xf32>
    %30 = vector.broadcast %5 : vector<1x128xf32> to vector<128x128xf32>
    %31 = arith.addf %29, %30 : vector<128x128xf32>
    %32 = arith.truncf %31 : vector<128x128xf32> to vector<128x128xbf16>
    %c0_15 = arith.constant 0 : index
    %c0_16 = arith.constant 0 : index
    %33 = vector.load %arg6[%c0_15, %c0_16] : memref<288x128xbf16, #tpu.memory_space<vmem>>, vector<288x128xbf16>
    %cst_17 = arith.constant dense<0.000000e+00> : vector<288x128xf32>
    %34 = tpu.matmul %33, %32, %cst_17 {dimension_numbers = #tpu.dot_dimension_numbers<[1], [0], [0], [1], [0, 0, 1, 1], [], []>} : vector<288x128xbf16>, vector<128x128xbf16>, vector<288x128xf32> -> vector<288x128xf32>
    %35 = arith.truncf %34 : vector<288x128xf32> to vector<288x128xbf16>
    %cst_18 = arith.constant 0.000000e+00 : f32
    %36 = vector.broadcast %cst_18 : f32 to vector<32x128xf32>
    %37 = vector.extract_strided_slice %35 {offsets = [0, 0], sizes = [32, 128], strides = [1, 1]} : vector<288x128xbf16> to vector<32x128xbf16>
    %c0_19 = arith.constant 0 : index
    %c0_20 = arith.constant 0 : index
    %38 = vector.load %arg7[%c0_19, %c0_20] : memref<1152x128xbf16, #tpu.memory_space<vmem>>, vector<128x128xbf16>
    %cst_21 = arith.constant dense<0.000000e+00> : vector<32x128xf32>
    %39 = tpu.matmul %37, %38, %cst_21 {dimension_numbers = #tpu.dot_dimension_numbers<[1], [0], [0], [1], [0, 0, 1, 1], [], []>} : vector<32x128xbf16>, vector<128x128xbf16>, vector<32x128xf32> -> vector<32x128xf32>
    %40 = arith.addf %36, %39 : vector<32x128xf32>
    %41 = vector.extract_strided_slice %35 {offsets = [32, 0], sizes = [32, 128], strides = [1, 1]} : vector<288x128xbf16> to vector<32x128xbf16>
    %c128 = arith.constant 128 : index
    %c0_22 = arith.constant 0 : index
    %42 = vector.load %arg7[%c128, %c0_22] : memref<1152x128xbf16, #tpu.memory_space<vmem>>, vector<128x128xbf16>
    %cst_23 = arith.constant dense<0.000000e+00> : vector<32x128xf32>
    %43 = tpu.matmul %41, %42, %cst_23 {dimension_numbers = #tpu.dot_dimension_numbers<[1], [0], [0], [1], [0, 0, 1, 1], [], []>} : vector<32x128xbf16>, vector<128x128xbf16>, vector<32x128xf32> -> vector<32x128xf32>
    %44 = arith.addf %40, %43 : vector<32x128xf32>
    %45 = vector.extract_strided_slice %35 {offsets = [64, 0], sizes = [32, 128], strides = [1, 1]} : vector<288x128xbf16> to vector<32x128xbf16>
    %c256 = arith.constant 256 : index
    %c0_24 = arith.constant 0 : index
    %46 = vector.load %arg7[%c256, %c0_24] : memref<1152x128xbf16, #tpu.memory_space<vmem>>, vector<128x128xbf16>
    %cst_25 = arith.constant dense<0.000000e+00> : vector<32x128xf32>
    %47 = tpu.matmul %45, %46, %cst_25 {dimension_numbers = #tpu.dot_dimension_numbers<[1], [0], [0], [1], [0, 0, 1, 1], [], []>} : vector<32x128xbf16>, vector<128x128xbf16>, vector<32x128xf32> -> vector<32x128xf32>
    %48 = arith.addf %44, %47 : vector<32x128xf32>
    %49 = vector.extract_strided_slice %35 {offsets = [96, 0], sizes = [32, 128], strides = [1, 1]} : vector<288x128xbf16> to vector<32x128xbf16>
    %c384 = arith.constant 384 : index
    %c0_26 = arith.constant 0 : index
    %50 = vector.load %arg7[%c384, %c0_26] : memref<1152x128xbf16, #tpu.memory_space<vmem>>, vector<128x128xbf16>
    %cst_27 = arith.constant dense<0.000000e+00> : vector<32x128xf32>
    %51 = tpu.matmul %49, %50, %cst_27 {dimension_numbers = #tpu.dot_dimension_numbers<[1], [0], [0], [1], [0, 0, 1, 1], [], []>} : vector<32x128xbf16>, vector<128x128xbf16>, vector<32x128xf32> -> vector<32x128xf32>
    %52 = arith.addf %48, %51 : vector<32x128xf32>
    %53 = vector.extract_strided_slice %35 {offsets = [128, 0], sizes = [32, 128], strides = [1, 1]} : vector<288x128xbf16> to vector<32x128xbf16>
    %c512 = arith.constant 512 : index
    %c0_28 = arith.constant 0 : index
    %54 = vector.load %arg7[%c512, %c0_28] : memref<1152x128xbf16, #tpu.memory_space<vmem>>, vector<128x128xbf16>
    %cst_29 = arith.constant dense<0.000000e+00> : vector<32x128xf32>
    %55 = tpu.matmul %53, %54, %cst_29 {dimension_numbers = #tpu.dot_dimension_numbers<[1], [0], [0], [1], [0, 0, 1, 1], [], []>} : vector<32x128xbf16>, vector<128x128xbf16>, vector<32x128xf32> -> vector<32x128xf32>
    %56 = arith.addf %52, %55 : vector<32x128xf32>
    %57 = vector.extract_strided_slice %35 {offsets = [160, 0], sizes = [32, 128], strides = [1, 1]} : vector<288x128xbf16> to vector<32x128xbf16>
    %c640 = arith.constant 640 : index
    %c0_30 = arith.constant 0 : index
    %58 = vector.load %arg7[%c640, %c0_30] : memref<1152x128xbf16, #tpu.memory_space<vmem>>, vector<128x128xbf16>
    %cst_31 = arith.constant dense<0.000000e+00> : vector<32x128xf32>
    %59 = tpu.matmul %57, %58, %cst_31 {dimension_numbers = #tpu.dot_dimension_numbers<[1], [0], [0], [1], [0, 0, 1, 1], [], []>} : vector<32x128xbf16>, vector<128x128xbf16>, vector<32x128xf32> -> vector<32x128xf32>
    %60 = arith.addf %56, %59 : vector<32x128xf32>
    %61 = vector.extract_strided_slice %35 {offsets = [192, 0], sizes = [32, 128], strides = [1, 1]} : vector<288x128xbf16> to vector<32x128xbf16>
    %c768 = arith.constant 768 : index
    %c0_32 = arith.constant 0 : index
    %62 = vector.load %arg7[%c768, %c0_32] : memref<1152x128xbf16, #tpu.memory_space<vmem>>, vector<128x128xbf16>
    %cst_33 = arith.constant dense<0.000000e+00> : vector<32x128xf32>
    %63 = tpu.matmul %61, %62, %cst_33 {dimension_numbers = #tpu.dot_dimension_numbers<[1], [0], [0], [1], [0, 0, 1, 1], [], []>} : vector<32x128xbf16>, vector<128x128xbf16>, vector<32x128xf32> -> vector<32x128xf32>
    %64 = arith.addf %60, %63 : vector<32x128xf32>
    %65 = vector.extract_strided_slice %35 {offsets = [224, 0], sizes = [32, 128], strides = [1, 1]} : vector<288x128xbf16> to vector<32x128xbf16>
    %c896 = arith.constant 896 : index
    %c0_34 = arith.constant 0 : index
    %66 = vector.load %arg7[%c896, %c0_34] : memref<1152x128xbf16, #tpu.memory_space<vmem>>, vector<128x128xbf16>
    %cst_35 = arith.constant dense<0.000000e+00> : vector<32x128xf32>
    %67 = tpu.matmul %65, %66, %cst_35 {dimension_numbers = #tpu.dot_dimension_numbers<[1], [0], [0], [1], [0, 0, 1, 1], [], []>} : vector<32x128xbf16>, vector<128x128xbf16>, vector<32x128xf32> -> vector<32x128xf32>
    %68 = arith.addf %64, %67 : vector<32x128xf32>
    %69 = vector.extract_strided_slice %35 {offsets = [256, 0], sizes = [32, 128], strides = [1, 1]} : vector<288x128xbf16> to vector<32x128xbf16>
    %c1024 = arith.constant 1024 : index
    %c0_36 = arith.constant 0 : index
    %70 = vector.load %arg7[%c1024, %c0_36] : memref<1152x128xbf16, #tpu.memory_space<vmem>>, vector<128x128xbf16>
    %cst_37 = arith.constant dense<0.000000e+00> : vector<32x128xf32>
    %71 = tpu.matmul %69, %70, %cst_37 {dimension_numbers = #tpu.dot_dimension_numbers<[1], [0], [0], [1], [0, 0, 1, 1], [], []>} : vector<32x128xbf16>, vector<128x128xbf16>, vector<32x128xf32> -> vector<32x128xf32>
    %72 = arith.addf %68, %71 : vector<32x128xf32>
    %c0_38 = arith.constant 0 : index
    %c0_39 = arith.constant 0 : index
    %73 = vector.load %arg8[%c0_38, %c0_39] : memref<1x128xf32, #tpu.memory_space<vmem>>, vector<1x128xf32>
    %c0_40 = arith.constant 0 : index
    %c0_41 = arith.constant 0 : index
    %74 = vector.load %arg9[%c0_40, %c0_41] : memref<1x128xf32, #tpu.memory_space<vmem>>, vector<1x128xf32>
    %c0_42 = arith.constant 0 : index
    %c0_43 = arith.constant 0 : index
    %75 = vector.load %arg10[%c0_42, %c0_43] : memref<1x128xf32, #tpu.memory_space<vmem>>, vector<1x128xf32>
    %76 = vector.broadcast %73 : vector<1x128xf32> to vector<32x128xf32>
    %77 = arith.addf %72, %76 : vector<32x128xf32>
    %cst_44 = arith.constant 0.000000e+00 : f32
    %78 = vector.broadcast %cst_44 : f32 to vector<32x128xf32>
    %79 = arith.maximumf %77, %78 : vector<32x128xf32>
    %cst_45 = arith.constant dense<0.000000e+00> : vector<128xf32>
    %80 = vector.multi_reduction <add>, %79, %cst_45 [0] : vector<32x128xf32> to vector<128xf32>
    %81 = vector.shape_cast %80 : vector<128xf32> to vector<1x128xf32>
    %cst_46 = arith.constant 3.200000e+01 : f32
    %82 = vector.broadcast %cst_46 : f32 to vector<1x128xf32>
    %83 = arith.divf %81, %82 : vector<1x128xf32>
    %84 = vector.broadcast %83 : vector<1x128xf32> to vector<32x128xf32>
    %85 = arith.subf %79, %84 : vector<32x128xf32>
    %86 = arith.mulf %85, %85 : vector<32x128xf32>
    %cst_47 = arith.constant dense<0.000000e+00> : vector<128xf32>
    %87 = vector.multi_reduction <add>, %86, %cst_47 [0] : vector<32x128xf32> to vector<128xf32>
    %88 = vector.shape_cast %87 : vector<128xf32> to vector<1x128xf32>
    %cst_48 = arith.constant 3.200000e+01 : f32
    %89 = vector.broadcast %cst_48 : f32 to vector<1x128xf32>
    %90 = arith.divf %88, %89 : vector<1x128xf32>
    %91 = vector.broadcast %83 : vector<1x128xf32> to vector<32x128xf32>
    %92 = arith.subf %79, %91 : vector<32x128xf32>
    %cst_49 = arith.constant 9.99999974E-6 : f32
    %93 = vector.broadcast %cst_49 : f32 to vector<1x128xf32>
    %94 = arith.addf %90, %93 : vector<1x128xf32>
    %95 = math.rsqrt %94 : vector<1x128xf32>
    %96 = vector.broadcast %95 : vector<1x128xf32> to vector<32x128xf32>
    %97 = arith.mulf %92, %96 : vector<32x128xf32>
    %98 = vector.broadcast %74 : vector<1x128xf32> to vector<32x128xf32>
    %99 = arith.mulf %97, %98 : vector<32x128xf32>
    %100 = vector.broadcast %75 : vector<1x128xf32> to vector<32x128xf32>
    %101 = arith.addf %99, %100 : vector<32x128xf32>
    %102 = arith.truncf %101 : vector<32x128xf32> to vector<32x128xbf16>
    %c0_50 = arith.constant 0 : index
    %c0_51 = arith.constant 0 : index
    %103 = vector.load %arg11[%c0_50, %c0_51] : memref<72x32xbf16, #tpu.memory_space<vmem>>, vector<72x32xbf16>
    %cst_52 = arith.constant dense<0.000000e+00> : vector<72x128xf32>
    %104 = tpu.matmul %103, %102, %cst_52 {dimension_numbers = #tpu.dot_dimension_numbers<[1], [0], [0], [1], [0, 0, 1, 1], [], []>} : vector<72x32xbf16>, vector<32x128xbf16>, vector<72x128xf32> -> vector<72x128xf32>
    %105 = arith.truncf %104 : vector<72x128xf32> to vector<72x128xbf16>
    %cst_53 = arith.constant 0.000000e+00 : f32
    %106 = vector.broadcast %cst_53 : f32 to vector<8x128xf32>
    %107 = vector.extract_strided_slice %105 {offsets = [0, 0], sizes = [8, 128], strides = [1, 1]} : vector<72x128xbf16> to vector<8x128xbf16>
    %c0_54 = arith.constant 0 : index
    %c0_55 = arith.constant 0 : index
    %108 = vector.load %arg12[%c0_54, %c0_55] : memref<1152x128xbf16, #tpu.memory_space<vmem>>, vector<128x128xbf16>
    %cst_56 = arith.constant dense<0.000000e+00> : vector<8x128xf32>
    %109 = tpu.matmul %107, %108, %cst_56 {dimension_numbers = #tpu.dot_dimension_numbers<[1], [0], [0], [1], [0, 0, 1, 1], [], []>} : vector<8x128xbf16>, vector<128x128xbf16>, vector<8x128xf32> -> vector<8x128xf32>
    %110 = arith.addf %106, %109 : vector<8x128xf32>
    %111 = vector.extract_strided_slice %105 {offsets = [8, 0], sizes = [8, 128], strides = [1, 1]} : vector<72x128xbf16> to vector<8x128xbf16>
    %c128_57 = arith.constant 128 : index
    %c0_58 = arith.constant 0 : index
    %112 = vector.load %arg12[%c128_57, %c0_58] : memref<1152x128xbf16, #tpu.memory_space<vmem>>, vector<128x128xbf16>
    %cst_59 = arith.constant dense<0.000000e+00> : vector<8x128xf32>
    %113 = tpu.matmul %111, %112, %cst_59 {dimension_numbers = #tpu.dot_dimension_numbers<[1], [0], [0], [1], [0, 0, 1, 1], [], []>} : vector<8x128xbf16>, vector<128x128xbf16>, vector<8x128xf32> -> vector<8x128xf32>
    %114 = arith.addf %110, %113 : vector<8x128xf32>
    %115 = vector.extract_strided_slice %105 {offsets = [16, 0], sizes = [8, 128], strides = [1, 1]} : vector<72x128xbf16> to vector<8x128xbf16>
    %c256_60 = arith.constant 256 : index
    %c0_61 = arith.constant 0 : index
    %116 = vector.load %arg12[%c256_60, %c0_61] : memref<1152x128xbf16, #tpu.memory_space<vmem>>, vector<128x128xbf16>
    %cst_62 = arith.constant dense<0.000000e+00> : vector<8x128xf32>
    %117 = tpu.matmul %115, %116, %cst_62 {dimension_numbers = #tpu.dot_dimension_numbers<[1], [0], [0], [1], [0, 0, 1, 1], [], []>} : vector<8x128xbf16>, vector<128x128xbf16>, vector<8x128xf32> -> vector<8x128xf32>
    %118 = arith.addf %114, %117 : vector<8x128xf32>
    %119 = vector.extract_strided_slice %105 {offsets = [24, 0], sizes = [8, 128], strides = [1, 1]} : vector<72x128xbf16> to vector<8x128xbf16>
    %c384_63 = arith.constant 384 : index
    %c0_64 = arith.constant 0 : index
    %120 = vector.load %arg12[%c384_63, %c0_64] : memref<1152x128xbf16, #tpu.memory_space<vmem>>, vector<128x128xbf16>
    %cst_65 = arith.constant dense<0.000000e+00> : vector<8x128xf32>
    %121 = tpu.matmul %119, %120, %cst_65 {dimension_numbers = #tpu.dot_dimension_numbers<[1], [0], [0], [1], [0, 0, 1, 1], [], []>} : vector<8x128xbf16>, vector<128x128xbf16>, vector<8x128xf32> -> vector<8x128xf32>
    %122 = arith.addf %118, %121 : vector<8x128xf32>
    %123 = vector.extract_strided_slice %105 {offsets = [32, 0], sizes = [8, 128], strides = [1, 1]} : vector<72x128xbf16> to vector<8x128xbf16>
    %c512_66 = arith.constant 512 : index
    %c0_67 = arith.constant 0 : index
    %124 = vector.load %arg12[%c512_66, %c0_67] : memref<1152x128xbf16, #tpu.memory_space<vmem>>, vector<128x128xbf16>
    %cst_68 = arith.constant dense<0.000000e+00> : vector<8x128xf32>
    %125 = tpu.matmul %123, %124, %cst_68 {dimension_numbers = #tpu.dot_dimension_numbers<[1], [0], [0], [1], [0, 0, 1, 1], [], []>} : vector<8x128xbf16>, vector<128x128xbf16>, vector<8x128xf32> -> vector<8x128xf32>
    %126 = arith.addf %122, %125 : vector<8x128xf32>
    %127 = vector.extract_strided_slice %105 {offsets = [40, 0], sizes = [8, 128], strides = [1, 1]} : vector<72x128xbf16> to vector<8x128xbf16>
    %c640_69 = arith.constant 640 : index
    %c0_70 = arith.constant 0 : index
    %128 = vector.load %arg12[%c640_69, %c0_70] : memref<1152x128xbf16, #tpu.memory_space<vmem>>, vector<128x128xbf16>
    %cst_71 = arith.constant dense<0.000000e+00> : vector<8x128xf32>
    %129 = tpu.matmul %127, %128, %cst_71 {dimension_numbers = #tpu.dot_dimension_numbers<[1], [0], [0], [1], [0, 0, 1, 1], [], []>} : vector<8x128xbf16>, vector<128x128xbf16>, vector<8x128xf32> -> vector<8x128xf32>
    %130 = arith.addf %126, %129 : vector<8x128xf32>
    %131 = vector.extract_strided_slice %105 {offsets = [48, 0], sizes = [8, 128], strides = [1, 1]} : vector<72x128xbf16> to vector<8x128xbf16>
    %c768_72 = arith.constant 768 : index
    %c0_73 = arith.constant 0 : index
    %132 = vector.load %arg12[%c768_72, %c0_73] : memref<1152x128xbf16, #tpu.memory_space<vmem>>, vector<128x128xbf16>
    %cst_74 = arith.constant dense<0.000000e+00> : vector<8x128xf32>
    %133 = tpu.matmul %131, %132, %cst_74 {dimension_numbers = #tpu.dot_dimension_numbers<[1], [0], [0], [1], [0, 0, 1, 1], [], []>} : vector<8x128xbf16>, vector<128x128xbf16>, vector<8x128xf32> -> vector<8x128xf32>
    %134 = arith.addf %130, %133 : vector<8x128xf32>
    %135 = vector.extract_strided_slice %105 {offsets = [56, 0], sizes = [8, 128], strides = [1, 1]} : vector<72x128xbf16> to vector<8x128xbf16>
    %c896_75 = arith.constant 896 : index
    %c0_76 = arith.constant 0 : index
    %136 = vector.load %arg12[%c896_75, %c0_76] : memref<1152x128xbf16, #tpu.memory_space<vmem>>, vector<128x128xbf16>
    %cst_77 = arith.constant dense<0.000000e+00> : vector<8x128xf32>
    %137 = tpu.matmul %135, %136, %cst_77 {dimension_numbers = #tpu.dot_dimension_numbers<[1], [0], [0], [1], [0, 0, 1, 1], [], []>} : vector<8x128xbf16>, vector<128x128xbf16>, vector<8x128xf32> -> vector<8x128xf32>
    %138 = arith.addf %134, %137 : vector<8x128xf32>
    %139 = vector.extract_strided_slice %105 {offsets = [64, 0], sizes = [8, 128], strides = [1, 1]} : vector<72x128xbf16> to vector<8x128xbf16>
    %c1024_78 = arith.constant 1024 : index
    %c0_79 = arith.constant 0 : index
    %140 = vector.load %arg12[%c1024_78, %c0_79] : memref<1152x128xbf16, #tpu.memory_space<vmem>>, vector<128x128xbf16>
    %cst_80 = arith.constant dense<0.000000e+00> : vector<8x128xf32>
    %141 = tpu.matmul %139, %140, %cst_80 {dimension_numbers = #tpu.dot_dimension_numbers<[1], [0], [0], [1], [0, 0, 1, 1], [], []>} : vector<8x128xbf16>, vector<128x128xbf16>, vector<8x128xf32> -> vector<8x128xf32>
    %142 = arith.addf %138, %141 : vector<8x128xf32>
    %c0_81 = arith.constant 0 : index
    %c0_82 = arith.constant 0 : index
    %143 = vector.load %arg13[%c0_81, %c0_82] : memref<1x128xf32, #tpu.memory_space<vmem>>, vector<1x128xf32>
    %c0_83 = arith.constant 0 : index
    %c0_84 = arith.constant 0 : index
    %144 = vector.load %arg14[%c0_83, %c0_84] : memref<1x128xf32, #tpu.memory_space<vmem>>, vector<1x128xf32>
    %c0_85 = arith.constant 0 : index
    %c0_86 = arith.constant 0 : index
    %145 = vector.load %arg15[%c0_85, %c0_86] : memref<1x128xf32, #tpu.memory_space<vmem>>, vector<1x128xf32>
    %146 = vector.broadcast %143 : vector<1x128xf32> to vector<8x128xf32>
    %147 = arith.addf %142, %146 : vector<8x128xf32>
    %cst_87 = arith.constant 0.000000e+00 : f32
    %148 = vector.broadcast %cst_87 : f32 to vector<8x128xf32>
    %149 = arith.maximumf %147, %148 : vector<8x128xf32>
    %cst_88 = arith.constant dense<0.000000e+00> : vector<128xf32>
    %150 = vector.multi_reduction <add>, %149, %cst_88 [0] : vector<8x128xf32> to vector<128xf32>
    %151 = vector.shape_cast %150 : vector<128xf32> to vector<1x128xf32>
    %cst_89 = arith.constant 8.000000e+00 : f32
    %152 = vector.broadcast %cst_89 : f32 to vector<1x128xf32>
    %153 = arith.divf %151, %152 : vector<1x128xf32>
    %154 = vector.broadcast %153 : vector<1x128xf32> to vector<8x128xf32>
    %155 = arith.subf %149, %154 : vector<8x128xf32>
    %156 = arith.mulf %155, %155 : vector<8x128xf32>
    %cst_90 = arith.constant dense<0.000000e+00> : vector<128xf32>
    %157 = vector.multi_reduction <add>, %156, %cst_90 [0] : vector<8x128xf32> to vector<128xf32>
    %158 = vector.shape_cast %157 : vector<128xf32> to vector<1x128xf32>
    %cst_91 = arith.constant 8.000000e+00 : f32
    %159 = vector.broadcast %cst_91 : f32 to vector<1x128xf32>
    %160 = arith.divf %158, %159 : vector<1x128xf32>
    %161 = vector.broadcast %153 : vector<1x128xf32> to vector<8x128xf32>
    %162 = arith.subf %149, %161 : vector<8x128xf32>
    %cst_92 = arith.constant 9.99999974E-6 : f32
    %163 = vector.broadcast %cst_92 : f32 to vector<1x128xf32>
    %164 = arith.addf %160, %163 : vector<1x128xf32>
    %165 = math.rsqrt %164 : vector<1x128xf32>
    %166 = vector.broadcast %165 : vector<1x128xf32> to vector<8x128xf32>
    %167 = arith.mulf %162, %166 : vector<8x128xf32>
    %168 = vector.broadcast %144 : vector<1x128xf32> to vector<8x128xf32>
    %169 = arith.mulf %167, %168 : vector<8x128xf32>
    %170 = vector.broadcast %145 : vector<1x128xf32> to vector<8x128xf32>
    %171 = arith.addf %169, %170 : vector<8x128xf32>
    %172 = arith.truncf %171 : vector<8x128xf32> to vector<8x128xbf16>
    %c0_93 = arith.constant 0 : index
    %c0_94 = arith.constant 0 : index
    %173 = vector.load %arg16[%c0_93, %c0_94] : memref<72x8xbf16, #tpu.memory_space<vmem>>, vector<72x8xbf16>
    %cst_95 = arith.constant dense<0.000000e+00> : vector<72x128xf32>
    %174 = tpu.matmul %173, %172, %cst_95 {dimension_numbers = #tpu.dot_dimension_numbers<[1], [0], [0], [1], [0, 0, 1, 1], [], []>} : vector<72x8xbf16>, vector<8x128xbf16>, vector<72x128xf32> -> vector<72x128xf32>
    %175 = arith.truncf %174 : vector<72x128xf32> to vector<72x128xbf16>
    %cst_96 = arith.constant 0.000000e+00 : f32
    %176 = vector.broadcast %cst_96 : f32 to vector<8x128xf32>
    %177 = vector.extract_strided_slice %175 {offsets = [0, 0], sizes = [8, 128], strides = [1, 1]} : vector<72x128xbf16> to vector<8x128xbf16>
    %c0_97 = arith.constant 0 : index
    %c0_98 = arith.constant 0 : index
    %178 = vector.load %arg17[%c0_97, %c0_98] : memref<1152x128xbf16, #tpu.memory_space<vmem>>, vector<128x128xbf16>
    %cst_99 = arith.constant dense<0.000000e+00> : vector<8x128xf32>
    %179 = tpu.matmul %177, %178, %cst_99 {dimension_numbers = #tpu.dot_dimension_numbers<[1], [0], [0], [1], [0, 0, 1, 1], [], []>} : vector<8x128xbf16>, vector<128x128xbf16>, vector<8x128xf32> -> vector<8x128xf32>
    %180 = arith.addf %176, %179 : vector<8x128xf32>
    %181 = vector.extract_strided_slice %175 {offsets = [8, 0], sizes = [8, 128], strides = [1, 1]} : vector<72x128xbf16> to vector<8x128xbf16>
    %c128_100 = arith.constant 128 : index
    %c0_101 = arith.constant 0 : index
    %182 = vector.load %arg17[%c128_100, %c0_101] : memref<1152x128xbf16, #tpu.memory_space<vmem>>, vector<128x128xbf16>
    %cst_102 = arith.constant dense<0.000000e+00> : vector<8x128xf32>
    %183 = tpu.matmul %181, %182, %cst_102 {dimension_numbers = #tpu.dot_dimension_numbers<[1], [0], [0], [1], [0, 0, 1, 1], [], []>} : vector<8x128xbf16>, vector<128x128xbf16>, vector<8x128xf32> -> vector<8x128xf32>
    %184 = arith.addf %180, %183 : vector<8x128xf32>
    %185 = vector.extract_strided_slice %175 {offsets = [16, 0], sizes = [8, 128], strides = [1, 1]} : vector<72x128xbf16> to vector<8x128xbf16>
    %c256_103 = arith.constant 256 : index
    %c0_104 = arith.constant 0 : index
    %186 = vector.load %arg17[%c256_103, %c0_104] : memref<1152x128xbf16, #tpu.memory_space<vmem>>, vector<128x128xbf16>
    %cst_105 = arith.constant dense<0.000000e+00> : vector<8x128xf32>
    %187 = tpu.matmul %185, %186, %cst_105 {dimension_numbers = #tpu.dot_dimension_numbers<[1], [0], [0], [1], [0, 0, 1, 1], [], []>} : vector<8x128xbf16>, vector<128x128xbf16>, vector<8x128xf32> -> vector<8x128xf32>
    %188 = arith.addf %184, %187 : vector<8x128xf32>
    %189 = vector.extract_strided_slice %175 {offsets = [24, 0], sizes = [8, 128], strides = [1, 1]} : vector<72x128xbf16> to vector<8x128xbf16>
    %c384_106 = arith.constant 384 : index
    %c0_107 = arith.constant 0 : index
    %190 = vector.load %arg17[%c384_106, %c0_107] : memref<1152x128xbf16, #tpu.memory_space<vmem>>, vector<128x128xbf16>
    %cst_108 = arith.constant dense<0.000000e+00> : vector<8x128xf32>
    %191 = tpu.matmul %189, %190, %cst_108 {dimension_numbers = #tpu.dot_dimension_numbers<[1], [0], [0], [1], [0, 0, 1, 1], [], []>} : vector<8x128xbf16>, vector<128x128xbf16>, vector<8x128xf32> -> vector<8x128xf32>
    %192 = arith.addf %188, %191 : vector<8x128xf32>
    %193 = vector.extract_strided_slice %175 {offsets = [32, 0], sizes = [8, 128], strides = [1, 1]} : vector<72x128xbf16> to vector<8x128xbf16>
    %c512_109 = arith.constant 512 : index
    %c0_110 = arith.constant 0 : index
    %194 = vector.load %arg17[%c512_109, %c0_110] : memref<1152x128xbf16, #tpu.memory_space<vmem>>, vector<128x128xbf16>
    %cst_111 = arith.constant dense<0.000000e+00> : vector<8x128xf32>
    %195 = tpu.matmul %193, %194, %cst_111 {dimension_numbers = #tpu.dot_dimension_numbers<[1], [0], [0], [1], [0, 0, 1, 1], [], []>} : vector<8x128xbf16>, vector<128x128xbf16>, vector<8x128xf32> -> vector<8x128xf32>
    %196 = arith.addf %192, %195 : vector<8x128xf32>
    %197 = vector.extract_strided_slice %175 {offsets = [40, 0], sizes = [8, 128], strides = [1, 1]} : vector<72x128xbf16> to vector<8x128xbf16>
    %c640_112 = arith.constant 640 : index
    %c0_113 = arith.constant 0 : index
    %198 = vector.load %arg17[%c640_112, %c0_113] : memref<1152x128xbf16, #tpu.memory_space<vmem>>, vector<128x128xbf16>
    %cst_114 = arith.constant dense<0.000000e+00> : vector<8x128xf32>
    %199 = tpu.matmul %197, %198, %cst_114 {dimension_numbers = #tpu.dot_dimension_numbers<[1], [0], [0], [1], [0, 0, 1, 1], [], []>} : vector<8x128xbf16>, vector<128x128xbf16>, vector<8x128xf32> -> vector<8x128xf32>
    %200 = arith.addf %196, %199 : vector<8x128xf32>
    %201 = vector.extract_strided_slice %175 {offsets = [48, 0], sizes = [8, 128], strides = [1, 1]} : vector<72x128xbf16> to vector<8x128xbf16>
    %c768_115 = arith.constant 768 : index
    %c0_116 = arith.constant 0 : index
    %202 = vector.load %arg17[%c768_115, %c0_116] : memref<1152x128xbf16, #tpu.memory_space<vmem>>, vector<128x128xbf16>
    %cst_117 = arith.constant dense<0.000000e+00> : vector<8x128xf32>
    %203 = tpu.matmul %201, %202, %cst_117 {dimension_numbers = #tpu.dot_dimension_numbers<[1], [0], [0], [1], [0, 0, 1, 1], [], []>} : vector<8x128xbf16>, vector<128x128xbf16>, vector<8x128xf32> -> vector<8x128xf32>
    %204 = arith.addf %200, %203 : vector<8x128xf32>
    %205 = vector.extract_strided_slice %175 {offsets = [56, 0], sizes = [8, 128], strides = [1, 1]} : vector<72x128xbf16> to vector<8x128xbf16>
    %c896_118 = arith.constant 896 : index
    %c0_119 = arith.constant 0 : index
    %206 = vector.load %arg17[%c896_118, %c0_119] : memref<1152x128xbf16, #tpu.memory_space<vmem>>, vector<128x128xbf16>
    %cst_120 = arith.constant dense<0.000000e+00> : vector<8x128xf32>
    %207 = tpu.matmul %205, %206, %cst_120 {dimension_numbers = #tpu.dot_dimension_numbers<[1], [0], [0], [1], [0, 0, 1, 1], [], []>} : vector<8x128xbf16>, vector<128x128xbf16>, vector<8x128xf32> -> vector<8x128xf32>
    %208 = arith.addf %204, %207 : vector<8x128xf32>
    %209 = vector.extract_strided_slice %175 {offsets = [64, 0], sizes = [8, 128], strides = [1, 1]} : vector<72x128xbf16> to vector<8x128xbf16>
    %c1024_121 = arith.constant 1024 : index
    %c0_122 = arith.constant 0 : index
    %210 = vector.load %arg17[%c1024_121, %c0_122] : memref<1152x128xbf16, #tpu.memory_space<vmem>>, vector<128x128xbf16>
    %cst_123 = arith.constant dense<0.000000e+00> : vector<8x128xf32>
    %211 = tpu.matmul %209, %210, %cst_123 {dimension_numbers = #tpu.dot_dimension_numbers<[1], [0], [0], [1], [0, 0, 1, 1], [], []>} : vector<8x128xbf16>, vector<128x128xbf16>, vector<8x128xf32> -> vector<8x128xf32>
    %212 = arith.addf %208, %211 : vector<8x128xf32>
    %213 = vector.extract_strided_slice %212 {offsets = [0, 0], sizes = [2, 128], strides = [1, 1]} : vector<8x128xf32> to vector<2x128xf32>
    %c0_124 = arith.constant 0 : index
    %c0_125 = arith.constant 0 : index
    %214 = vector.load %arg18[%c0_124, %c0_125] : memref<1x128xf32, #tpu.memory_space<vmem>>, vector<1x128xf32>
    %c0_126 = arith.constant 0 : index
    %c0_127 = arith.constant 0 : index
    %215 = vector.load %arg19[%c0_126, %c0_127] : memref<1x128xf32, #tpu.memory_space<vmem>>, vector<1x128xf32>
    %c0_128 = arith.constant 0 : index
    %c0_129 = arith.constant 0 : index
    %216 = vector.load %arg20[%c0_128, %c0_129] : memref<1x128xf32, #tpu.memory_space<vmem>>, vector<1x128xf32>
    %217 = vector.broadcast %214 : vector<1x128xf32> to vector<2x128xf32>
    %218 = arith.addf %213, %217 : vector<2x128xf32>
    %cst_130 = arith.constant 0.000000e+00 : f32
    %219 = vector.broadcast %cst_130 : f32 to vector<2x128xf32>
    %220 = arith.maximumf %218, %219 : vector<2x128xf32>
    %cst_131 = arith.constant dense<0.000000e+00> : vector<128xf32>
    %221 = vector.multi_reduction <add>, %220, %cst_131 [0] : vector<2x128xf32> to vector<128xf32>
    %222 = vector.shape_cast %221 : vector<128xf32> to vector<1x128xf32>
    %cst_132 = arith.constant 2.000000e+00 : f32
    %223 = vector.broadcast %cst_132 : f32 to vector<1x128xf32>
    %224 = arith.divf %222, %223 : vector<1x128xf32>
    %225 = vector.broadcast %224 : vector<1x128xf32> to vector<2x128xf32>
    %226 = arith.subf %220, %225 : vector<2x128xf32>
    %227 = arith.mulf %226, %226 : vector<2x128xf32>
    %cst_133 = arith.constant dense<0.000000e+00> : vector<128xf32>
    %228 = vector.multi_reduction <add>, %227, %cst_133 [0] : vector<2x128xf32> to vector<128xf32>
    %229 = vector.shape_cast %228 : vector<128xf32> to vector<1x128xf32>
    %cst_134 = arith.constant 2.000000e+00 : f32
    %230 = vector.broadcast %cst_134 : f32 to vector<1x128xf32>
    %231 = arith.divf %229, %230 : vector<1x128xf32>
    %232 = vector.broadcast %224 : vector<1x128xf32> to vector<2x128xf32>
    %233 = arith.subf %220, %232 : vector<2x128xf32>
    %cst_135 = arith.constant 9.99999974E-6 : f32
    %234 = vector.broadcast %cst_135 : f32 to vector<1x128xf32>
    %235 = arith.addf %231, %234 : vector<1x128xf32>
    %236 = math.rsqrt %235 : vector<1x128xf32>
    %237 = vector.broadcast %236 : vector<1x128xf32> to vector<2x128xf32>
    %238 = arith.mulf %233, %237 : vector<2x128xf32>
    %239 = vector.broadcast %215 : vector<1x128xf32> to vector<2x128xf32>
    %240 = arith.mulf %238, %239 : vector<2x128xf32>
    %241 = vector.broadcast %216 : vector<1x128xf32> to vector<2x128xf32>
    %242 = arith.addf %240, %241 : vector<2x128xf32>
    %243 = arith.truncf %242 : vector<2x128xf32> to vector<2x128xbf16>
    %c0_136 = arith.constant 0 : index
    %c0_137 = arith.constant 0 : index
    %244 = vector.load %arg21[%c0_136, %c0_137] : memref<72x2xbf16, #tpu.memory_space<vmem>>, vector<72x2xbf16>
    %cst_138 = arith.constant dense<0.000000e+00> : vector<72x128xf32>
    %245 = tpu.matmul %244, %243, %cst_138 {dimension_numbers = #tpu.dot_dimension_numbers<[1], [0], [0], [1], [0, 0, 1, 1], [], []>} : vector<72x2xbf16>, vector<2x128xbf16>, vector<72x128xf32> -> vector<72x128xf32>
    %246 = arith.truncf %245 : vector<72x128xf32> to vector<72x128xbf16>
    %cst_139 = arith.constant 0.000000e+00 : f32
    %247 = vector.broadcast %cst_139 : f32 to vector<8x128xf32>
    %248 = vector.extract_strided_slice %246 {offsets = [0, 0], sizes = [8, 128], strides = [1, 1]} : vector<72x128xbf16> to vector<8x128xbf16>
    %c0_140 = arith.constant 0 : index
    %c0_141 = arith.constant 0 : index
    %249 = vector.load %arg22[%c0_140, %c0_141] : memref<1152x128xbf16, #tpu.memory_space<vmem>>, vector<128x128xbf16>
    %cst_142 = arith.constant dense<0.000000e+00> : vector<8x128xf32>
    %250 = tpu.matmul %248, %249, %cst_142 {dimension_numbers = #tpu.dot_dimension_numbers<[1], [0], [0], [1], [0, 0, 1, 1], [], []>} : vector<8x128xbf16>, vector<128x128xbf16>, vector<8x128xf32> -> vector<8x128xf32>
    %251 = arith.addf %247, %250 : vector<8x128xf32>
    %252 = vector.extract_strided_slice %246 {offsets = [8, 0], sizes = [8, 128], strides = [1, 1]} : vector<72x128xbf16> to vector<8x128xbf16>
    %c128_143 = arith.constant 128 : index
    %c0_144 = arith.constant 0 : index
    %253 = vector.load %arg22[%c128_143, %c0_144] : memref<1152x128xbf16, #tpu.memory_space<vmem>>, vector<128x128xbf16>
    %cst_145 = arith.constant dense<0.000000e+00> : vector<8x128xf32>
    %254 = tpu.matmul %252, %253, %cst_145 {dimension_numbers = #tpu.dot_dimension_numbers<[1], [0], [0], [1], [0, 0, 1, 1], [], []>} : vector<8x128xbf16>, vector<128x128xbf16>, vector<8x128xf32> -> vector<8x128xf32>
    %255 = arith.addf %251, %254 : vector<8x128xf32>
    %256 = vector.extract_strided_slice %246 {offsets = [16, 0], sizes = [8, 128], strides = [1, 1]} : vector<72x128xbf16> to vector<8x128xbf16>
    %c256_146 = arith.constant 256 : index
    %c0_147 = arith.constant 0 : index
    %257 = vector.load %arg22[%c256_146, %c0_147] : memref<1152x128xbf16, #tpu.memory_space<vmem>>, vector<128x128xbf16>
    %cst_148 = arith.constant dense<0.000000e+00> : vector<8x128xf32>
    %258 = tpu.matmul %256, %257, %cst_148 {dimension_numbers = #tpu.dot_dimension_numbers<[1], [0], [0], [1], [0, 0, 1, 1], [], []>} : vector<8x128xbf16>, vector<128x128xbf16>, vector<8x128xf32> -> vector<8x128xf32>
    %259 = arith.addf %255, %258 : vector<8x128xf32>
    %260 = vector.extract_strided_slice %246 {offsets = [24, 0], sizes = [8, 128], strides = [1, 1]} : vector<72x128xbf16> to vector<8x128xbf16>
    %c384_149 = arith.constant 384 : index
    %c0_150 = arith.constant 0 : index
    %261 = vector.load %arg22[%c384_149, %c0_150] : memref<1152x128xbf16, #tpu.memory_space<vmem>>, vector<128x128xbf16>
    %cst_151 = arith.constant dense<0.000000e+00> : vector<8x128xf32>
    %262 = tpu.matmul %260, %261, %cst_151 {dimension_numbers = #tpu.dot_dimension_numbers<[1], [0], [0], [1], [0, 0, 1, 1], [], []>} : vector<8x128xbf16>, vector<128x128xbf16>, vector<8x128xf32> -> vector<8x128xf32>
    %263 = arith.addf %259, %262 : vector<8x128xf32>
    %264 = vector.extract_strided_slice %246 {offsets = [32, 0], sizes = [8, 128], strides = [1, 1]} : vector<72x128xbf16> to vector<8x128xbf16>
    %c512_152 = arith.constant 512 : index
    %c0_153 = arith.constant 0 : index
    %265 = vector.load %arg22[%c512_152, %c0_153] : memref<1152x128xbf16, #tpu.memory_space<vmem>>, vector<128x128xbf16>
    %cst_154 = arith.constant dense<0.000000e+00> : vector<8x128xf32>
    %266 = tpu.matmul %264, %265, %cst_154 {dimension_numbers = #tpu.dot_dimension_numbers<[1], [0], [0], [1], [0, 0, 1, 1], [], []>} : vector<8x128xbf16>, vector<128x128xbf16>, vector<8x128xf32> -> vector<8x128xf32>
    %267 = arith.addf %263, %266 : vector<8x128xf32>
    %268 = vector.extract_strided_slice %246 {offsets = [40, 0], sizes = [8, 128], strides = [1, 1]} : vector<72x128xbf16> to vector<8x128xbf16>
    %c640_155 = arith.constant 640 : index
    %c0_156 = arith.constant 0 : index
    %269 = vector.load %arg22[%c640_155, %c0_156] : memref<1152x128xbf16, #tpu.memory_space<vmem>>, vector<128x128xbf16>
    %cst_157 = arith.constant dense<0.000000e+00> : vector<8x128xf32>
    %270 = tpu.matmul %268, %269, %cst_157 {dimension_numbers = #tpu.dot_dimension_numbers<[1], [0], [0], [1], [0, 0, 1, 1], [], []>} : vector<8x128xbf16>, vector<128x128xbf16>, vector<8x128xf32> -> vector<8x128xf32>
    %271 = arith.addf %267, %270 : vector<8x128xf32>
    %272 = vector.extract_strided_slice %246 {offsets = [48, 0], sizes = [8, 128], strides = [1, 1]} : vector<72x128xbf16> to vector<8x128xbf16>
    %c768_158 = arith.constant 768 : index
    %c0_159 = arith.constant 0 : index
    %273 = vector.load %arg22[%c768_158, %c0_159] : memref<1152x128xbf16, #tpu.memory_space<vmem>>, vector<128x128xbf16>
    %cst_160 = arith.constant dense<0.000000e+00> : vector<8x128xf32>
    %274 = tpu.matmul %272, %273, %cst_160 {dimension_numbers = #tpu.dot_dimension_numbers<[1], [0], [0], [1], [0, 0, 1, 1], [], []>} : vector<8x128xbf16>, vector<128x128xbf16>, vector<8x128xf32> -> vector<8x128xf32>
    %275 = arith.addf %271, %274 : vector<8x128xf32>
    %276 = vector.extract_strided_slice %246 {offsets = [56, 0], sizes = [8, 128], strides = [1, 1]} : vector<72x128xbf16> to vector<8x128xbf16>
    %c896_161 = arith.constant 896 : index
    %c0_162 = arith.constant 0 : index
    %277 = vector.load %arg22[%c896_161, %c0_162] : memref<1152x128xbf16, #tpu.memory_space<vmem>>, vector<128x128xbf16>
    %cst_163 = arith.constant dense<0.000000e+00> : vector<8x128xf32>
    %278 = tpu.matmul %276, %277, %cst_163 {dimension_numbers = #tpu.dot_dimension_numbers<[1], [0], [0], [1], [0, 0, 1, 1], [], []>} : vector<8x128xbf16>, vector<128x128xbf16>, vector<8x128xf32> -> vector<8x128xf32>
    %279 = arith.addf %275, %278 : vector<8x128xf32>
    %280 = vector.extract_strided_slice %246 {offsets = [64, 0], sizes = [8, 128], strides = [1, 1]} : vector<72x128xbf16> to vector<8x128xbf16>
    %c1024_164 = arith.constant 1024 : index
    %c0_165 = arith.constant 0 : index
    %281 = vector.load %arg22[%c1024_164, %c0_165] : memref<1152x128xbf16, #tpu.memory_space<vmem>>, vector<128x128xbf16>
    %cst_166 = arith.constant dense<0.000000e+00> : vector<8x128xf32>
    %282 = tpu.matmul %280, %281, %cst_166 {dimension_numbers = #tpu.dot_dimension_numbers<[1], [0], [0], [1], [0, 0, 1, 1], [], []>} : vector<8x128xbf16>, vector<128x128xbf16>, vector<8x128xf32> -> vector<8x128xf32>
    %283 = arith.addf %279, %282 : vector<8x128xf32>
    %284 = vector.extract_strided_slice %283 {offsets = [0, 0], sizes = [2, 128], strides = [1, 1]} : vector<8x128xf32> to vector<2x128xf32>
    %c0_167 = arith.constant 0 : index
    %c0_168 = arith.constant 0 : index
    %285 = vector.load %arg23[%c0_167, %c0_168] : memref<1x128xf32, #tpu.memory_space<vmem>>, vector<1x128xf32>
    %c0_169 = arith.constant 0 : index
    %c0_170 = arith.constant 0 : index
    %286 = vector.load %arg24[%c0_169, %c0_170] : memref<1x128xf32, #tpu.memory_space<vmem>>, vector<1x128xf32>
    %c0_171 = arith.constant 0 : index
    %c0_172 = arith.constant 0 : index
    %287 = vector.load %arg25[%c0_171, %c0_172] : memref<1x128xf32, #tpu.memory_space<vmem>>, vector<1x128xf32>
    %288 = vector.broadcast %285 : vector<1x128xf32> to vector<2x128xf32>
    %289 = arith.addf %284, %288 : vector<2x128xf32>
    %cst_173 = arith.constant 0.000000e+00 : f32
    %290 = vector.broadcast %cst_173 : f32 to vector<2x128xf32>
    %291 = arith.maximumf %289, %290 : vector<2x128xf32>
    %cst_174 = arith.constant dense<0.000000e+00> : vector<128xf32>
    %292 = vector.multi_reduction <add>, %291, %cst_174 [0] : vector<2x128xf32> to vector<128xf32>
    %293 = vector.shape_cast %292 : vector<128xf32> to vector<1x128xf32>
    %cst_175 = arith.constant 2.000000e+00 : f32
    %294 = vector.broadcast %cst_175 : f32 to vector<1x128xf32>
    %295 = arith.divf %293, %294 : vector<1x128xf32>
    %296 = vector.broadcast %295 : vector<1x128xf32> to vector<2x128xf32>
    %297 = arith.subf %291, %296 : vector<2x128xf32>
    %298 = arith.mulf %297, %297 : vector<2x128xf32>
    %cst_176 = arith.constant dense<0.000000e+00> : vector<128xf32>
    %299 = vector.multi_reduction <add>, %298, %cst_176 [0] : vector<2x128xf32> to vector<128xf32>
    %300 = vector.shape_cast %299 : vector<128xf32> to vector<1x128xf32>
    %cst_177 = arith.constant 2.000000e+00 : f32
    %301 = vector.broadcast %cst_177 : f32 to vector<1x128xf32>
    %302 = arith.divf %300, %301 : vector<1x128xf32>
    %303 = vector.broadcast %295 : vector<1x128xf32> to vector<2x128xf32>
    %304 = arith.subf %291, %303 : vector<2x128xf32>
    %cst_178 = arith.constant 9.99999974E-6 : f32
    %305 = vector.broadcast %cst_178 : f32 to vector<1x128xf32>
    %306 = arith.addf %302, %305 : vector<1x128xf32>
    %307 = math.rsqrt %306 : vector<1x128xf32>
    %308 = vector.broadcast %307 : vector<1x128xf32> to vector<2x128xf32>
    %309 = arith.mulf %304, %308 : vector<2x128xf32>
    %310 = vector.broadcast %286 : vector<1x128xf32> to vector<2x128xf32>
    %311 = arith.mulf %309, %310 : vector<2x128xf32>
    %312 = vector.broadcast %287 : vector<1x128xf32> to vector<2x128xf32>
    %313 = arith.addf %311, %312 : vector<2x128xf32>
    %c0_179 = arith.constant 0 : index
    %c0_180 = arith.constant 0 : index
    %314 = vector.load %arg26[%c0_179, %c0_180] : memref<2x128xf32, #tpu.memory_space<vmem>>, vector<2x128xf32>
    tpu.vector_store %arg26[%c0_179, %c0_180], %313 {strides = array<i32>} : memref<2x128xf32, #tpu.memory_space<vmem>>, vector<2x128xf32>,
    return
  }
  func.func @transform_0(%arg0: i32) -> (i32, i32) {
    %c0_i32 = arith.constant 0 : i32
    %c0_i32_0 = arith.constant 0 : i32
    %c0_i32_1 = arith.constant 0 : i32
    return %c0_i32, %c0_i32_0 : i32, i32
  }
  func.func @transform_1(%arg0: i32) -> (i32, i32) {
    %c0_i32 = arith.constant 0 : i32
    %c0_i32_0 = arith.constant 0 : i32
    %c0_i32_1 = arith.constant 0 : i32
    return %c0_i32, %c0_i32_0 : i32, i32
  }
  func.func @transform_2(%arg0: i32) -> (i32, i32) {
    %c0_i32 = arith.constant 0 : i32
    %c0_i32_0 = arith.constant 0 : i32
    %c0_i32_1 = arith.constant 0 : i32
    return %c0_i32, %c0_i32_0 : i32, i32
  }
  func.func @transform_3(%arg0: i32) -> (i32, i32) {
    %c0_i32 = arith.constant 0 : i32
    %c0_i32_0 = arith.constant 0 : i32
    %c0_i32_1 = arith.constant 0 : i32
    return %c0_i32, %c0_i32_0 : i32, i32
  }
  func.func @transform_4(%arg0: i32) -> (i32, i32) {
    %c0_i32 = arith.constant 0 : i32
    %c0_i32_0 = arith.constant 0 : i32
    %c0_i32_1 = arith.constant 0 : i32
    return %c0_i32, %c0_i32_0 : i32, i32
  }
  func.func @transform_5(%arg0: i32) -> (i32, i32) {
    %c0_i32 = arith.constant 0 : i32
    %c0_i32_0 = arith.constant 0 : i32
    %c0_i32_1 = arith.constant 0 : i32
    return %c0_i32, %c0_i32_0 : i32, i32
  }
  func.func @transform_6(%arg0: i32) -> (i32, i32) {
    %c0_i32 = arith.constant 0 : i32
    %c0_i32_0 = arith.constant 0 : i32
    %c0_i32_1 = arith.constant 0 : i32
    return %c0_i32, %c0_i32_0 : i32, i32
  }
  func.func @transform_7(%arg0: i32) -> (i32, i32) {
    %c0_i32 = arith.constant 0 : i32
    %c0_i32_0 = arith.constant 0 : i32
    %c0_i32_1 = arith.constant 0 : i32
    return %c0_i32, %c0_i32_0 : i32, i32
  }
  func.func @transform_8(%arg0: i32) -> (i32, i32) {
    %c0_i32 = arith.constant 0 : i32
    %c0_i32_0 = arith.constant 0 : i32
    %c0_i32_1 = arith.constant 0 : i32
    return %c0_i32, %c0_i32_0 : i32, i32
  }
  func.func @transform_9(%arg0: i32) -> (i32, i32) {
    %c0_i32 = arith.constant 0 : i32
    %c0_i32_0 = arith.constant 0 : i32
    %c0_i32_1 = arith.constant 0 : i32
    return %c0_i32, %c0_i32_0 : i32, i32
  }
  func.func @transform_10(%arg0: i32) -> (i32, i32) {
    %c0_i32 = arith.constant 0 : i32
    %c0_i32_0 = arith.constant 0 : i32
    %c0_i32_1 = arith.constant 0 : i32
    return %c0_i32, %c0_i32_0 : i32, i32
  }
  func.func @transform_11(%arg0: i32) -> (i32, i32) {
    %c0_i32 = arith.constant 0 : i32
    %c0_i32_0 = arith.constant 0 : i32
    %c0_i32_1 = arith.constant 0 : i32
    return %c0_i32, %c0_i32_0 : i32, i32
  }
  func.func @transform_12(%arg0: i32) -> (i32, i32) {
    %c0_i32 = arith.constant 0 : i32
    %c0_i32_0 = arith.constant 0 : i32
    %c0_i32_1 = arith.constant 0 : i32
    return %c0_i32, %c0_i32_0 : i32, i32
  }
  func.func @transform_13(%arg0: i32) -> (i32, i32) {
    %c0_i32 = arith.constant 0 : i32
    %c0_i32_0 = arith.constant 0 : i32
    %c0_i32_1 = arith.constant 0 : i32
    return %c0_i32, %c0_i32_0 : i32, i32
  }
  func.func @transform_14(%arg0: i32) -> (i32, i32) {
    %c0_i32 = arith.constant 0 : i32
    %c0_i32_0 = arith.constant 0 : i32
    %c0_i32_1 = arith.constant 0 : i32
    return %c0_i32, %c0_i32_0 : i32, i32
  }
  func.func @transform_15(%arg0: i32) -> (i32, i32) {
    %c0_i32 = arith.constant 0 : i32
    %c0_i32_0 = arith.constant 0 : i32
    %c0_i32_1 = arith.constant 0 : i32
    return %c0_i32, %c0_i32_0 : i32, i32
  }
  func.func @transform_16(%arg0: i32) -> (i32, i32) {
    %c0_i32 = arith.constant 0 : i32
    %c0_i32_0 = arith.constant 0 : i32
    %c0_i32_1 = arith.constant 0 : i32
    return %c0_i32, %c0_i32_0 : i32, i32
  }
  func.func @transform_17(%arg0: i32) -> (i32, i32) {
    %c0_i32 = arith.constant 0 : i32
    %c0_i32_0 = arith.constant 0 : i32
    %c0_i32_1 = arith.constant 0 : i32
    return %c0_i32, %c0_i32_0 : i32, i32
  }
  func.func @transform_18(%arg0: i32) -> (i32, i32) {
    %c0_i32 = arith.constant 0 : i32
    %c0_i32_0 = arith.constant 0 : i32
    %c0_i32_1 = arith.constant 0 : i32
    return %c0_i32, %c0_i32_0 : i32, i32
  }
  func.func @transform_19(%arg0: i32) -> (i32, i32) {
    %c0_i32 = arith.constant 0 : i32
    %c0_i32_0 = arith.constant 0 : i32
    %c0_i32_1 = arith.constant 0 : i32
    return %c0_i32, %c0_i32_0 : i32, i32
  }
  func.func @transform_20(%arg0: i32) -> (i32, i32) {
    %c0_i32 = arith.constant 0 : i32
    %c0_i32_0 = arith.constant 0 : i32
    %c0_i32_1 = arith.constant 0 : i32
    return %c0_i32, %c0_i32_0 : i32, i32
  }
  func.func @transform_21(%arg0: i32) -> (i32, i32) {
    %c0_i32 = arith.constant 0 : i32
    %c0_i32_0 = arith.constant 0 : i32
    %c0_i32_1 = arith.constant 0 : i32
    return %c0_i32, %c0_i32_0 : i32, i32
  }
  func.func @transform_22(%arg0: i32) -> (i32, i32) {
    %c0_i32 = arith.constant 0 : i32
    %c0_i32_0 = arith.constant 0 : i32
    %c0_i32_1 = arith.constant 0 : i32
    return %c0_i32, %c0_i32_0 : i32, i32
  }
  func.func @transform_23(%arg0: i32) -> (i32, i32) {
    %c0_i32 = arith.constant 0 : i32
    %c0_i32_0 = arith.constant 0 : i32
    %c0_i32_1 = arith.constant 0 : i32
    return %c0_i32, %c0_i32_0 : i32, i32
  }
  func.func @transform_24(%arg0: i32) -> (i32, i32) {
    %c0_i32 = arith.constant 0 : i32
    %c0_i32_0 = arith.constant 0 : i32
    %c0_i32_1 = arith.constant 0 : i32
    return %c0_i32, %c0_i32_0 : i32, i32
  }
  func.func @transform_25(%arg0: i32) -> (i32, i32) {
    %c0_i32 = arith.constant 0 : i32
    %c0_i32_0 = arith.constant 0 : i32
    %c0_i32_1 = arith.constant 0 : i32
    return %c0_i32, %c0_i32_0 : i32, i32
  }
}

</mosaic_0001>

<llo_original>
// kernel: _lambda_.1
$region0: #{_lambda_.1}
  #allocation0 [shape = 'u32[]', space=smem, size = 0x4, offset = 0x4, fixed_abs, tag = 'smem constant byte address 0x4 - core index']
  #allocation1 [shape = 'u32[72,128]{1,0:T(1,128)}', space=vmem, size = 0x9000, scoped, tag = 'internal scratch']
  %s0 = inlined_call_operand.vmem [shape: bf16[128,128], index: 0, kind: input, shape index: {}]
  %s1 = inlined_call_operand.vmem [shape: bf16[128,128], index: 1, kind: input, shape index: {}]
  %s2 = inlined_call_operand.vmem [shape: f32[1,128], index: 2, kind: input, shape index: {}]
  %s3 = inlined_call_operand.vmem [shape: f32[1,128], index: 3, kind: input, shape index: {}, may-alias: {3,8,13,18,23}]
  %s4 = inlined_call_operand.vmem [shape: f32[1,128], index: 4, kind: input, shape index: {}, may-alias: {4,9,14,19,24}]
  %s5 = inlined_call_operand.vmem [shape: bf16[288,128], index: 5, kind: input, shape index: {}]
  %s6 = inlined_call_operand.vmem [shape: bf16[1152,128], index: 6, kind: input, shape index: {}]
  %s7 = inlined_call_operand.vmem [shape: f32[1,128], index: 7, kind: input, shape index: {}]
  %s8 = inlined_call_operand.vmem [shape: f32[1,128], index: 8, kind: input, shape index: {}, may-alias: {3,8,13,18,23}]
  %s9 = inlined_call_operand.vmem [shape: f32[1,128], index: 9, kind: input, shape index: {}, may-alias: {4,9,14,19,24}]
  %s10 = inlined_call_operand.vmem [shape: bf16[72,32], index: 10, kind: input, shape index: {}]
  %s11 = inlined_call_operand.vmem [shape: bf16[1152,128], index: 11, kind: input, shape index: {}]
  %s12 = inlined_call_operand.vmem [shape: f32[1,128], index: 12, kind: input, shape index: {}]
  %s13 = inlined_call_operand.vmem [shape: f32[1,128], index: 13, kind: input, shape index: {}, may-alias: {3,8,13,18,23}]
  %s14 = inlined_call_operand.vmem [shape: f32[1,128], index: 14, kind: input, shape index: {}, may-alias: {4,9,14,19,24}]
  %s15 = inlined_call_operand.vmem [shape: bf16[72,8], index: 15, kind: input, shape index: {}]
  %s16 = inlined_call_operand.vmem [shape: bf16[1152,128], index: 16, kind: input, shape index: {}]
  %s17 = inlined_call_operand.vmem [shape: f32[1,128], index: 17, kind: input, shape index: {}]
  %s18 = inlined_call_operand.vmem [shape: f32[1,128], index: 18, kind: input, shape index: {}, may-alias: {3,8,13,18,23}]
  %s19 = inlined_call_operand.vmem [shape: f32[1,128], index: 19, kind: input, shape index: {}, may-alias: {4,9,14,19,24}]
  %s20 = inlined_call_operand.vmem [shape: bf16[72,2], index: 20, kind: input, shape index: {}]
  %s21 = inlined_call_operand.vmem [shape: bf16[1152,128], index: 21, kind: input, shape index: {}]
  %s22 = inlined_call_operand.vmem [shape: f32[1,128], index: 22, kind: input, shape index: {}]
  %s23 = inlined_call_operand.vmem [shape: f32[1,128], index: 23, kind: input, shape index: {}, may-alias: {3,8,13,18,23}]
  %s24 = inlined_call_operand.vmem [shape: f32[1,128], index: 24, kind: input, shape index: {}, may-alias: {4,9,14,19,24}]
  %s25 = inlined_call_operand.hbm [shape: f32[2,128], index: 25, kind: output, shape index: {}]
  %s26 = sld [smem:[#allocation0]]
  $region110: #{_lambda_.1} parent=0
    _
  %s28 = ssub.s32 1, %s26
  %s29 = scalar_select 0, %s28, %s26
  $region1: #{_lambda_.1} parent=0
    #allocation2 [shape = 'u8[1024]{0}', space=vmem, size = 0x400, scoped, tag = 'output window, operand 0, single buffered']
    #allocation3 [shape = 's32[1]{0}', space=sflag, size = 0x4, scoped, tag = 'scoped memory for _lambda_.1']
    %30 = vsyncpa [#allocation3], 0
    // Predicated region
    $region2: #{_lambda_.1} parent=1 // pred_check
      _
    $region3: #{_lambda_.1} parent=1 // pred_check_branch
      %32 = sbr.rel (0) target = $region5
    $region4: #{_lambda_.1} parent=1 // pred_region
      _
    $region5: #{_lambda_.1} parent=1 // pred_fallthru
      _
    // Predicated region
    $region6: #{_lambda_.1} parent=1 // pred_check
      _
    $region7: #{_lambda_.1} parent=1 // pred_check_branch
      %34 = sbr.rel (0) target = $region9
    $region8: #{_lambda_.1} parent=1 // pred_region
      _
    $region9: #{_lambda_.1} parent=1 // pred_fallthru
      _
    // Predicated region
    $region10: #{_lambda_.1} parent=1 // pred_check
      _
    $region11: #{_lambda_.1} parent=1 // pred_check_branch
      %36 = sbr.rel (0) target = $region13
    $region12: #{_lambda_.1} parent=1 // pred_region
      _
    $region13: #{_lambda_.1} parent=1 // pred_fallthru
      _
    // Predicated region
    $region14: #{_lambda_.1} parent=1 // pred_check
      _
    $region15: #{_lambda_.1} parent=1 // pred_check_branch
      %38 = sbr.rel (0) target = $region17
    $region16: #{_lambda_.1} parent=1 // pred_region
      _
    $region17: #{_lambda_.1} parent=1 // pred_fallthru
      _
    // Predicated region
    $region18: #{_lambda_.1} parent=1 // pred_check
      _
    $region19: #{_lambda_.1} parent=1 // pred_check_branch
      %40 = sbr.rel (0) target = $region21
    $region20: #{_lambda_.1} parent=1 // pred_region
      _
    $region21: #{_lambda_.1} parent=1 // pred_fallthru
      _
    // Predicated region
    $region22: #{_lambda_.1} parent=1 // pred_check
      _
    $region23: #{_lambda_.1} parent=1 // pred_check_branch
      %42 = sbr.rel (0) target = $region25
    $region24: #{_lambda_.1} parent=1 // pred_region
      _
    $region25: #{_lambda_.1} parent=1 // pred_fallthru
      _
    // Predicated region
    $region26: #{_lambda_.1} parent=1 // pred_check
      _
    $region27: #{_lambda_.1} parent=1 // pred_check_branch
      %44 = sbr.rel (0) target = $region29
    $region28: #{_lambda_.1} parent=1 // pred_region
      _
    $region29: #{_lambda_.1} parent=1 // pred_fallthru
      _
    // Predicated region
    $region30: #{_lambda_.1} parent=1 // pred_check
      _
    $region31: #{_lambda_.1} parent=1 // pred_check_branch
      %46 = sbr.rel (0) target = $region33
    $region32: #{_lambda_.1} parent=1 // pred_region
      _
    $region33: #{_lambda_.1} parent=1 // pred_fallthru
      _
    // Predicated region
    $region34: #{_lambda_.1} parent=1 // pred_check
      _
    $region35: #{_lambda_.1} parent=1 // pred_check_branch
      %48 = sbr.rel (0) target = $region37
    $region36: #{_lambda_.1} parent=1 // pred_region
      _
    $region37: #{_lambda_.1} parent=1 // pred_fallthru
      _
    // Predicated region
    $region38: #{_lambda_.1} parent=1 // pred_check
      _
    $region39: #{_lambda_.1} parent=1 // pred_check_branch
      %50 = sbr.rel (0) target = $region41
    $region40: #{_lambda_.1} parent=1 // pred_region
      _
    $region41: #{_lambda_.1} parent=1 // pred_fallthru
      _
    // Predicated region
    $region42: #{_lambda_.1} parent=1 // pred_check
      _
    $region43: #{_lambda_.1} parent=1 // pred_check_branch
      %52 = sbr.rel (0) target = $region45
    $region44: #{_lambda_.1} parent=1 // pred_region
      _
    $region45: #{_lambda_.1} parent=1 // pred_fallthru
      _
    // Predicated region
    $region46: #{_lambda_.1} parent=1 // pred_check
      _
    $region47: #{_lambda_.1} parent=1 // pred_check_branch
      %54 = sbr.rel (0) target = $region49
    $region48: #{_lambda_.1} parent=1 // pred_region
      _
    $region49: #{_lambda_.1} parent=1 // pred_fallthru
      _
    // Predicated region
    $region50: #{_lambda_.1} parent=1 // pred_check
      _
    $region51: #{_lambda_.1} parent=1 // pred_check_branch
      %56 = sbr.rel (0) target = $region53
    $region52: #{_lambda_.1} parent=1 // pred_region
      _
    $region53: #{_lambda_.1} parent=1 // pred_fallthru
      _
    // Predicated region
    $region54: #{_lambda_.1} parent=1 // pred_check
      _
    $region55: #{_lambda_.1} parent=1 // pred_check_branch
      %58 = sbr.rel (0) target = $region57
    $region56: #{_lambda_.1} parent=1 // pred_region
      _
    $region57: #{_lambda_.1} parent=1 // pred_fallthru
      _
    // Predicated region
    $region58: #{_lambda_.1} parent=1 // pred_check
      _
    $region59: #{_lambda_.1} parent=1 // pred_check_branch
      %60 = sbr.rel (0) target = $region61
    $region60: #{_lambda_.1} parent=1 // pred_region
      _
    $region61: #{_lambda_.1} parent=1 // pred_fallthru
      _
    // Predicated region
    $region62: #{_lambda_.1} parent=1 // pred_check
      _
    $region63: #{_lambda_.1} parent=1 // pred_check_branch
      %62 = sbr.rel (0) target = $region65
    $region64: #{_lambda_.1} parent=1 // pred_region
      _
    $region65: #{_lambda_.1} parent=1 // pred_fallthru
      _
    // Predicated region
    $region66: #{_lambda_.1} parent=1 // pred_check
      _
    $region67: #{_lambda_.1} parent=1 // pred_check_branch
      %64 = sbr.rel (0) target = $region69
    $region68: #{_lambda_.1} parent=1 // pred_region
      _
    $region69: #{_lambda_.1} parent=1 // pred_fallthru
      _
    // Predicated region
    $region70: #{_lambda_.1} parent=1 // pred_check
      _
    $region71: #{_lambda_.1} parent=1 // pred_check_branch
      %66 = sbr.rel (0) target = $region73
    $region72: #{_lambda_.1} parent=1 // pred_region
      _
    $region73: #{_lambda_.1} parent=1 // pred_fallthru
      _
    // Predicated region
    $region74: #{_lambda_.1} parent=1 // pred_check
      _
    $region75: #{_lambda_.1} parent=1 // pred_check_branch
      %68 = sbr.rel (0) target = $region77
    $region76: #{_lambda_.1} parent=1 // pred_region
      _
    $region77: #{_lambda_.1} parent=1 // pred_fallthru
      _
    // Predicated region
    $region78: #{_lambda_.1} parent=1 // pred_check
      _
    $region79: #{_lambda_.1} parent=1 // pred_check_branch
      %70 = sbr.rel (0) target = $region81
    $region80: #{_lambda_.1} parent=1 // pred_region
      _
    $region81: #{_lambda_.1} parent=1 // pred_fallthru
      _
    // Predicated region
    $region82: #{_lambda_.1} parent=1 // pred_check
      _
    $region83: #{_lambda_.1} parent=1 // pred_check_branch
      %72 = sbr.rel (0) target = $region85
    $region84: #{_lambda_.1} parent=1 // pred_region
      _
    $region85: #{_lambda_.1} parent=1 // pred_fallthru
      _
    // Predicated region
    $region86: #{_lambda_.1} parent=1 // pred_check
      _
    $region87: #{_lambda_.1} parent=1 // pred_check_branch
      %74 = sbr.rel (0) target = $region89
    $region88: #{_lambda_.1} parent=1 // pred_region
      _
    $region89: #{_lambda_.1} parent=1 // pred_fallthru
      _
    // Predicated region
    $region90: #{_lambda_.1} parent=1 // pred_check
      _
    $region91: #{_lambda_.1} parent=1 // pred_check_branch
      %76 = sbr.rel (0) target = $region93
    $region92: #{_lambda_.1} parent=1 // pred_region
      _
    $region93: #{_lambda_.1} parent=1 // pred_fallthru
      _
    // Predicated region
    $region94: #{_lambda_.1} parent=1 // pred_check
      _
    $region95: #{_lambda_.1} parent=1 // pred_check_branch
      %78 = sbr.rel (0) target = $region97
    $region96: #{_lambda_.1} parent=1 // pred_region
      _
    $region97: #{_lambda_.1} parent=1 // pred_fallthru
      _
    // Predicated region
    $region98: #{_lambda_.1} parent=1 // pred_check
      _
    $region99: #{_lambda_.1} parent=1 // pred_check_branch
      %80 = sbr.rel (0) target = $region101
    $region100: #{_lambda_.1} parent=1 // pred_region
      _
    $region101: #{_lambda_.1} parent=1 // pred_fallthru
      _
    %v82 = vld [vmem:[%s0] sm:$0xf]
    %v83 = vld [vmem:[%s0 + $0x4] sm:$0xf]
    %v84 = vld [vmem:[%s0 + $0x8] sm:$0xf]
    %v85 = vld [vmem:[%s0 + $0xc] sm:$0xf]
    %v86 = vld [vmem:[%s0 + $0x10] sm:$0xf]
    %v87 = vld [vmem:[%s0 + $0x14] sm:$0xf]
    %v88 = vld [vmem:[%s0 + $0x18] sm:$0xf]
    %v89 = vld [vmem:[%s0 + $0x1c] sm:$0xf]
    %v90 = vld [vmem:[%s0 + $0x20] sm:$0xf]
    %v91 = vld [vmem:[%s0 + $0x24] sm:$0xf]
    %v92 = vld [vmem:[%s0 + $0x28] sm:$0xf]
    %v93 = vld [vmem:[%s0 + $0x2c] sm:$0xf]
    %v94 = vld [vmem:[%s0 + $0x30] sm:$0xf]
    %v95 = vld [vmem:[%s0 + $0x34] sm:$0xf]
    %v96 = vld [vmem:[%s0 + $0x38] sm:$0xf]
    %v97 = vld [vmem:[%s0 + $0x3c] sm:$0xf]
    %v98 = vld [vmem:[%s1] sm:$0xf]
    %v99 = vld [vmem:[%s1 + $0x4] sm:$0xf]
    %v100 = vld [vmem:[%s1 + $0x8] sm:$0xf]
    %v101 = vld [vmem:[%s1 + $0xc] sm:$0xf]
    %v102 = vld [vmem:[%s1 + $0x10] sm:$0xf]
    %v103 = vld [vmem:[%s1 + $0x14] sm:$0xf]
    %v104 = vld [vmem:[%s1 + $0x18] sm:$0xf]
    %v105 = vld [vmem:[%s1 + $0x1c] sm:$0xf]
    %v106 = vld [vmem:[%s1 + $0x20] sm:$0xf]
    %v107 = vld [vmem:[%s1 + $0x24] sm:$0xf]
    %v108 = vld [vmem:[%s1 + $0x28] sm:$0xf]
    %v109 = vld [vmem:[%s1 + $0x2c] sm:$0xf]
    %v110 = vld [vmem:[%s1 + $0x30] sm:$0xf]
    %v111 = vld [vmem:[%s1 + $0x34] sm:$0xf]
    %v112 = vld [vmem:[%s1 + $0x38] sm:$0xf]
    %v113 = vld [vmem:[%s1 + $0x3c] sm:$0xf]
    %v114 = vld [vmem:[%s2] sm:$0x1]
    %v115 = vld [vmem:[%s3] sm:$0x1]
    %v116 = vld [vmem:[%s4] sm:$0x1]
    %v118 = vperm.slane %v114, 0
    %v136 = vunpack.c.l.b16 %v82
    %v137 = vunpack.c.l.b16 %v83
    %v138 = vunpack.c.l.b16 %v84
    %v139 = vunpack.c.l.b16 %v85
    %v140 = vunpack.c.l.b16 %v86
    %v141 = vunpack.c.l.b16 %v87
    %v142 = vunpack.c.l.b16 %v88
    %v143 = vunpack.c.l.b16 %v89
    %v144 = vunpack.c.l.b16 %v90
    %v145 = vunpack.c.l.b16 %v91
    %v146 = vunpack.c.l.b16 %v92
    %v147 = vunpack.c.l.b16 %v93
    %v148 = vunpack.c.l.b16 %v94
    %v149 = vunpack.c.l.b16 %v95
    %v150 = vunpack.c.l.b16 %v96
    %v151 = vunpack.c.l.b16 %v97
    %v152 = vpack.c.b16 %v137, %v136
    %v153 = vpack.c.b16 %v139, %v138
    %v154 = vpack.c.b16 %v141, %v140
    %v155 = vpack.c.b16 %v143, %v142
    %v156 = vpack.c.b16 %v145, %v144
    %v157 = vpack.c.b16 %v147, %v146
    %v158 = vpack.c.b16 %v149, %v148
    %v159 = vpack.c.b16 %v151, %v150
    %v184 = vunpack.c.l.b16 %v98
    %v185 = vunpack.c.l.b16 %v99
    %v186 = vunpack.c.l.b16 %v100
    %v187 = vunpack.c.l.b16 %v101
    %v188 = vunpack.c.l.b16 %v102
    %v189 = vunpack.c.l.b16 %v103
    %v190 = vunpack.c.l.b16 %v104
    %v191 = vunpack.c.l.b16 %v105
    %v192 = vunpack.c.l.b16 %v106
    %v193 = vunpack.c.l.b16 %v107
    %v194 = vunpack.c.l.b16 %v108
    %v195 = vunpack.c.l.b16 %v109
    %v196 = vunpack.c.l.b16 %v110
    %v197 = vunpack.c.l.b16 %v111
    %v198 = vunpack.c.l.b16 %v112
    %v199 = vunpack.c.l.b16 %v113
    %v200 = vpack.c.b16 %v185, %v184
    %v201 = vpack.c.b16 %v187, %v186
    %v202 = vpack.c.b16 %v189, %v188
    %v203 = vpack.c.b16 %v191, %v190
    %v204 = vpack.c.b16 %v193, %v192
    %v205 = vpack.c.b16 %v195, %v194
    %v206 = vpack.c.b16 %v197, %v196
    %v207 = vpack.c.b16 %v199, %v198
    %216 = vmatpush.bf16.msra.mxu0 %v207
    %217 = vmatpush.bf16.msra.mxu0 %v206
    %218 = vmatpush.bf16.msra.mxu0 %v205
    %219 = vmatpush.bf16.msra.mxu0 %v204
    %220 = vmatpush.bf16.msra.mxu0 %v203
    %221 = vmatpush.bf16.msra.mxu0 %v202
    %222 = vmatpush.bf16.msra.mxu0 %v201
    %223 = vmatpush.bf16.msra.mxu0 %v200
    %224 = vmatmul.bf16.gmra.mxu0 %v152
    %v225 = vpop.f32.mrf.mxu0
    %v226 = vadd.f32 %v118, %v225
    %v227 = vpop.f32.mrf.mxu0
    %v228 = vadd.f32 %v118, %v227
    %229 = vmatmul.bf16.gmra.mxu0 %v153
    %v230 = vpop.f32.mrf.mxu0
    %v231 = vadd.f32 %v118, %v230
    %v232 = vpop.f32.mrf.mxu0
    %v233 = vadd.f32 %v118, %v232
    %234 = vmatmul.bf16.gmra.mxu0 %v154
    %v235 = vpop.f32.mrf.mxu0
    %v236 = vadd.f32 %v118, %v235
    %v237 = vpop.f32.mrf.mxu0
    %v238 = vadd.f32 %v118, %v237
    %239 = vmatmul.bf16.gmra.mxu0 %v155
    %v240 = vpop.f32.mrf.mxu0
    %v241 = vadd.f32 %v118, %v240
    %v242 = vpop.f32.mrf.mxu0
    %v243 = vadd.f32 %v118, %v242
    %244 = vmatmul.bf16.gmra.mxu0 %v156
    %v245 = vpop.f32.mrf.mxu0
    %v246 = vadd.f32 %v118, %v245
    %v247 = vpop.f32.mrf.mxu0
    %v248 = vadd.f32 %v118, %v247
    %249 = vmatmul.bf16.gmra.mxu0 %v157
    %v250 = vpop.f32.mrf.mxu0
    %v251 = vadd.f32 %v118, %v250
    %v252 = vpop.f32.mrf.mxu0
    %v253 = vadd.f32 %v118, %v252
    %254 = vmatmul.bf16.gmra.mxu0 %v158
    %v255 = vpop.f32.mrf.mxu0
    %v256 = vadd.f32 %v118, %v255
    %v257 = vpop.f32.mrf.mxu0
    %v258 = vadd.f32 %v118, %v257
    %259 = vmatmul.bf16.gmra.mxu0 %v159
    %v260 = vpop.f32.mrf.mxu0
    %v261 = vadd.f32 %v118, %v260
    %v262 = vpop.f32.mrf.mxu0
    %v263 = vadd.f32 %v118, %v262
    %264 = vdwg.mxu0
    %v265 = vmax.f32 %v226, 0.0
    %v266 = vmax.f32 %v228, 0.0
    %v267 = vmax.f32 %v231, 0.0
    %v268 = vmax.f32 %v233, 0.0
    %v269 = vmax.f32 %v236, 0.0
    %v270 = vmax.f32 %v238, 0.0
    %v271 = vmax.f32 %v241, 0.0
    %v272 = vmax.f32 %v243, 0.0
    %v273 = vmax.f32 %v246, 0.0
    %v274 = vmax.f32 %v248, 0.0
    %v275 = vmax.f32 %v251, 0.0
    %v276 = vmax.f32 %v253, 0.0
    %v277 = vmax.f32 %v256, 0.0
    %v278 = vmax.f32 %v258, 0.0
    %v279 = vmax.f32 %v261, 0.0
    %v280 = vmax.f32 %v263, 0.0
    %v281 = vadd.f32 %v265, %v266
    %v282 = vadd.f32 %v281, %v267
    %v283 = vadd.f32 %v282, %v268
    %v284 = vadd.f32 %v283, %v269
    %v285 = vadd.f32 %v284, %v270
    %v286 = vadd.f32 %v285, %v271
    %v287 = vadd.f32 %v286, %v272
    %v288 = vadd.f32 %v287, %v273
    %v289 = vadd.f32 %v288, %v274
    %v290 = vadd.f32 %v289, %v275
    %v291 = vadd.f32 %v290, %v276
    %v292 = vadd.f32 %v291, %v277
    %v293 = vadd.f32 %v292, %v278
    %v294 = vadd.f32 %v293, %v279
    %v295 = vadd.f32 %v294, %v280
    %v296 = vrot.slane %v295, 4
    %v297 = vadd.f32 %v295, %v296
    %v298 = vrot.slane %v297, 2
    %v299 = vadd.f32 %v297, %v298
    %v300 = vrot.slane %v299, 1
    %v301 = vadd.f32 %v299, %v300
    %v302 = vrcp.pop 128.0
    %v303 = vmul.f32 128.0, %v302
    %v304 = vsub.f32 1.0, %v303
    %v305 = vmul.f32 %v302, %v304
    %v306 = vadd.f32 %v302, %v305
    %vm307 = vweird.f32 %v302
    %v308 = vsel %vm307, %v302, %v306
    %v309 = vmul.f32 %v301, %v308
    %v310 = vsub.f32 %v265, %v309
    %v311 = vsub.f32 %v266, %v309
    %v312 = vsub.f32 %v267, %v309
    %v313 = vsub.f32 %v268, %v309
    %v314 = vsub.f32 %v269, %v309
    %v315 = vsub.f32 %v270, %v309
    %v316 = vsub.f32 %v271, %v309
    %v317 = vsub.f32 %v272, %v309
    %v318 = vsub.f32 %v273, %v309
    %v319 = vsub.f32 %v274, %v309
    %v320 = vsub.f32 %v275, %v309
    %v321 = vsub.f32 %v276, %v309
    %v322 = vsub.f32 %v277, %v309
    %v323 = vsub.f32 %v278, %v309
    %v324 = vsub.f32 %v279, %v309
    %v325 = vsub.f32 %v280, %v309
    %v326 = vmul.f32 %v310, %v310
    %v327 = vmul.f32 %v311, %v311
    %v328 = vmul.f32 %v312, %v312
    %v329 = vmul.f32 %v313, %v313
    %v330 = vmul.f32 %v314, %v314
    %v331 = vmul.f32 %v315, %v315
    %v332 = vmul.f32 %v316, %v316
    %v333 = vmul.f32 %v317, %v317
    %v334 = vmul.f32 %v318, %v318
    %v335 = vmul.f32 %v319, %v319
    %v336 = vmul.f32 %v320, %v320
    %v337 = vmul.f32 %v321, %v321
    %v338 = vmul.f32 %v322, %v322
    %v339 = vmul.f32 %v323, %v323
    %v340 = vmul.f32 %v324, %v324
    %v341 = vmul.f32 %v325, %v325
    %v342 = vadd.f32 %v326, %v327
    %v343 = vadd.f32 %v342, %v328
    %v344 = vadd.f32 %v343, %v329
    %v345 = vadd.f32 %v344, %v330
    %v346 = vadd.f32 %v345, %v331
    %v347 = vadd.f32 %v346, %v332
    %v348 = vadd.f32 %v347, %v333
    %v349 = vadd.f32 %v348, %v334
    %v350 = vadd.f32 %v349, %v335
    %v351 = vadd.f32 %v350, %v336
    %v352 = vadd.f32 %v351, %v337
    %v353 = vadd.f32 %v352, %v338
    %v354 = vadd.f32 %v353, %v339
    %v355 = vadd.f32 %v354, %v340
    %v356 = vadd.f32 %v355, %v341
    %v357 = vrot.slane %v356, 4
    %v358 = vadd.f32 %v356, %v357
    %v359 = vrot.slane %v358, 2
    %v360 = vadd.f32 %v358, %v359
    %v361 = vrot.slane %v360, 1
    %v362 = vadd.f32 %v360, %v361
    %v363 = vmul.f32 %v362, %v308
    %v364 = vadd.f32 %v363, 1e-05
    %v365 = vrsqrt.pop %v364
    %v366 = vmul.f32 %v365, %v364
    %v367 = vmul.f32 %v366, %v365
    %v368 = vmul.f32 0.5, %v367
    %v369 = vsub.f32 1.5, %v368
    %v370 = vmul.f32 %v365, %v369
    %vm371 = vweird.f32 %v364
    %vm372 = vweird.f32 %v365
    %vm373 = vmor %vm371, %vm372
    %v374 = vsel %vm373, %v365, %v370
    %v375 = vmul.f32 %v310, %v374
    %v376 = vmul.f32 %v311, %v374
    %v377 = vmul.f32 %v312, %v374
    %v378 = vmul.f32 %v313, %v374
    %v379 = vmul.f32 %v314, %v374
    %v380 = vmul.f32 %v315, %v374
    %v381 = vmul.f32 %v316, %v374
    %v382 = vmul.f32 %v317, %v374
    %v383 = vmul.f32 %v318, %v374
    %v384 = vmul.f32 %v319, %v374
    %v385 = vmul.f32 %v320, %v374
    %v386 = vmul.f32 %v321, %v374
    %v387 = vmul.f32 %v322, %v374
    %v388 = vmul.f32 %v323, %v374
    %v389 = vmul.f32 %v324, %v374
    %v390 = vmul.f32 %v325, %v374
    %v392 = vperm.slane %v115, 0
    %v394 = vmul.f32 %v375, %v392
    %v395 = vmul.f32 %v376, %v392
    %v396 = vmul.f32 %v377, %v392
    %v397 = vmul.f32 %v378, %v392
    %v398 = vmul.f32 %v379, %v392
    %v399 = vmul.f32 %v380, %v392
    %v400 = vmul.f32 %v381, %v392
    %v401 = vmul.f32 %v382, %v392
    %v402 = vmul.f32 %v383, %v392
    %v403 = vmul.f32 %v384, %v392
    %v404 = vmul.f32 %v385, %v392
    %v405 = vmul.f32 %v386, %v392
    %v406 = vmul.f32 %v387, %v392
    %v407 = vmul.f32 %v388, %v392
    %v408 = vmul.f32 %v389, %v392
    %v409 = vmul.f32 %v390, %v392
    %v411 = vperm.slane %v116, 0
    %v413 = vadd.f32 %v394, %v411
    %v414 = vadd.f32 %v395, %v411
    %v415 = vadd.f32 %v396, %v411
    %v416 = vadd.f32 %v397, %v411
    %v417 = vadd.f32 %v398, %v411
    %v418 = vadd.f32 %v399, %v411
    %v419 = vadd.f32 %v400, %v411
    %v420 = vadd.f32 %v401, %v411
    %v421 = vadd.f32 %v402, %v411
    %v422 = vadd.f32 %v403, %v411
    %v423 = vadd.f32 %v404, %v411
    %v424 = vadd.f32 %v405, %v411
    %v425 = vadd.f32 %v406, %v411
    %v426 = vadd.f32 %v407, %v411
    %v427 = vadd.f32 %v408, %v411
    %v428 = vadd.f32 %v409, %v411
    %v429 = vpack.c.bf16 %v414, %v413
    %v430 = vpack.c.bf16 %v416, %v415
    %v431 = vpack.c.bf16 %v418, %v417
    %v432 = vpack.c.bf16 %v420, %v419
    %v433 = vpack.c.bf16 %v422, %v421
    %v434 = vpack.c.bf16 %v424, %v423
    %v435 = vpack.c.bf16 %v426, %v425
    %v436 = vpack.c.bf16 %v428, %v427
    %v437 = vld [vmem:[%s5] sm:$0xf]
    %v438 = vld [vmem:[%s5 + $0x4] sm:$0xf]
    %v439 = vld [vmem:[%s5 + $0x8] sm:$0xf]
    %v440 = vld [vmem:[%s5 + $0xc] sm:$0xf]
    %v441 = vld [vmem:[%s5 + $0x10] sm:$0xf]
    %v442 = vld [vmem:[%s5 + $0x14] sm:$0xf]
    %v443 = vld [vmem:[%s5 + $0x18] sm:$0xf]
    %v444 = vld [vmem:[%s5 + $0x1c] sm:$0xf]
    %v445 = vld [vmem:[%s5 + $0x20] sm:$0xf]
    %v446 = vld [vmem:[%s5 + $0x24] sm:$0xf]
    %v447 = vld [vmem:[%s5 + $0x28] sm:$0xf]
    %v448 = vld [vmem:[%s5 + $0x2c] sm:$0xf]
    %v449 = vld [vmem:[%s5 + $0x30] sm:$0xf]
    %v450 = vld [vmem:[%s5 + $0x34] sm:$0xf]
    %v451 = vld [vmem:[%s5 + $0x38] sm:$0xf]
    %v452 = vld [vmem:[%s5 + $0x3c] sm:$0xf]
    %v453 = vld [vmem:[%s5 + $0x40] sm:$0xf]
    %v454 = vld [vmem:[%s5 + $0x44] sm:$0xf]
    %v455 = vld [vmem:[%s5 + $0x48] sm:$0xf]
    %v456 = vld [vmem:[%s5 + $0x4c] sm:$0xf]
    %v457 = vld [vmem:[%s5 + $0x50] sm:$0xf]
    %v458 = vld [vmem:[%s5 + $0x54] sm:$0xf]
    %v459 = vld [vmem:[%s5 + $0x58] sm:$0xf]
    %v460 = vld [vmem:[%s5 + $0x5c] sm:$0xf]
    %v461 = vld [vmem:[%s5 + $0x60] sm:$0xf]
    %v462 = vld [vmem:[%s5 + $0x64] sm:$0xf]
    %v463 = vld [vmem:[%s5 + $0x68] sm:$0xf]
    %v464 = vld [vmem:[%s5 + $0x6c] sm:$0xf]
    %v465 = vld [vmem:[%s5 + $0x70] sm:$0xf]
    %v466 = vld [vmem:[%s5 + $0x74] sm:$0xf]
    %v467 = vld [vmem:[%s5 + $0x78] sm:$0xf]
    %v468 = vld [vmem:[%s5 + $0x7c] sm:$0xf]
    %v469 = vld [vmem:[%s5 + $0x80] sm:$0xf]
    %v470 = vld [vmem:[%s5 + $0x84] sm:$0xf]
    %v471 = vld [vmem:[%s5 + $0x88] sm:$0xf]
    %v472 = vld [vmem:[%s5 + $0x8c] sm:$0xf]
    %v509 = vunpack.c.l.b16 %v437
    %v510 = vunpack.c.l.b16 %v438
    %v511 = vunpack.c.l.b16 %v439
    %v512 = vunpack.c.l.b16 %v440
    %v513 = vunpack.c.l.b16 %v441
    %v514 = vunpack.c.l.b16 %v442
    %v515 = vunpack.c.l.b16 %v443
    %v516 = vunpack.c.l.b16 %v444
    %v517 = vunpack.c.l.b16 %v445
    %v518 = vunpack.c.l.b16 %v446
    %v519 = vunpack.c.l.b16 %v447
    %v520 = vunpack.c.l.b16 %v448
    %v521 = vunpack.c.l.b16 %v449
    %v522 = vunpack.c.l.b16 %v450
    %v523 = vunpack.c.l.b16 %v451
    %v524 = vunpack.c.l.b16 %v452
    %v525 = vunpack.c.l.b16 %v453
    %v526 = vunpack.c.l.b16 %v454
    %v527 = vunpack.c.l.b16 %v455
    %v528 = vunpack.c.l.b16 %v456
    %v529 = vunpack.c.l.b16 %v457
    %v530 = vunpack.c.l.b16 %v458
    %v531 = vunpack.c.l.b16 %v459
    %v532 = vunpack.c.l.b16 %v460
    %v533 = vunpack.c.l.b16 %v461
    %v534 = vunpack.c.l.b16 %v462
    %v535 = vunpack.c.l.b16 %v463
    %v536 = vunpack.c.l.b16 %v464
    %v537 = vunpack.c.l.b16 %v465
    %v538 = vunpack.c.l.b16 %v466
    %v539 = vunpack.c.l.b16 %v467
    %v540 = vunpack.c.l.b16 %v468
    %v541 = vunpack.c.l.b16 %v469
    %v542 = vunpack.c.l.b16 %v470
    %v543 = vunpack.c.l.b16 %v471
    %v544 = vunpack.c.l.b16 %v472
    %v545 = vpack.c.b16 %v510, %v509
    %v546 = vpack.c.b16 %v512, %v511
    %v547 = vpack.c.b16 %v514, %v513
    %v548 = vpack.c.b16 %v516, %v515
    %v549 = vpack.c.b16 %v518, %v517
    %v550 = vpack.c.b16 %v520, %v519
    %v551 = vpack.c.b16 %v522, %v521
    %v552 = vpack.c.b16 %v524, %v523
    %v553 = vpack.c.b16 %v526, %v525
    %v554 = vpack.c.b16 %v528, %v527
    %v555 = vpack.c.b16 %v530, %v529
    %v556 = vpack.c.b16 %v532, %v531
    %v557 = vpack.c.b16 %v534, %v533
    %v558 = vpack.c.b16 %v536, %v535
    %v559 = vpack.c.b16 %v538, %v537
    %v560 = vpack.c.b16 %v540, %v539
    %v561 = vpack.c.b16 %v542, %v541
    %v562 = vpack.c.b16 %v544, %v543
    %581 = vmatpush.bf16.msra.mxu0 %v436
    %582 = vmatpush.bf16.msra.mxu0 %v435
    %583 = vmatpush.bf16.msra.mxu0 %v434
    %584 = vmatpush.bf16.msra.mxu0 %v433
    %585 = vmatpush.bf16.msra.mxu0 %v432
    %586 = vmatpush.bf16.msra.mxu0 %v431
    %587 = vmatpush.bf16.msra.mxu0 %v430
    %588 = vmatpush.bf16.msra.mxu0 %v429
    %589 = vmatmul.bf16.gmra.mxu0 %v545
    %v590 = vpop.f32.mrf.mxu0
    %v591 = vadd.f32 0.0, %v590
    %v592 = vpop.f32.mrf.mxu0
    %v593 = vadd.f32 0.0, %v592
    %594 = vmatmul.bf16.gmra.mxu0 %v546
    %v595 = vpop.f32.mrf.mxu0
    %v596 = vadd.f32 0.0, %v595
    %v597 = vpop.f32.mrf.mxu0
    %v598 = vadd.f32 0.0, %v597
    %599 = vmatmul.bf16.gmra.mxu0 %v547
    %v600 = vpop.f32.mrf.mxu0
    %v601 = vadd.f32 0.0, %v600
    %v602 = vpop.f32.mrf.mxu0
    %v603 = vadd.f32 0.0, %v602
    %604 = vmatmul.bf16.gmra.mxu0 %v548
    %v605 = vpop.f32.mrf.mxu0
    %v606 = vadd.f32 0.0, %v605
    %v607 = vpop.f32.mrf.mxu0
    %v608 = vadd.f32 0.0, %v607
    %609 = vmatmul.bf16.gmra.mxu0 %v549
    %v610 = vpop.f32.mrf.mxu0
    %v611 = vadd.f32 0.0, %v610
    %v612 = vpop.f32.mrf.mxu0
    %v613 = vadd.f32 0.0, %v612
    %614 = vmatmul.bf16.gmra.mxu0 %v550
    %v615 = vpop.f32.mrf.mxu0
    %v616 = vadd.f32 0.0, %v615
    %v617 = vpop.f32.mrf.mxu0
    %v618 = vadd.f32 0.0, %v617
    %619 = vmatmul.bf16.gmra.mxu0 %v551
    %v620 = vpop.f32.mrf.mxu0
    %v621 = vadd.f32 0.0, %v620
    %v622 = vpop.f32.mrf.mxu0
    %v623 = vadd.f32 0.0, %v622
    %624 = vmatmul.bf16.gmra.mxu0 %v552
    %v625 = vpop.f32.mrf.mxu0
    %v626 = vadd.f32 0.0, %v625
    %v627 = vpop.f32.mrf.mxu0
    %v628 = vadd.f32 0.0, %v627
    %629 = vmatmul.bf16.gmra.mxu0 %v553
    %v630 = vpop.f32.mrf.mxu0
    %v631 = vadd.f32 0.0, %v630
    %v632 = vpop.f32.mrf.mxu0
    %v633 = vadd.f32 0.0, %v632
    %634 = vmatmul.bf16.gmra.mxu0 %v554
    %v635 = vpop.f32.mrf.mxu0
    %v636 = vadd.f32 0.0, %v635
    %v637 = vpop.f32.mrf.mxu0
    %v638 = vadd.f32 0.0, %v637
    %639 = vmatmul.bf16.gmra.mxu0 %v555
    %v640 = vpop.f32.mrf.mxu0
    %v641 = vadd.f32 0.0, %v640
    %v642 = vpop.f32.mrf.mxu0
    %v643 = vadd.f32 0.0, %v642
    %644 = vmatmul.bf16.gmra.mxu0 %v556
    %v645 = vpop.f32.mrf.mxu0
    %v646 = vadd.f32 0.0, %v645
    %v647 = vpop.f32.mrf.mxu0
    %v648 = vadd.f32 0.0, %v647
    %649 = vmatmul.bf16.gmra.mxu0 %v557
    %v650 = vpop.f32.mrf.mxu0
    %v651 = vadd.f32 0.0, %v650
    %v652 = vpop.f32.mrf.mxu0
    %v653 = vadd.f32 0.0, %v652
    %654 = vmatmul.bf16.gmra.mxu0 %v558
    %v655 = vpop.f32.mrf.mxu0
    %v656 = vadd.f32 0.0, %v655
    %v657 = vpop.f32.mrf.mxu0
    %v658 = vadd.f32 0.0, %v657
    %659 = vmatmul.bf16.gmra.mxu0 %v559
    %v660 = vpop.f32.mrf.mxu0
    %v661 = vadd.f32 0.0, %v660
    %v662 = vpop.f32.mrf.mxu0
    %v663 = vadd.f32 0.0, %v662
    %664 = vmatmul.bf16.gmra.mxu0 %v560
    %v665 = vpop.f32.mrf.mxu0
    %v666 = vadd.f32 0.0, %v665
    %v667 = vpop.f32.mrf.mxu0
    %v668 = vadd.f32 0.0, %v667
    %669 = vmatmul.bf16.gmra.mxu0 %v561
    %v670 = vpop.f32.mrf.mxu0
    %v671 = vadd.f32 0.0, %v670
    %v672 = vpop.f32.mrf.mxu0
    %v673 = vadd.f32 0.0, %v672
    %674 = vmatmul.bf16.gmra.mxu0 %v562
    %v675 = vpop.f32.mrf.mxu0
    %v676 = vadd.f32 0.0, %v675
    %v677 = vpop.f32.mrf.mxu0
    %v678 = vadd.f32 0.0, %v677
    %679 = vdwg.mxu0
    %v680 = vpack.c.bf16 %v591, %v591
    %v681 = vpack.c.bf16 %v593, %v593
    %v682 = vpack.c.bf16 %v596, %v596
    %v683 = vpack.c.bf16 %v598, %v598
    %v684 = vpack.c.bf16 %v601, %v601
    %v685 = vpack.c.bf16 %v603, %v603
    %v686 = vpack.c.bf16 %v606, %v606
    %v687 = vpack.c.bf16 %v608, %v608
    %v688 = vpack.c.bf16 %v611, %v611
    %v689 = vpack.c.bf16 %v613, %v613
    %v690 = vpack.c.bf16 %v616, %v616
    %v691 = vpack.c.bf16 %v618, %v618
    %v692 = vpack.c.bf16 %v621, %v621
    %v693 = vpack.c.bf16 %v623, %v623
    %v694 = vpack.c.bf16 %v626, %v626
    %v695 = vpack.c.bf16 %v628, %v628
    %v696 = vpack.c.bf16 %v631, %v631
    %v697 = vpack.c.bf16 %v633, %v633
    %v698 = vpack.c.bf16 %v636, %v636
    %v699 = vpack.c.bf16 %v638, %v638
    %v700 = vpack.c.bf16 %v641, %v641
    %v701 = vpack.c.bf16 %v643, %v643
    %v702 = vpack.c.bf16 %v646, %v646
    %v703 = vpack.c.bf16 %v648, %v648
    %v704 = vpack.c.bf16 %v651, %v651
    %v705 = vpack.c.bf16 %v653, %v653
    %v706 = vpack.c.bf16 %v656, %v656
    %v707 = vpack.c.bf16 %v658, %v658
    %v708 = vpack.c.bf16 %v661, %v661
    %v709 = vpack.c.bf16 %v663, %v663
    %v710 = vpack.c.bf16 %v666, %v666
    %v711 = vpack.c.bf16 %v668, %v668
    %v712 = vpack.c.bf16 %v671, %v671
    %v713 = vpack.c.bf16 %v673, %v673
    %v714 = vpack.c.bf16 %v676, %v676
    %v715 = vpack.c.bf16 %v678, %v678
    %v716 = vld [vmem:[%s6] sm:$0xf]
    %v717 = vld [vmem:[%s6 + $0x4] sm:$0xf]
    %v718 = vld [vmem:[%s6 + $0x8] sm:$0xf]
    %v719 = vld [vmem:[%s6 + $0xc] sm:$0xf]
    %v720 = vld [vmem:[%s6 + $0x10] sm:$0xf]
    %v721 = vld [vmem:[%s6 + $0x14] sm:$0xf]
    %v722 = vld [vmem:[%s6 + $0x18] sm:$0xf]
    %v723 = vld [vmem:[%s6 + $0x1c] sm:$0xf]
    %v724 = vld [vmem:[%s6 + $0x20] sm:$0xf]
    %v725 = vld [vmem:[%s6 + $0x24] sm:$0xf]
    %v726 = vld [vmem:[%s6 + $0x28] sm:$0xf]
    %v727 = vld [vmem:[%s6 + $0x2c] sm:$0xf]
    %v728 = vld [vmem:[%s6 + $0x30] sm:$0xf]
    %v729 = vld [vmem:[%s6 + $0x34] sm:$0xf]
    %v730 = vld [vmem:[%s6 + $0x38] sm:$0xf]
    %v731 = vld [vmem:[%s6 + $0x3c] sm:$0xf]
    %v732 = vld [vmem:[%s6 + $0x40] sm:$0xf]
    %v733 = vld [vmem:[%s6 + $0x44] sm:$0xf]
    %v734 = vld [vmem:[%s6 + $0x48] sm:$0xf]
    %v735 = vld [vmem:[%s6 + $0x4c] sm:$0xf]
    %v736 = vld [vmem:[%s6 + $0x50] sm:$0xf]
    %v737 = vld [vmem:[%s6 + $0x54] sm:$0xf]
    %v738 = vld [vmem:[%s6 + $0x58] sm:$0xf]
    %v739 = vld [vmem:[%s6 + $0x5c] sm:$0xf]
    %v740 = vld [vmem:[%s6 + $0x60] sm:$0xf]
    %v741 = vld [vmem:[%s6 + $0x64] sm:$0xf]
    %v742 = vld [vmem:[%s6 + $0x68] sm:$0xf]
    %v743 = vld [vmem:[%s6 + $0x6c] sm:$0xf]
    %v744 = vld [vmem:[%s6 + $0x70] sm:$0xf]
    %v745 = vld [vmem:[%s6 + $0x74] sm:$0xf]
    %v746 = vld [vmem:[%s6 + $0x78] sm:$0xf]
    %v747 = vld [vmem:[%s6 + $0x7c] sm:$0xf]
    %v752 = vunpack.c.l.b16 %v684
    %v753 = vunpack.c.l.b16 %v685
    %v754 = vunpack.c.l.b16 %v686
    %v755 = vunpack.c.l.b16 %v687
    %v756 = vpack.c.b16 %v753, %v752
    %v757 = vpack.c.b16 %v755, %v754
    %v776 = vunpack.c.l.b16 %v732
    %v777 = vunpack.c.l.b16 %v733
    %v778 = vunpack.c.l.b16 %v734
    %v779 = vunpack.c.l.b16 %v735
    %v780 = vunpack.c.l.b16 %v736
    %v781 = vunpack.c.l.b16 %v737
    %v782 = vunpack.c.l.b16 %v738
    %v783 = vunpack.c.l.b16 %v739
    %v784 = vunpack.c.l.b16 %v740
    %v785 = vunpack.c.l.b16 %v741
    %v786 = vunpack.c.l.b16 %v742
    %v787 = vunpack.c.l.b16 %v743
    %v788 = vunpack.c.l.b16 %v744
    %v789 = vunpack.c.l.b16 %v745
    %v790 = vunpack.c.l.b16 %v746
    %v791 = vunpack.c.l.b16 %v747
    %v792 = vpack.c.b16 %v777, %v776
    %v793 = vpack.c.b16 %v779, %v778
    %v794 = vpack.c.b16 %v781, %v780
    %v795 = vpack.c.b16 %v783, %v782
    %v796 = vpack.c.b16 %v785, %v784
    %v797 = vpack.c.b16 %v787, %v786
    %v798 = vpack.c.b16 %v789, %v788
    %v799 = vpack.c.b16 %v791, %v790
    %808 = vmatpush.bf16.msra.mxu0 %v799
    %809 = vmatpush.bf16.msra.mxu0 %v798
    %810 = vmatpush.bf16.msra.mxu0 %v797
    %811 = vmatpush.bf16.msra.mxu0 %v796
    %812 = vmatpush.bf16.msra.mxu0 %v795
    %813 = vmatpush.bf16.msra.mxu0 %v794
    %814 = vmatpush.bf16.msra.mxu0 %v793
    %815 = vmatpush.bf16.msra.mxu0 %v792
    %816 = vmatmul.bf16.gmra.mxu0 %v756
    %v817 = vpop.f32.mrf.mxu0
    %v818 = vadd.f32 0.0, %v817
    %v819 = vpop.f32.mrf.mxu0
    %v820 = vadd.f32 0.0, %v819
    %821 = vmatmul.bf16.gmra.mxu0 %v757
    %v822 = vpop.f32.mrf.mxu0
    %v823 = vadd.f32 0.0, %v822
    %v824 = vpop.f32.mrf.mxu0
    %v825 = vadd.f32 0.0, %v824
    %826 = vdwg.mxu0
    %v831 = vunpack.c.l.b16 %v680
    %v832 = vunpack.c.l.b16 %v681
    %v833 = vunpack.c.l.b16 %v682
    %v834 = vunpack.c.l.b16 %v683
    %v835 = vpack.c.b16 %v832, %v831
    %v836 = vpack.c.b16 %v834, %v833
    %v855 = vunpack.c.l.b16 %v716
    %v856 = vunpack.c.l.b16 %v717
    %v857 = vunpack.c.l.b16 %v718
    %v858 = vunpack.c.l.b16 %v719
    %v859 = vunpack.c.l.b16 %v720
    %v860 = vunpack.c.l.b16 %v721
    %v861 = vunpack.c.l.b16 %v722
    %v862 = vunpack.c.l.b16 %v723
    %v863 = vunpack.c.l.b16 %v724
    %v864 = vunpack.c.l.b16 %v725
    %v865 = vunpack.c.l.b16 %v726
    %v866 = vunpack.c.l.b16 %v727
    %v867 = vunpack.c.l.b16 %v728
    %v868 = vunpack.c.l.b16 %v729
    %v869 = vunpack.c.l.b16 %v730
    %v870 = vunpack.c.l.b16 %v731
    %v871 = vpack.c.b16 %v856, %v855
    %v872 = vpack.c.b16 %v858, %v857
    %v873 = vpack.c.b16 %v860, %v859
    %v874 = vpack.c.b16 %v862, %v861
    %v875 = vpack.c.b16 %v864, %v863
    %v876 = vpack.c.b16 %v866, %v865
    %v877 = vpack.c.b16 %v868, %v867
    %v878 = vpack.c.b16 %v870, %v869
    %887 = vmatpush.bf16.msra.mxu0 %v878
    %888 = vmatpush.bf16.msra.mxu0 %v877
    %889 = vmatpush.bf16.msra.mxu0 %v876
    %890 = vmatpush.bf16.msra.mxu0 %v875
    %891 = vmatpush.bf16.msra.mxu0 %v874
    %892 = vmatpush.bf16.msra.mxu0 %v873
    %893 = vmatpush.bf16.msra.mxu0 %v872
    %894 = vmatpush.bf16.msra.mxu0 %v871
    %895 = vmatmul.bf16.gmra.mxu0 %v835
    %v896 = vpop.f32.mrf.mxu0
    %v897 = vadd.f32 %v818, %v896
    %v898 = vpop.f32.mrf.mxu0
    %v899 = vadd.f32 %v820, %v898
    %900 = vmatmul.bf16.gmra.mxu0 %v836
    %v901 = vpop.f32.mrf.mxu0
    %v902 = vadd.f32 %v823, %v901
    %v903 = vpop.f32.mrf.mxu0
    %v904 = vadd.f32 %v825, %v903
    %905 = vdwg.mxu0
    %v906 = vld [vmem:[%s6 + $0x80] sm:$0xf]
    %v907 = vld [vmem:[%s6 + $0x84] sm:$0xf]
    %v908 = vld [vmem:[%s6 + $0x88] sm:$0xf]
    %v909 = vld [vmem:[%s6 + $0x8c] sm:$0xf]
    %v910 = vld [vmem:[%s6 + $0x90] sm:$0xf]
    %v911 = vld [vmem:[%s6 + $0x94] sm:$0xf]
    %v912 = vld [vmem:[%s6 + $0x98] sm:$0xf]
    %v913 = vld [vmem:[%s6 + $0x9c] sm:$0xf]
    %v914 = vld [vmem:[%s6 + $0xa0] sm:$0xf]
    %v915 = vld [vmem:[%s6 + $0xa4] sm:$0xf]
    %v916 = vld [vmem:[%s6 + $0xa8] sm:$0xf]
    %v917 = vld [vmem:[%s6 + $0xac] sm:$0xf]
    %v918 = vld [vmem:[%s6 + $0xb0] sm:$0xf]
    %v919 = vld [vmem:[%s6 + $0xb4] sm:$0xf]
    %v920 = vld [vmem:[%s6 + $0xb8] sm:$0xf]
    %v921 = vld [vmem:[%s6 + $0xbc] sm:$0xf]
    %v926 = vunpack.c.l.b16 %v688
    %v927 = vunpack.c.l.b16 %v689
    %v928 = vunpack.c.l.b16 %v690
    %v929 = vunpack.c.l.b16 %v691
    %v930 = vpack.c.b16 %v927, %v926
    %v931 = vpack.c.b16 %v929, %v928
    %v950 = vunpack.c.l.b16 %v906
    %v951 = vunpack.c.l.b16 %v907
    %v952 = vunpack.c.l.b16 %v908
    %v953 = vunpack.c.l.b16 %v909
    %v954 = vunpack.c.l.b16 %v910
    %v955 = vunpack.c.l.b16 %v911
    %v956 = vunpack.c.l.b16 %v912
    %v957 = vunpack.c.l.b16 %v913
    %v958 = vunpack.c.l.b16 %v914
    %v959 = vunpack.c.l.b16 %v915
    %v960 = vunpack.c.l.b16 %v916
    %v961 = vunpack.c.l.b16 %v917
    %v962 = vunpack.c.l.b16 %v918
    %v963 = vunpack.c.l.b16 %v919
    %v964 = vunpack.c.l.b16 %v920
    %v965 = vunpack.c.l.b16 %v921
    %v966 = vpack.c.b16 %v951, %v950
    %v967 = vpack.c.b16 %v953, %v952
    %v968 = vpack.c.b16 %v955, %v954
    %v969 = vpack.c.b16 %v957, %v956
    %v970 = vpack.c.b16 %v959, %v958
    %v971 = vpack.c.b16 %v961, %v960
    %v972 = vpack.c.b16 %v963, %v962
    %v973 = vpack.c.b16 %v965, %v964
    %982 = vmatpush.bf16.msra.mxu0 %v973
    %983 = vmatpush.bf16.msra.mxu0 %v972
    %984 = vmatpush.bf16.msra.mxu0 %v971
    %985 = vmatpush.bf16.msra.mxu0 %v970
    %986 = vmatpush.bf16.msra.mxu0 %v969
    %987 = vmatpush.bf16.msra.mxu0 %v968
    %988 = vmatpush.bf16.msra.mxu0 %v967
    %989 = vmatpush.bf16.msra.mxu0 %v966
    %990 = vmatmul.bf16.gmra.mxu0 %v930
    %v991 = vpop.f32.mrf.mxu0
    %v992 = vadd.f32 0.0, %v991
    %v993 = vpop.f32.mrf.mxu0
    %v994 = vadd.f32 0.0, %v993
    %995 = vmatmul.bf16.gmra.mxu0 %v931
    %v996 = vpop.f32.mrf.mxu0
    %v997 = vadd.f32 0.0, %v996
    %v998 = vpop.f32.mrf.mxu0
    %v999 = vadd.f32 0.0, %v998
    %1000 = vdwg.mxu0
    %v1001 = vadd.f32 %v897, %v992
    %v1002 = vadd.f32 %v899, %v994
    %v1003 = vadd.f32 %v902, %v997
    %v1004 = vadd.f32 %v904, %v999
    %v1005 = vld [vmem:[%s6 + $0xc0] sm:$0xf]
    %v1006 = vld [vmem:[%s6 + $0xc4] sm:$0xf]
    %v1007 = vld [vmem:[%s6 + $0xc8] sm:$0xf]
    %v1008 = vld [vmem:[%s6 + $0xcc] sm:$0xf]
    %v1009 = vld [vmem:[%s6 + $0xd0] sm:$0xf]
    %v1010 = vld [vmem:[%s6 + $0xd4] sm:$0xf]
    %v1011 = vld [vmem:[%s6 + $0xd8] sm:$0xf]
    %v1012 = vld [vmem:[%s6 + $0xdc] sm:$0xf]
    %v1013 = vld [vmem:[%s6 + $0xe0] sm:$0xf]
    %v1014 = vld [vmem:[%s6 + $0xe4] sm:$0xf]
    %v1015 = vld [vmem:[%s6 + $0xe8] sm:$0xf]
    %v1016 = vld [vmem:[%s6 + $0xec] sm:$0xf]
    %v1017 = vld [vmem:[%s6 + $0xf0] sm:$0xf]
    %v1018 = vld [vmem:[%s6 + $0xf4] sm:$0xf]
    %v1019 = vld [vmem:[%s6 + $0xf8] sm:$0xf]
    %v1020 = vld [vmem:[%s6 + $0xfc] sm:$0xf]
    %v1025 = vunpack.c.l.b16 %v692
    %v1026 = vunpack.c.l.b16 %v693
    %v1027 = vunpack.c.l.b16 %v694
    %v1028 = vunpack.c.l.b16 %v695
    %v1029 = vpack.c.b16 %v1026, %v1025
    %v1030 = vpack.c.b16 %v1028, %v1027
    %v1049 = vunpack.c.l.b16 %v1005
    %v1050 = vunpack.c.l.b16 %v1006
    %v1051 = vunpack.c.l.b16 %v1007
    %v1052 = vunpack.c.l.b16 %v1008
    %v1053 = vunpack.c.l.b16 %v1009
    %v1054 = vunpack.c.l.b16 %v1010
    %v1055 = vunpack.c.l.b16 %v1011
    %v1056 = vunpack.c.l.b16 %v1012
    %v1057 = vunpack.c.l.b16 %v1013
    %v1058 = vunpack.c.l.b16 %v1014
    %v1059 = vunpack.c.l.b16 %v1015
    %v1060 = vunpack.c.l.b16 %v1016
    %v1061 = vunpack.c.l.b16 %v1017
    %v1062 = vunpack.c.l.b16 %v1018
    %v1063 = vunpack.c.l.b16 %v1019
    %v1064 = vunpack.c.l.b16 %v1020
    %v1065 = vpack.c.b16 %v1050, %v1049
    %v1066 = vpack.c.b16 %v1052, %v1051
    %v1067 = vpack.c.b16 %v1054, %v1053
    %v1068 = vpack.c.b16 %v1056, %v1055
    %v1069 = vpack.c.b16 %v1058, %v1057
    %v1070 = vpack.c.b16 %v1060, %v1059
    %v1071 = vpack.c.b16 %v1062, %v1061
    %v1072 = vpack.c.b16 %v1064, %v1063
    %1081 = vmatpush.bf16.msra.mxu0 %v1072
    %1082 = vmatpush.bf16.msra.mxu0 %v1071
    %1083 = vmatpush.bf16.msra.mxu0 %v1070
    %1084 = vmatpush.bf16.msra.mxu0 %v1069
    %1085 = vmatpush.bf16.msra.mxu0 %v1068
    %1086 = vmatpush.bf16.msra.mxu0 %v1067
    %1087 = vmatpush.bf16.msra.mxu0 %v1066
    %1088 = vmatpush.bf16.msra.mxu0 %v1065
    %1089 = vmatmul.bf16.gmra.mxu0 %v1029
    %v1090 = vpop.f32.mrf.mxu0
    %v1091 = vadd.f32 0.0, %v1090
    %v1092 = vpop.f32.mrf.mxu0
    %v1093 = vadd.f32 0.0, %v1092
    %1094 = vmatmul.bf16.gmra.mxu0 %v1030
    %v1095 = vpop.f32.mrf.mxu0
    %v1096 = vadd.f32 0.0, %v1095
    %v1097 = vpop.f32.mrf.mxu0
    %v1098 = vadd.f32 0.0, %v1097
    %1099 = vdwg.mxu0
    %v1100 = vadd.f32 %v1001, %v1091
    %v1101 = vadd.f32 %v1002, %v1093
    %v1102 = vadd.f32 %v1003, %v1096
    %v1103 = vadd.f32 %v1004, %v1098
    %v1104 = vld [vmem:[%s6 + $0x100] sm:$0xf]
    %v1105 = vld [vmem:[%s6 + $0x104] sm:$0xf]
    %v1106 = vld [vmem:[%s6 + $0x108] sm:$0xf]
    %v1107 = vld [vmem:[%s6 + $0x10c] sm:$0xf]
    %v1108 = vld [vmem:[%s6 + $0x110] sm:$0xf]
    %v1109 = vld [vmem:[%s6 + $0x114] sm:$0xf]
    %v1110 = vld [vmem:[%s6 + $0x118] sm:$0xf]
    %v1111 = vld [vmem:[%s6 + $0x11c] sm:$0xf]
    %v1112 = vld [vmem:[%s6 + $0x120] sm:$0xf]
    %v1113 = vld [vmem:[%s6 + $0x124] sm:$0xf]
    %v1114 = vld [vmem:[%s6 + $0x128] sm:$0xf]
    %v1115 = vld [vmem:[%s6 + $0x12c] sm:$0xf]
    %v1116 = vld [vmem:[%s6 + $0x130] sm:$0xf]
    %v1117 = vld [vmem:[%s6 + $0x134] sm:$0xf]
    %v1118 = vld [vmem:[%s6 + $0x138] sm:$0xf]
    %v1119 = vld [vmem:[%s6 + $0x13c] sm:$0xf]
    %v1124 = vunpack.c.l.b16 %v696
    %v1125 = vunpack.c.l.b16 %v697
    %v1126 = vunpack.c.l.b16 %v698
    %v1127 = vunpack.c.l.b16 %v699
    %v1128 = vpack.c.b16 %v1125, %v1124
    %v1129 = vpack.c.b16 %v1127, %v1126
    %v1148 = vunpack.c.l.b16 %v1104
    %v1149 = vunpack.c.l.b16 %v1105
    %v1150 = vunpack.c.l.b16 %v1106
    %v1151 = vunpack.c.l.b16 %v1107
    %v1152 = vunpack.c.l.b16 %v1108
    %v1153 = vunpack.c.l.b16 %v1109
    %v1154 = vunpack.c.l.b16 %v1110
    %v1155 = vunpack.c.l.b16 %v1111
    %v1156 = vunpack.c.l.b16 %v1112
    %v1157 = vunpack.c.l.b16 %v1113
    %v1158 = vunpack.c.l.b16 %v1114
    %v1159 = vunpack.c.l.b16 %v1115
    %v1160 = vunpack.c.l.b16 %v1116
    %v1161 = vunpack.c.l.b16 %v1117
    %v1162 = vunpack.c.l.b16 %v1118
    %v1163 = vunpack.c.l.b16 %v1119
    %v1164 = vpack.c.b16 %v1149, %v1148
    %v1165 = vpack.c.b16 %v1151, %v1150
    %v1166 = vpack.c.b16 %v1153, %v1152
    %v1167 = vpack.c.b16 %v1155, %v1154
    %v1168 = vpack.c.b16 %v1157, %v1156
    %v1169 = vpack.c.b16 %v1159, %v1158
    %v1170 = vpack.c.b16 %v1161, %v1160
    %v1171 = vpack.c.b16 %v1163, %v1162
    %1180 = vmatpush.bf16.msra.mxu0 %v1171
    %1181 = vmatpush.bf16.msra.mxu0 %v1170
    %1182 = vmatpush.bf16.msra.mxu0 %v1169
    %1183 = vmatpush.bf16.msra.mxu0 %v1168
    %1184 = vmatpush.bf16.msra.mxu0 %v1167
    %1185 = vmatpush.bf16.msra.mxu0 %v1166
    %1186 = vmatpush.bf16.msra.mxu0 %v1165
    %1187 = vmatpush.bf16.msra.mxu0 %v1164
    %1188 = vmatmul.bf16.gmra.mxu0 %v1128
    %v1189 = vpop.f32.mrf.mxu0
    %v1190 = vadd.f32 0.0, %v1189
    %v1191 = vpop.f32.mrf.mxu0
    %v1192 = vadd.f32 0.0, %v1191
    %1193 = vmatmul.bf16.gmra.mxu0 %v1129
    %v1194 = vpop.f32.mrf.mxu0
    %v1195 = vadd.f32 0.0, %v1194
    %v1196 = vpop.f32.mrf.mxu0
    %v1197 = vadd.f32 0.0, %v1196
    %1198 = vdwg.mxu0
    %v1199 = vadd.f32 %v1100, %v1190
    %v1200 = vadd.f32 %v1101, %v1192
    %v1201 = vadd.f32 %v1102, %v1195
    %v1202 = vadd.f32 %v1103, %v1197
    %v1203 = vld [vmem:[%s6 + $0x140] sm:$0xf]
    %v1204 = vld [vmem:[%s6 + $0x144] sm:$0xf]
    %v1205 = vld [vmem:[%s6 + $0x148] sm:$0xf]
    %v1206 = vld [vmem:[%s6 + $0x14c] sm:$0xf]
    %v1207 = vld [vmem:[%s6 + $0x150] sm:$0xf]
    %v1208 = vld [vmem:[%s6 + $0x154] sm:$0xf]
    %v1209 = vld [vmem:[%s6 + $0x158] sm:$0xf]
    %v1210 = vld [vmem:[%s6 + $0x15c] sm:$0xf]
    %v1211 = vld [vmem:[%s6 + $0x160] sm:$0xf]
    %v1212 = vld [vmem:[%s6 + $0x164] sm:$0xf]
    %v1213 = vld [vmem:[%s6 + $0x168] sm:$0xf]
    %v1214 = vld [vmem:[%s6 + $0x16c] sm:$0xf]
    %v1215 = vld [vmem:[%s6 + $0x170] sm:$0xf]
    %v1216 = vld [vmem:[%s6 + $0x174] sm:$0xf]
    %v1217 = vld [vmem:[%s6 + $0x178] sm:$0xf]
    %v1218 = vld [vmem:[%s6 + $0x17c] sm:$0xf]
    %v1223 = vunpack.c.l.b16 %v700
    %v1224 = vunpack.c.l.b16 %v701
    %v1225 = vunpack.c.l.b16 %v702
    %v1226 = vunpack.c.l.b16 %v703
    %v1227 = vpack.c.b16 %v1224, %v1223
    %v1228 = vpack.c.b16 %v1226, %v1225
    %v1247 = vunpack.c.l.b16 %v1203
    %v1248 = vunpack.c.l.b16 %v1204
    %v1249 = vunpack.c.l.b16 %v1205
    %v1250 = vunpack.c.l.b16 %v1206
    %v1251 = vunpack.c.l.b16 %v1207
    %v1252 = vunpack.c.l.b16 %v1208
    %v1253 = vunpack.c.l.b16 %v1209
    %v1254 = vunpack.c.l.b16 %v1210
    %v1255 = vunpack.c.l.b16 %v1211
    %v1256 = vunpack.c.l.b16 %v1212
    %v1257 = vunpack.c.l.b16 %v1213
    %v1258 = vunpack.c.l.b16 %v1214
    %v1259 = vunpack.c.l.b16 %v1215
    %v1260 = vunpack.c.l.b16 %v1216
    %v1261 = vunpack.c.l.b16 %v1217
    %v1262 = vunpack.c.l.b16 %v1218
    %v1263 = vpack.c.b16 %v1248, %v1247
    %v1264 = vpack.c.b16 %v1250, %v1249
    %v1265 = vpack.c.b16 %v1252, %v1251
    %v1266 = vpack.c.b16 %v1254, %v1253
    %v1267 = vpack.c.b16 %v1256, %v1255
    %v1268 = vpack.c.b16 %v1258, %v1257
    %v1269 = vpack.c.b16 %v1260, %v1259
    %v1270 = vpack.c.b16 %v1262, %v1261
    %1279 = vmatpush.bf16.msra.mxu0 %v1270
    %1280 = vmatpush.bf16.msra.mxu0 %v1269
    %1281 = vmatpush.bf16.msra.mxu0 %v1268
    %1282 = vmatpush.bf16.msra.mxu0 %v1267
    %1283 = vmatpush.bf16.msra.mxu0 %v1266
    %1284 = vmatpush.bf16.msra.mxu0 %v1265
    %1285 = vmatpush.bf16.msra.mxu0 %v1264
    %1286 = vmatpush.bf16.msra.mxu0 %v1263
    %1287 = vmatmul.bf16.gmra.mxu0 %v1227
    %v1288 = vpop.f32.mrf.mxu0
    %v1289 = vadd.f32 0.0, %v1288
    %v1290 = vpop.f32.mrf.mxu0
    %v1291 = vadd.f32 0.0, %v1290
    %1292 = vmatmul.bf16.gmra.mxu0 %v1228
    %v1293 = vpop.f32.mrf.mxu0
    %v1294 = vadd.f32 0.0, %v1293
    %v1295 = vpop.f32.mrf.mxu0
    %v1296 = vadd.f32 0.0, %v1295
    %1297 = vdwg.mxu0
    %v1298 = vadd.f32 %v1199, %v1289
    %v1299 = vadd.f32 %v1200, %v1291
    %v1300 = vadd.f32 %v1201, %v1294
    %v1301 = vadd.f32 %v1202, %v1296
    %v1302 = vld [vmem:[%s6 + $0x180] sm:$0xf]
    %v1303 = vld [vmem:[%s6 + $0x184] sm:$0xf]
    %v1304 = vld [vmem:[%s6 + $0x188] sm:$0xf]
    %v1305 = vld [vmem:[%s6 + $0x18c] sm:$0xf]
    %v1306 = vld [vmem:[%s6 + $0x190] sm:$0xf]
    %v1307 = vld [vmem:[%s6 + $0x194] sm:$0xf]
    %v1308 = vld [vmem:[%s6 + $0x198] sm:$0xf]
    %v1309 = vld [vmem:[%s6 + $0x19c] sm:$0xf]
    %v1310 = vld [vmem:[%s6 + $0x1a0] sm:$0xf]
    %v1311 = vld [vmem:[%s6 + $0x1a4] sm:$0xf]
    %v1312 = vld [vmem:[%s6 + $0x1a8] sm:$0xf]
    %v1313 = vld [vmem:[%s6 + $0x1ac] sm:$0xf]
    %v1314 = vld [vmem:[%s6 + $0x1b0] sm:$0xf]
    %v1315 = vld [vmem:[%s6 + $0x1b4] sm:$0xf]
    %v1316 = vld [vmem:[%s6 + $0x1b8] sm:$0xf]
    %v1317 = vld [vmem:[%s6 + $0x1bc] sm:$0xf]
    %v1322 = vunpack.c.l.b16 %v704
    %v1323 = vunpack.c.l.b16 %v705
    %v1324 = vunpack.c.l.b16 %v706
    %v1325 = vunpack.c.l.b16 %v707
    %v1326 = vpack.c.b16 %v1323, %v1322
    %v1327 = vpack.c.b16 %v1325, %v1324
    %v1346 = vunpack.c.l.b16 %v1302
    %v1347 = vunpack.c.l.b16 %v1303
    %v1348 = vunpack.c.l.b16 %v1304
    %v1349 = vunpack.c.l.b16 %v1305
    %v1350 = vunpack.c.l.b16 %v1306
    %v1351 = vunpack.c.l.b16 %v1307
    %v1352 = vunpack.c.l.b16 %v1308
    %v1353 = vunpack.c.l.b16 %v1309
    %v1354 = vunpack.c.l.b16 %v1310
    %v1355 = vunpack.c.l.b16 %v1311
    %v1356 = vunpack.c.l.b16 %v1312
    %v1357 = vunpack.c.l.b16 %v1313
    %v1358 = vunpack.c.l.b16 %v1314
    %v1359 = vunpack.c.l.b16 %v1315
    %v1360 = vunpack.c.l.b16 %v1316
    %v1361 = vunpack.c.l.b16 %v1317
    %v1362 = vpack.c.b16 %v1347, %v1346
    %v1363 = vpack.c.b16 %v1349, %v1348
    %v1364 = vpack.c.b16 %v1351, %v1350
    %v1365 = vpack.c.b16 %v1353, %v1352
    %v1366 = vpack.c.b16 %v1355, %v1354
    %v1367 = vpack.c.b16 %v1357, %v1356
    %v1368 = vpack.c.b16 %v1359, %v1358
    %v1369 = vpack.c.b16 %v1361, %v1360
    %1378 = vmatpush.bf16.msra.mxu0 %v1369
    %1379 = vmatpush.bf16.msra.mxu0 %v1368
    %1380 = vmatpush.bf16.msra.mxu0 %v1367
    %1381 = vmatpush.bf16.msra.mxu0 %v1366
    %1382 = vmatpush.bf16.msra.mxu0 %v1365
    %1383 = vmatpush.bf16.msra.mxu0 %v1364
    %1384 = vmatpush.bf16.msra.mxu0 %v1363
    %1385 = vmatpush.bf16.msra.mxu0 %v1362
    %1386 = vmatmul.bf16.gmra.mxu0 %v1326
    %v1387 = vpop.f32.mrf.mxu0
    %v1388 = vadd.f32 0.0, %v1387
    %v1389 = vpop.f32.mrf.mxu0
    %v1390 = vadd.f32 0.0, %v1389
    %1391 = vmatmul.bf16.gmra.mxu0 %v1327
    %v1392 = vpop.f32.mrf.mxu0
    %v1393 = vadd.f32 0.0, %v1392
    %v1394 = vpop.f32.mrf.mxu0
    %v1395 = vadd.f32 0.0, %v1394
    %1396 = vdwg.mxu0
    %v1397 = vadd.f32 %v1298, %v1388
    %v1398 = vadd.f32 %v1299, %v1390
    %v1399 = vadd.f32 %v1300, %v1393
    %v1400 = vadd.f32 %v1301, %v1395
    %v1401 = vld [vmem:[%s6 + $0x1c0] sm:$0xf]
    %v1402 = vld [vmem:[%s6 + $0x1c4] sm:$0xf]
    %v1403 = vld [vmem:[%s6 + $0x1c8] sm:$0xf]
    %v1404 = vld [vmem:[%s6 + $0x1cc] sm:$0xf]
    %v1405 = vld [vmem:[%s6 + $0x1d0] sm:$0xf]
    %v1406 = vld [vmem:[%s6 + $0x1d4] sm:$0xf]
    %v1407 = vld [vmem:[%s6 + $0x1d8] sm:$0xf]
    %v1408 = vld [vmem:[%s6 + $0x1dc] sm:$0xf]
    %v1409 = vld [vmem:[%s6 + $0x1e0] sm:$0xf]
    %v1410 = vld [vmem:[%s6 + $0x1e4] sm:$0xf]
    %v1411 = vld [vmem:[%s6 + $0x1e8] sm:$0xf]
    %v1412 = vld [vmem:[%s6 + $0x1ec] sm:$0xf]
    %v1413 = vld [vmem:[%s6 + $0x1f0] sm:$0xf]
    %v1414 = vld [vmem:[%s6 + $0x1f4] sm:$0xf]
    %v1415 = vld [vmem:[%s6 + $0x1f8] sm:$0xf]
    %v1416 = vld [vmem:[%s6 + $0x1fc] sm:$0xf]
    %v1421 = vunpack.c.l.b16 %v708
    %v1422 = vunpack.c.l.b16 %v709
    %v1423 = vunpack.c.l.b16 %v710
    %v1424 = vunpack.c.l.b16 %v711
    %v1425 = vpack.c.b16 %v1422, %v1421
    %v1426 = vpack.c.b16 %v1424, %v1423
    %v1445 = vunpack.c.l.b16 %v1401
    %v1446 = vunpack.c.l.b16 %v1402
    %v1447 = vunpack.c.l.b16 %v1403
    %v1448 = vunpack.c.l.b16 %v1404
    %v1449 = vunpack.c.l.b16 %v1405
    %v1450 = vunpack.c.l.b16 %v1406
    %v1451 = vunpack.c.l.b16 %v1407
    %v1452 = vunpack.c.l.b16 %v1408
    %v1453 = vunpack.c.l.b16 %v1409
    %v1454 = vunpack.c.l.b16 %v1410
    %v1455 = vunpack.c.l.b16 %v1411
    %v1456 = vunpack.c.l.b16 %v1412
    %v1457 = vunpack.c.l.b16 %v1413
    %v1458 = vunpack.c.l.b16 %v1414
    %v1459 = vunpack.c.l.b16 %v1415
    %v1460 = vunpack.c.l.b16 %v1416
    %v1461 = vpack.c.b16 %v1446, %v1445
    %v1462 = vpack.c.b16 %v1448, %v1447
    %v1463 = vpack.c.b16 %v1450, %v1449
    %v1464 = vpack.c.b16 %v1452, %v1451
    %v1465 = vpack.c.b16 %v1454, %v1453
    %v1466 = vpack.c.b16 %v1456, %v1455
    %v1467 = vpack.c.b16 %v1458, %v1457
    %v1468 = vpack.c.b16 %v1460, %v1459
    %1477 = vmatpush.bf16.msra.mxu0 %v1468
    %1478 = vmatpush.bf16.msra.mxu0 %v1467
    %1479 = vmatpush.bf16.msra.mxu0 %v1466
    %1480 = vmatpush.bf16.msra.mxu0 %v1465
    %1481 = vmatpush.bf16.msra.mxu0 %v1464
    %1482 = vmatpush.bf16.msra.mxu0 %v1463
    %1483 = vmatpush.bf16.msra.mxu0 %v1462
    %1484 = vmatpush.bf16.msra.mxu0 %v1461
    %1485 = vmatmul.bf16.gmra.mxu0 %v1425
    %v1486 = vpop.f32.mrf.mxu0
    %v1487 = vadd.f32 0.0, %v1486
    %v1488 = vpop.f32.mrf.mxu0
    %v1489 = vadd.f32 0.0, %v1488
    %1490 = vmatmul.bf16.gmra.mxu0 %v1426
    %v1491 = vpop.f32.mrf.mxu0
    %v1492 = vadd.f32 0.0, %v1491
    %v1493 = vpop.f32.mrf.mxu0
    %v1494 = vadd.f32 0.0, %v1493
    %1495 = vdwg.mxu0
    %v1496 = vadd.f32 %v1397, %v1487
    %v1497 = vadd.f32 %v1398, %v1489
    %v1498 = vadd.f32 %v1399, %v1492
    %v1499 = vadd.f32 %v1400, %v1494
    %v1500 = vld [vmem:[%s6 + $0x200] sm:$0xf]
    %v1501 = vld [vmem:[%s6 + $0x204] sm:$0xf]
    %v1502 = vld [vmem:[%s6 + $0x208] sm:$0xf]
    %v1503 = vld [vmem:[%s6 + $0x20c] sm:$0xf]
    %v1504 = vld [vmem:[%s6 + $0x210] sm:$0xf]
    %v1505 = vld [vmem:[%s6 + $0x214] sm:$0xf]
    %v1506 = vld [vmem:[%s6 + $0x218] sm:$0xf]
    %v1507 = vld [vmem:[%s6 + $0x21c] sm:$0xf]
    %v1508 = vld [vmem:[%s6 + $0x220] sm:$0xf]
    %v1509 = vld [vmem:[%s6 + $0x224] sm:$0xf]
    %v1510 = vld [vmem:[%s6 + $0x228] sm:$0xf]
    %v1511 = vld [vmem:[%s6 + $0x22c] sm:$0xf]
    %v1512 = vld [vmem:[%s6 + $0x230] sm:$0xf]
    %v1513 = vld [vmem:[%s6 + $0x234] sm:$0xf]
    %v1514 = vld [vmem:[%s6 + $0x238] sm:$0xf]
    %v1515 = vld [vmem:[%s6 + $0x23c] sm:$0xf]
    %v1520 = vunpack.c.l.b16 %v712
    %v1521 = vunpack.c.l.b16 %v713
    %v1522 = vunpack.c.l.b16 %v714
    %v1523 = vunpack.c.l.b16 %v715
    %v1524 = vpack.c.b16 %v1521, %v1520
    %v1525 = vpack.c.b16 %v1523, %v1522
    %v1544 = vunpack.c.l.b16 %v1500
    %v1545 = vunpack.c.l.b16 %v1501
    %v1546 = vunpack.c.l.b16 %v1502
    %v1547 = vunpack.c.l.b16 %v1503
    %v1548 = vunpack.c.l.b16 %v1504
    %v1549 = vunpack.c.l.b16 %v1505
    %v1550 = vunpack.c.l.b16 %v1506
    %v1551 = vunpack.c.l.b16 %v1507
    %v1552 = vunpack.c.l.b16 %v1508
    %v1553 = vunpack.c.l.b16 %v1509
    %v1554 = vunpack.c.l.b16 %v1510
    %v1555 = vunpack.c.l.b16 %v1511
    %v1556 = vunpack.c.l.b16 %v1512
    %v1557 = vunpack.c.l.b16 %v1513
    %v1558 = vunpack.c.l.b16 %v1514
    %v1559 = vunpack.c.l.b16 %v1515
    %v1560 = vpack.c.b16 %v1545, %v1544
    %v1561 = vpack.c.b16 %v1547, %v1546
    %v1562 = vpack.c.b16 %v1549, %v1548
    %v1563 = vpack.c.b16 %v1551, %v1550
    %v1564 = vpack.c.b16 %v1553, %v1552
    %v1565 = vpack.c.b16 %v1555, %v1554
    %v1566 = vpack.c.b16 %v1557, %v1556
    %v1567 = vpack.c.b16 %v1559, %v1558
    %1576 = vmatpush.bf16.msra.mxu0 %v1567
    %1577 = vmatpush.bf16.msra.mxu0 %v1566
    %1578 = vmatpush.bf16.msra.mxu0 %v1565
    %1579 = vmatpush.bf16.msra.mxu0 %v1564
    %1580 = vmatpush.bf16.msra.mxu0 %v1563
    %1581 = vmatpush.bf16.msra.mxu0 %v1562
    %1582 = vmatpush.bf16.msra.mxu0 %v1561
    %1583 = vmatpush.bf16.msra.mxu0 %v1560
    %1584 = vmatmul.bf16.gmra.mxu0 %v1524
    %v1585 = vpop.f32.mrf.mxu0
    %v1586 = vadd.f32 0.0, %v1585
    %v1587 = vpop.f32.mrf.mxu0
    %v1588 = vadd.f32 0.0, %v1587
    %1589 = vmatmul.bf16.gmra.mxu0 %v1525
    %v1590 = vpop.f32.mrf.mxu0
    %v1591 = vadd.f32 0.0, %v1590
    %v1592 = vpop.f32.mrf.mxu0
    %v1593 = vadd.f32 0.0, %v1592
    %1594 = vdwg.mxu0
    %v1595 = vadd.f32 %v1496, %v1586
    %v1596 = vadd.f32 %v1497, %v1588
    %v1597 = vadd.f32 %v1498, %v1591
    %v1598 = vadd.f32 %v1499, %v1593
    %v1599 = vld [vmem:[%s7] sm:$0x1]
    %v1600 = vld [vmem:[%s8] sm:$0x1]
    %v1601 = vld [vmem:[%s9] sm:$0x1]
    %v1603 = vperm.slane %v1599, 0
    %v1605 = vadd.f32 %v1595, %v1603
    %v1606 = vadd.f32 %v1596, %v1603
    %v1607 = vadd.f32 %v1597, %v1603
    %v1608 = vadd.f32 %v1598, %v1603
    %v1609 = vmax.f32 %v1605, 0.0
    %v1610 = vmax.f32 %v1606, 0.0
    %v1611 = vmax.f32 %v1607, 0.0
    %v1612 = vmax.f32 %v1608, 0.0
    %v1613 = vadd.f32 %v1609, %v1610
    %v1614 = vadd.f32 %v1613, %v1611
    %v1615 = vadd.f32 %v1614, %v1612
    %v1616 = vrot.slane %v1615, 4
    %v1617 = vadd.f32 %v1615, %v1616
    %v1618 = vrot.slane %v1617, 2
    %v1619 = vadd.f32 %v1617, %v1618
    %v1620 = vrot.slane %v1619, 1
    %v1621 = vadd.f32 %v1619, %v1620
    %v1622 = vrcp.pop 32.0
    %v1623 = vmul.f32 32.0, %v1622
    %v1624 = vsub.f32 1.0, %v1623
    %v1625 = vmul.f32 %v1622, %v1624
    %v1626 = vadd.f32 %v1622, %v1625
    %vm1627 = vweird.f32 %v1622
    %v1628 = vsel %vm1627, %v1622, %v1626
    %v1629 = vmul.f32 %v1621, %v1628
    %v1630 = vsub.f32 %v1609, %v1629
    %v1631 = vsub.f32 %v1610, %v1629
    %v1632 = vsub.f32 %v1611, %v1629
    %v1633 = vsub.f32 %v1612, %v1629
    %v1634 = vmul.f32 %v1630, %v1630
    %v1635 = vmul.f32 %v1631, %v1631
    %v1636 = vmul.f32 %v1632, %v1632
    %v1637 = vmul.f32 %v1633, %v1633
    %v1638 = vadd.f32 %v1634, %v1635
    %v1639 = vadd.f32 %v1638, %v1636
    %v1640 = vadd.f32 %v1639, %v1637
    %v1641 = vrot.slane %v1640, 4
    %v1642 = vadd.f32 %v1640, %v1641
    %v1643 = vrot.slane %v1642, 2
    %v1644 = vadd.f32 %v1642, %v1643
    %v1645 = vrot.slane %v1644, 1
    %v1646 = vadd.f32 %v1644, %v1645
    %v1647 = vmul.f32 %v1646, %v1628
    %v1648 = vadd.f32 %v1647, 1e-05
    %v1649 = vrsqrt.pop %v1648
    %v1650 = vmul.f32 %v1649, %v1648
    %v1651 = vmul.f32 %v1650, %v1649
    %v1652 = vmul.f32 0.5, %v1651
    %v1653 = vsub.f32 1.5, %v1652
    %v1654 = vmul.f32 %v1649, %v1653
    %vm1655 = vweird.f32 %v1648
    %vm1656 = vweird.f32 %v1649
    %vm1657 = vmor %vm1655, %vm1656
    %v1658 = vsel %vm1657, %v1649, %v1654
    %v1659 = vmul.f32 %v1630, %v1658
    %v1660 = vmul.f32 %v1631, %v1658
    %v1661 = vmul.f32 %v1632, %v1658
    %v1662 = vmul.f32 %v1633, %v1658
    %v1664 = vperm.slane %v1600, 0
    %v1666 = vmul.f32 %v1659, %v1664
    %v1667 = vmul.f32 %v1660, %v1664
    %v1668 = vmul.f32 %v1661, %v1664
    %v1669 = vmul.f32 %v1662, %v1664
    %v1671 = vperm.slane %v1601, 0
    %v1673 = vadd.f32 %v1666, %v1671
    %v1674 = vadd.f32 %v1667, %v1671
    %v1675 = vadd.f32 %v1668, %v1671
    %v1676 = vadd.f32 %v1669, %v1671
    %v1677 = vpack.c.bf16 %v1674, %v1673
    %v1678 = vpack.c.bf16 %v1676, %v1675
    %v1679 = vld [vmem:[%s10] sm:$0xf]
    %v1680 = vld [vmem:[%s10 + $0x4] sm:$0xf]
    %v1681 = vld [vmem:[%s10 + $0x8] sm:$0xf]
    %v1682 = vld [vmem:[%s10 + $0xc] sm:$0xf]
    %v1683 = vld [vmem:[%s10 + $0x10] sm:$0xf]
    %v1684 = vld [vmem:[%s10 + $0x14] sm:$0xf]
    %v1685 = vld [vmem:[%s10 + $0x18] sm:$0xf]
    %v1686 = vld [vmem:[%s10 + $0x1c] sm:$0xf]
    %v1687 = vld [vmem:[%s10 + $0x20] sm:$0xf]
    %v1697 = vunpack.c.l.b16 %v1679
    %v1698 = vunpack.c.l.b16 %v1680
    %v1699 = vunpack.c.l.b16 %v1681
    %v1700 = vunpack.c.l.b16 %v1682
    %v1701 = vunpack.c.l.b16 %v1683
    %v1702 = vunpack.c.l.b16 %v1684
    %v1703 = vunpack.c.l.b16 %v1685
    %v1704 = vunpack.c.l.b16 %v1686
    %v1705 = vunpack.c.l.b16 %v1687
    %v1706 = vpack.c.b16 %v1698, %v1697
    %v1707 = vpack.c.b16 %v1700, %v1699
    %v1708 = vpack.c.b16 %v1702, %v1701
    %v1709 = vpack.c.b16 %v1704, %v1703
    %v1710 = vpack.c.b16 %v1705, %v1705
    %vm1711 = vcmask 261120
    %v1713 = vsel %vm1711, %v1706, 0
    %v1716 = vsel %vm1711, %v1707, 0
    %v1719 = vsel %vm1711, %v1708, 0
    %v1722 = vsel %vm1711, %v1709, 0
    %v1725 = vsel %vm1711, %v1710, 0
    %1727 = vmatpush.bf16.msra.mxu0 0
    %1728 = vmatpush.bf16.msra.mxu0 0
    %1729 = vmatpush.bf16.msra.mxu0 0
    %1730 = vmatpush.bf16.msra.mxu0 0
    %1731 = vmatpush.bf16.msra.mxu0 0
    %1732 = vmatpush.bf16.msra.mxu0 0
    %1733 = vmatpush.bf16.msra.mxu0 %v1678
    %1734 = vmatpush.bf16.msra.mxu0 %v1677
    %1735 = vmatmul.bf16.gmra.mxu0 %v1713
    %v1736 = vpop.f32.mrf.mxu0
    %v1737 = vadd.f32 0.0, %v1736
    %v1738 = vpop.f32.mrf.mxu0
    %v1739 = vadd.f32 0.0, %v1738
    %1740 = vmatmul.bf16.gmra.mxu0 %v1716
    %v1741 = vpop.f32.mrf.mxu0
    %v1742 = vadd.f32 0.0, %v1741
    %v1743 = vpop.f32.mrf.mxu0
    %v1744 = vadd.f32 0.0, %v1743
    %1745 = vmatmul.bf16.gmra.mxu0 %v1719
    %v1746 = vpop.f32.mrf.mxu0
    %v1747 = vadd.f32 0.0, %v1746
    %v1748 = vpop.f32.mrf.mxu0
    %v1749 = vadd.f32 0.0, %v1748
    %1750 = vmatmul.bf16.gmra.mxu0 %v1722
    %v1751 = vpop.f32.mrf.mxu0
    %v1752 = vadd.f32 0.0, %v1751
    %v1753 = vpop.f32.mrf.mxu0
    %v1754 = vadd.f32 0.0, %v1753
    %1755 = vmatmul.bf16.gmra.mxu0 %v1725
    %v1756 = vpop.f32.mrf.mxu0
    %v1757 = vadd.f32 0.0, %v1756
    %v1758 = vpop.f32.mrf.mxu0
    %1759 = vdwg.mxu0
    %v1760 = vpack.c.bf16 %v1737, %v1737
    %v1761 = vpack.c.bf16 %v1739, %v1739
    %v1762 = vpack.c.bf16 %v1742, %v1742
    %v1763 = vpack.c.bf16 %v1744, %v1744
    %v1764 = vpack.c.bf16 %v1747, %v1747
    %v1765 = vpack.c.bf16 %v1749, %v1749
    %v1766 = vpack.c.bf16 %v1752, %v1752
    %v1767 = vpack.c.bf16 %v1754, %v1754
    %v1768 = vpack.c.bf16 %v1757, %v1757
    %v1769 = vld [vmem:[%s11] sm:$0xf]
    %v1770 = vld [vmem:[%s11 + $0x4] sm:$0xf]
    %v1771 = vld [vmem:[%s11 + $0x8] sm:$0xf]
    %v1772 = vld [vmem:[%s11 + $0xc] sm:$0xf]
    %v1773 = vld [vmem:[%s11 + $0x10] sm:$0xf]
    %v1774 = vld [vmem:[%s11 + $0x14] sm:$0xf]
    %v1775 = vld [vmem:[%s11 + $0x18] sm:$0xf]
    %v1776 = vld [vmem:[%s11 + $0x1c] sm:$0xf]
    %v1777 = vld [vmem:[%s11 + $0x20] sm:$0xf]
    %v1778 = vld [vmem:[%s11 + $0x24] sm:$0xf]
    %v1779 = vld [vmem:[%s11 + $0x28] sm:$0xf]
    %v1780 = vld [vmem:[%s11 + $0x2c] sm:$0xf]
    %v1781 = vld [vmem:[%s11 + $0x30] sm:$0xf]
    %v1782 = vld [vmem:[%s11 + $0x34] sm:$0xf]
    %v1783 = vld [vmem:[%s11 + $0x38] sm:$0xf]
    %v1784 = vld [vmem:[%s11 + $0x3c] sm:$0xf]
    %v1785 = vld [vmem:[%s11 + $0x40] sm:$0xf]
    %v1786 = vld [vmem:[%s11 + $0x44] sm:$0xf]
    %v1787 = vld [vmem:[%s11 + $0x48] sm:$0xf]
    %v1788 = vld [vmem:[%s11 + $0x4c] sm:$0xf]
    %v1789 = vld [vmem:[%s11 + $0x50] sm:$0xf]
    %v1790 = vld [vmem:[%s11 + $0x54] sm:$0xf]
    %v1791 = vld [vmem:[%s11 + $0x58] sm:$0xf]
    %v1792 = vld [vmem:[%s11 + $0x5c] sm:$0xf]
    %v1793 = vld [vmem:[%s11 + $0x60] sm:$0xf]
    %v1794 = vld [vmem:[%s11 + $0x64] sm:$0xf]
    %v1795 = vld [vmem:[%s11 + $0x68] sm:$0xf]
    %v1796 = vld [vmem:[%s11 + $0x6c] sm:$0xf]
    %v1797 = vld [vmem:[%s11 + $0x70] sm:$0xf]
    %v1798 = vld [vmem:[%s11 + $0x74] sm:$0xf]
    %v1799 = vld [vmem:[%s11 + $0x78] sm:$0xf]
    %v1800 = vld [vmem:[%s11 + $0x7c] sm:$0xf]
    %v1817 = vunpack.c.l.b16 %v1785
    %v1818 = vunpack.c.l.b16 %v1786
    %v1819 = vunpack.c.l.b16 %v1787
    %v1820 = vunpack.c.l.b16 %v1788
    %v1821 = vunpack.c.l.b16 %v1789
    %v1822 = vunpack.c.l.b16 %v1790
    %v1823 = vunpack.c.l.b16 %v1791
    %v1824 = vunpack.c.l.b16 %v1792
    %v1825 = vunpack.c.l.b16 %v1793
    %v1826 = vunpack.c.l.b16 %v1794
    %v1827 = vunpack.c.l.b16 %v1795
    %v1828 = vunpack.c.l.b16 %v1796
    %v1829 = vunpack.c.l.b16 %v1797
    %v1830 = vunpack.c.l.b16 %v1798
    %v1831 = vunpack.c.l.b16 %v1799
    %v1832 = vunpack.c.l.b16 %v1800
    %v1833 = vpack.c.b16 %v1818, %v1817
    %v1834 = vpack.c.b16 %v1820, %v1819
    %v1835 = vpack.c.b16 %v1822, %v1821
    %v1836 = vpack.c.b16 %v1824, %v1823
    %v1837 = vpack.c.b16 %v1826, %v1825
    %v1838 = vpack.c.b16 %v1828, %v1827
    %v1839 = vpack.c.b16 %v1830, %v1829
    %v1840 = vpack.c.b16 %v1832, %v1831
    %1849 = vmatpush.bf16.msra.mxu0 %v1840
    %1850 = vmatpush.bf16.msra.mxu0 %v1839
    %1851 = vmatpush.bf16.msra.mxu0 %v1838
    %1852 = vmatpush.bf16.msra.mxu0 %v1837
    %1853 = vmatpush.bf16.msra.mxu0 %v1836
    %1854 = vmatpush.bf16.msra.mxu0 %v1835
    %1855 = vmatpush.bf16.msra.mxu0 %v1834
    %1856 = vmatpush.bf16.msra.mxu0 %v1833
    %1857 = vmatmul.bf16.gmra.mxu0 %v1761
    %v1858 = vpop.f32.mrf.mxu0
    %v1859 = vadd.f32 0.0, %v1858
    %v1860 = vpop.f32.mrf.mxu0
    %1861 = vdwg.mxu0
    %v1878 = vunpack.c.l.b16 %v1769
    %v1879 = vunpack.c.l.b16 %v1770
    %v1880 = vunpack.c.l.b16 %v1771
    %v1881 = vunpack.c.l.b16 %v1772
    %v1882 = vunpack.c.l.b16 %v1773
    %v1883 = vunpack.c.l.b16 %v1774
    %v1884 = vunpack.c.l.b16 %v1775
    %v1885 = vunpack.c.l.b16 %v1776
    %v1886 = vunpack.c.l.b16 %v1777
    %v1887 = vunpack.c.l.b16 %v1778
    %v1888 = vunpack.c.l.b16 %v1779
    %v1889 = vunpack.c.l.b16 %v1780
    %v1890 = vunpack.c.l.b16 %v1781
    %v1891 = vunpack.c.l.b16 %v1782
    %v1892 = vunpack.c.l.b16 %v1783
    %v1893 = vunpack.c.l.b16 %v1784
    %v1894 = vpack.c.b16 %v1879, %v1878
    %v1895 = vpack.c.b16 %v1881, %v1880
    %v1896 = vpack.c.b16 %v1883, %v1882
    %v1897 = vpack.c.b16 %v1885, %v1884
    %v1898 = vpack.c.b16 %v1887, %v1886
    %v1899 = vpack.c.b16 %v1889, %v1888
    %v1900 = vpack.c.b16 %v1891, %v1890
    %v1901 = vpack.c.b16 %v1893, %v1892
    %1910 = vmatpush.bf16.msra.mxu0 %v1901
    %1911 = vmatpush.bf16.msra.mxu0 %v1900
    %1912 = vmatpush.bf16.msra.mxu0 %v1899
    %1913 = vmatpush.bf16.msra.mxu0 %v1898
    %1914 = vmatpush.bf16.msra.mxu0 %v1897
    %1915 = vmatpush.bf16.msra.mxu0 %v1896
    %1916 = vmatpush.bf16.msra.mxu0 %v1895
    %1917 = vmatpush.bf16.msra.mxu0 %v1894
    %1918 = vmatmul.bf16.gmra.mxu0 %v1760
    %v1919 = vpop.f32.mrf.mxu0
    %v1920 = vadd.f32 %v1859, %v1919
    %v1921 = vpop.f32.mrf.mxu0
    %1922 = vdwg.mxu0
    %v1923 = vld [vmem:[%s11 + $0x80] sm:$0xf]
    %v1924 = vld [vmem:[%s11 + $0x84] sm:$0xf]
    %v1925 = vld [vmem:[%s11 + $0x88] sm:$0xf]
    %v1926 = vld [vmem:[%s11 + $0x8c] sm:$0xf]
    %v1927 = vld [vmem:[%s11 + $0x90] sm:$0xf]
    %v1928 = vld [vmem:[%s11 + $0x94] sm:$0xf]
    %v1929 = vld [vmem:[%s11 + $0x98] sm:$0xf]
    %v1930 = vld [vmem:[%s11 + $0x9c] sm:$0xf]
    %v1931 = vld [vmem:[%s11 + $0xa0] sm:$0xf]
    %v1932 = vld [vmem:[%s11 + $0xa4] sm:$0xf]
    %v1933 = vld [vmem:[%s11 + $0xa8] sm:$0xf]
    %v1934 = vld [vmem:[%s11 + $0xac] sm:$0xf]
    %v1935 = vld [vmem:[%s11 + $0xb0] sm:$0xf]
    %v1936 = vld [vmem:[%s11 + $0xb4] sm:$0xf]
    %v1937 = vld [vmem:[%s11 + $0xb8] sm:$0xf]
    %v1938 = vld [vmem:[%s11 + $0xbc] sm:$0xf]
    %v1955 = vunpack.c.l.b16 %v1923
    %v1956 = vunpack.c.l.b16 %v1924
    %v1957 = vunpack.c.l.b16 %v1925
    %v1958 = vunpack.c.l.b16 %v1926
    %v1959 = vunpack.c.l.b16 %v1927
    %v1960 = vunpack.c.l.b16 %v1928
    %v1961 = vunpack.c.l.b16 %v1929
    %v1962 = vunpack.c.l.b16 %v1930
    %v1963 = vunpack.c.l.b16 %v1931
    %v1964 = vunpack.c.l.b16 %v1932
    %v1965 = vunpack.c.l.b16 %v1933
    %v1966 = vunpack.c.l.b16 %v1934
    %v1967 = vunpack.c.l.b16 %v1935
    %v1968 = vunpack.c.l.b16 %v1936
    %v1969 = vunpack.c.l.b16 %v1937
    %v1970 = vunpack.c.l.b16 %v1938
    %v1971 = vpack.c.b16 %v1956, %v1955
    %v1972 = vpack.c.b16 %v1958, %v1957
    %v1973 = vpack.c.b16 %v1960, %v1959
    %v1974 = vpack.c.b16 %v1962, %v1961
    %v1975 = vpack.c.b16 %v1964, %v1963
    %v1976 = vpack.c.b16 %v1966, %v1965
    %v1977 = vpack.c.b16 %v1968, %v1967
    %v1978 = vpack.c.b16 %v1970, %v1969
    %1987 = vmatpush.bf16.msra.mxu0 %v1978
    %1988 = vmatpush.bf16.msra.mxu0 %v1977
    %1989 = vmatpush.bf16.msra.mxu0 %v1976
    %1990 = vmatpush.bf16.msra.mxu0 %v1975
    %1991 = vmatpush.bf16.msra.mxu0 %v1974
    %1992 = vmatpush.bf16.msra.mxu0 %v1973
    %1993 = vmatpush.bf16.msra.mxu0 %v1972
    %1994 = vmatpush.bf16.msra.mxu0 %v1971
    %1995 = vmatmul.bf16.gmra.mxu0 %v1762
    %v1996 = vpop.f32.mrf.mxu0
    %v1997 = vadd.f32 0.0, %v1996
    %v1998 = vpop.f32.mrf.mxu0
    %1999 = vdwg.mxu0
    %v2000 = vadd.f32 %v1920, %v1997
    %v2001 = vld [vmem:[%s11 + $0xc0] sm:$0xf]
    %v2002 = vld [vmem:[%s11 + $0xc4] sm:$0xf]
    %v2003 = vld [vmem:[%s11 + $0xc8] sm:$0xf]
    %v2004 = vld [vmem:[%s11 + $0xcc] sm:$0xf]
    %v2005 = vld [vmem:[%s11 + $0xd0] sm:$0xf]
    %v2006 = vld [vmem:[%s11 + $0xd4] sm:$0xf]
    %v2007 = vld [vmem:[%s11 + $0xd8] sm:$0xf]
    %v2008 = vld [vmem:[%s11 + $0xdc] sm:$0xf]
    %v2009 = vld [vmem:[%s11 + $0xe0] sm:$0xf]
    %v2010 = vld [vmem:[%s11 + $0xe4] sm:$0xf]
    %v2011 = vld [vmem:[%s11 + $0xe8] sm:$0xf]
    %v2012 = vld [vmem:[%s11 + $0xec] sm:$0xf]
    %v2013 = vld [vmem:[%s11 + $0xf0] sm:$0xf]
    %v2014 = vld [vmem:[%s11 + $0xf4] sm:$0xf]
    %v2015 = vld [vmem:[%s11 + $0xf8] sm:$0xf]
    %v2016 = vld [vmem:[%s11 + $0xfc] sm:$0xf]
    %v2033 = vunpack.c.l.b16 %v2001
    %v2034 = vunpack.c.l.b16 %v2002
    %v2035 = vunpack.c.l.b16 %v2003
    %v2036 = vunpack.c.l.b16 %v2004
    %v2037 = vunpack.c.l.b16 %v2005
    %v2038 = vunpack.c.l.b16 %v2006
    %v2039 = vunpack.c.l.b16 %v2007
    %v2040 = vunpack.c.l.b16 %v2008
    %v2041 = vunpack.c.l.b16 %v2009
    %v2042 = vunpack.c.l.b16 %v2010
    %v2043 = vunpack.c.l.b16 %v2011
    %v2044 = vunpack.c.l.b16 %v2012
    %v2045 = vunpack.c.l.b16 %v2013
    %v2046 = vunpack.c.l.b16 %v2014
    %v2047 = vunpack.c.l.b16 %v2015
    %v2048 = vunpack.c.l.b16 %v2016
    %v2049 = vpack.c.b16 %v2034, %v2033
    %v2050 = vpack.c.b16 %v2036, %v2035
    %v2051 = vpack.c.b16 %v2038, %v2037
    %v2052 = vpack.c.b16 %v2040, %v2039
    %v2053 = vpack.c.b16 %v2042, %v2041
    %v2054 = vpack.c.b16 %v2044, %v2043
    %v2055 = vpack.c.b16 %v2046, %v2045
    %v2056 = vpack.c.b16 %v2048, %v2047
    %2065 = vmatpush.bf16.msra.mxu0 %v2056
    %2066 = vmatpush.bf16.msra.mxu0 %v2055
    %2067 = vmatpush.bf16.msra.mxu0 %v2054
    %2068 = vmatpush.bf16.msra.mxu0 %v2053
    %2069 = vmatpush.bf16.msra.mxu0 %v2052
    %2070 = vmatpush.bf16.msra.mxu0 %v2051
    %2071 = vmatpush.bf16.msra.mxu0 %v2050
    %2072 = vmatpush.bf16.msra.mxu0 %v2049
    %2073 = vmatmul.bf16.gmra.mxu0 %v1763
    %v2074 = vpop.f32.mrf.mxu0
    %v2075 = vadd.f32 0.0, %v2074
    %v2076 = vpop.f32.mrf.mxu0
    %2077 = vdwg.mxu0
    %v2078 = vadd.f32 %v2000, %v2075
    %v2079 = vld [vmem:[%s11 + $0x100] sm:$0xf]
    %v2080 = vld [vmem:[%s11 + $0x104] sm:$0xf]
    %v2081 = vld [vmem:[%s11 + $0x108] sm:$0xf]
    %v2082 = vld [vmem:[%s11 + $0x10c] sm:$0xf]
    %v2083 = vld [vmem:[%s11 + $0x110] sm:$0xf]
    %v2084 = vld [vmem:[%s11 + $0x114] sm:$0xf]
    %v2085 = vld [vmem:[%s11 + $0x118] sm:$0xf]
    %v2086 = vld [vmem:[%s11 + $0x11c] sm:$0xf]
    %v2087 = vld [vmem:[%s11 + $0x120] sm:$0xf]
    %v2088 = vld [vmem:[%s11 + $0x124] sm:$0xf]
    %v2089 = vld [vmem:[%s11 + $0x128] sm:$0xf]
    %v2090 = vld [vmem:[%s11 + $0x12c] sm:$0xf]
    %v2091 = vld [vmem:[%s11 + $0x130] sm:$0xf]
    %v2092 = vld [vmem:[%s11 + $0x134] sm:$0xf]
    %v2093 = vld [vmem:[%s11 + $0x138] sm:$0xf]
    %v2094 = vld [vmem:[%s11 + $0x13c] sm:$0xf]
    %v2111 = vunpack.c.l.b16 %v2079
    %v2112 = vunpack.c.l.b16 %v2080
    %v2113 = vunpack.c.l.b16 %v2081
    %v2114 = vunpack.c.l.b16 %v2082
    %v2115 = vunpack.c.l.b16 %v2083
    %v2116 = vunpack.c.l.b16 %v2084
    %v2117 = vunpack.c.l.b16 %v2085
    %v2118 = vunpack.c.l.b16 %v2086
    %v2119 = vunpack.c.l.b16 %v2087
    %v2120 = vunpack.c.l.b16 %v2088
    %v2121 = vunpack.c.l.b16 %v2089
    %v2122 = vunpack.c.l.b16 %v2090
    %v2123 = vunpack.c.l.b16 %v2091
    %v2124 = vunpack.c.l.b16 %v2092
    %v2125 = vunpack.c.l.b16 %v2093
    %v2126 = vunpack.c.l.b16 %v2094
    %v2127 = vpack.c.b16 %v2112, %v2111
    %v2128 = vpack.c.b16 %v2114, %v2113
    %v2129 = vpack.c.b16 %v2116, %v2115
    %v2130 = vpack.c.b16 %v2118, %v2117
    %v2131 = vpack.c.b16 %v2120, %v2119
    %v2132 = vpack.c.b16 %v2122, %v2121
    %v2133 = vpack.c.b16 %v2124, %v2123
    %v2134 = vpack.c.b16 %v2126, %v2125
    %2143 = vmatpush.bf16.msra.mxu0 %v2134
    %2144 = vmatpush.bf16.msra.mxu0 %v2133
    %2145 = vmatpush.bf16.msra.mxu0 %v2132
    %2146 = vmatpush.bf16.msra.mxu0 %v2131
    %2147 = vmatpush.bf16.msra.mxu0 %v2130
    %2148 = vmatpush.bf16.msra.mxu0 %v2129
    %2149 = vmatpush.bf16.msra.mxu0 %v2128
    %2150 = vmatpush.bf16.msra.mxu0 %v2127
    %2151 = vmatmul.bf16.gmra.mxu0 %v1764
    %v2152 = vpop.f32.mrf.mxu0
    %v2153 = vadd.f32 0.0, %v2152
    %v2154 = vpop.f32.mrf.mxu0
    %2155 = vdwg.mxu0
    %v2156 = vadd.f32 %v2078, %v2153
    %v2157 = vld [vmem:[%s11 + $0x140] sm:$0xf]
    %v2158 = vld [vmem:[%s11 + $0x144] sm:$0xf]
    %v2159 = vld [vmem:[%s11 + $0x148] sm:$0xf]
    %v2160 = vld [vmem:[%s11 + $0x14c] sm:$0xf]
    %v2161 = vld [vmem:[%s11 + $0x150] sm:$0xf]
    %v2162 = vld [vmem:[%s11 + $0x154] sm:$0xf]
    %v2163 = vld [vmem:[%s11 + $0x158] sm:$0xf]
    %v2164 = vld [vmem:[%s11 + $0x15c] sm:$0xf]
    %v2165 = vld [vmem:[%s11 + $0x160] sm:$0xf]
    %v2166 = vld [vmem:[%s11 + $0x164] sm:$0xf]
    %v2167 = vld [vmem:[%s11 + $0x168] sm:$0xf]
    %v2168 = vld [vmem:[%s11 + $0x16c] sm:$0xf]
    %v2169 = vld [vmem:[%s11 + $0x170] sm:$0xf]
    %v2170 = vld [vmem:[%s11 + $0x174] sm:$0xf]
    %v2171 = vld [vmem:[%s11 + $0x178] sm:$0xf]
    %v2172 = vld [vmem:[%s11 + $0x17c] sm:$0xf]
    %v2189 = vunpack.c.l.b16 %v2157
    %v2190 = vunpack.c.l.b16 %v2158
    %v2191 = vunpack.c.l.b16 %v2159
    %v2192 = vunpack.c.l.b16 %v2160
    %v2193 = vunpack.c.l.b16 %v2161
    %v2194 = vunpack.c.l.b16 %v2162
    %v2195 = vunpack.c.l.b16 %v2163
    %v2196 = vunpack.c.l.b16 %v2164
    %v2197 = vunpack.c.l.b16 %v2165
    %v2198 = vunpack.c.l.b16 %v2166
    %v2199 = vunpack.c.l.b16 %v2167
    %v2200 = vunpack.c.l.b16 %v2168
    %v2201 = vunpack.c.l.b16 %v2169
    %v2202 = vunpack.c.l.b16 %v2170
    %v2203 = vunpack.c.l.b16 %v2171
    %v2204 = vunpack.c.l.b16 %v2172
    %v2205 = vpack.c.b16 %v2190, %v2189
    %v2206 = vpack.c.b16 %v2192, %v2191
    %v2207 = vpack.c.b16 %v2194, %v2193
    %v2208 = vpack.c.b16 %v2196, %v2195
    %v2209 = vpack.c.b16 %v2198, %v2197
    %v2210 = vpack.c.b16 %v2200, %v2199
    %v2211 = vpack.c.b16 %v2202, %v2201
    %v2212 = vpack.c.b16 %v2204, %v2203
    %2221 = vmatpush.bf16.msra.mxu0 %v2212
    %2222 = vmatpush.bf16.msra.mxu0 %v2211
    %2223 = vmatpush.bf16.msra.mxu0 %v2210
    %2224 = vmatpush.bf16.msra.mxu0 %v2209
    %2225 = vmatpush.bf16.msra.mxu0 %v2208
    %2226 = vmatpush.bf16.msra.mxu0 %v2207
    %2227 = vmatpush.bf16.msra.mxu0 %v2206
    %2228 = vmatpush.bf16.msra.mxu0 %v2205
    %2229 = vmatmul.bf16.gmra.mxu0 %v1765
    %v2230 = vpop.f32.mrf.mxu0
    %v2231 = vadd.f32 0.0, %v2230
    %v2232 = vpop.f32.mrf.mxu0
    %2233 = vdwg.mxu0
    %v2234 = vadd.f32 %v2156, %v2231
    %v2235 = vld [vmem:[%s11 + $0x180] sm:$0xf]
    %v2236 = vld [vmem:[%s11 + $0x184] sm:$0xf]
    %v2237 = vld [vmem:[%s11 + $0x188] sm:$0xf]
    %v2238 = vld [vmem:[%s11 + $0x18c] sm:$0xf]
    %v2239 = vld [vmem:[%s11 + $0x190] sm:$0xf]
    %v2240 = vld [vmem:[%s11 + $0x194] sm:$0xf]
    %v2241 = vld [vmem:[%s11 + $0x198] sm:$0xf]
    %v2242 = vld [vmem:[%s11 + $0x19c] sm:$0xf]
    %v2243 = vld [vmem:[%s11 + $0x1a0] sm:$0xf]
    %v2244 = vld [vmem:[%s11 + $0x1a4] sm:$0xf]
    %v2245 = vld [vmem:[%s11 + $0x1a8] sm:$0xf]
    %v2246 = vld [vmem:[%s11 + $0x1ac] sm:$0xf]
    %v2247 = vld [vmem:[%s11 + $0x1b0] sm:$0xf]
    %v2248 = vld [vmem:[%s11 + $0x1b4] sm:$0xf]
    %v2249 = vld [vmem:[%s11 + $0x1b8] sm:$0xf]
    %v2250 = vld [vmem:[%s11 + $0x1bc] sm:$0xf]
    %v2267 = vunpack.c.l.b16 %v2235
    %v2268 = vunpack.c.l.b16 %v2236
    %v2269 = vunpack.c.l.b16 %v2237
    %v2270 = vunpack.c.l.b16 %v2238
    %v2271 = vunpack.c.l.b16 %v2239
    %v2272 = vunpack.c.l.b16 %v2240
    %v2273 = vunpack.c.l.b16 %v2241
    %v2274 = vunpack.c.l.b16 %v2242
    %v2275 = vunpack.c.l.b16 %v2243
    %v2276 = vunpack.c.l.b16 %v2244
    %v2277 = vunpack.c.l.b16 %v2245
    %v2278 = vunpack.c.l.b16 %v2246
    %v2279 = vunpack.c.l.b16 %v2247
    %v2280 = vunpack.c.l.b16 %v2248
    %v2281 = vunpack.c.l.b16 %v2249
    %v2282 = vunpack.c.l.b16 %v2250
    %v2283 = vpack.c.b16 %v2268, %v2267
    %v2284 = vpack.c.b16 %v2270, %v2269
    %v2285 = vpack.c.b16 %v2272, %v2271
    %v2286 = vpack.c.b16 %v2274, %v2273
    %v2287 = vpack.c.b16 %v2276, %v2275
    %v2288 = vpack.c.b16 %v2278, %v2277
    %v2289 = vpack.c.b16 %v2280, %v2279
    %v2290 = vpack.c.b16 %v2282, %v2281
    %2299 = vmatpush.bf16.msra.mxu0 %v2290
    %2300 = vmatpush.bf16.msra.mxu0 %v2289
    %2301 = vmatpush.bf16.msra.mxu0 %v2288
    %2302 = vmatpush.bf16.msra.mxu0 %v2287
    %2303 = vmatpush.bf16.msra.mxu0 %v2286
    %2304 = vmatpush.bf16.msra.mxu0 %v2285
    %2305 = vmatpush.bf16.msra.mxu0 %v2284
    %2306 = vmatpush.bf16.msra.mxu0 %v2283
    %2307 = vmatmul.bf16.gmra.mxu0 %v1766
    %v2308 = vpop.f32.mrf.mxu0
    %v2309 = vadd.f32 0.0, %v2308
    %v2310 = vpop.f32.mrf.mxu0
    %2311 = vdwg.mxu0
    %v2312 = vadd.f32 %v2234, %v2309
    %v2313 = vld [vmem:[%s11 + $0x1c0] sm:$0xf]
    %v2314 = vld [vmem:[%s11 + $0x1c4] sm:$0xf]
    %v2315 = vld [vmem:[%s11 + $0x1c8] sm:$0xf]
    %v2316 = vld [vmem:[%s11 + $0x1cc] sm:$0xf]
    %v2317 = vld [vmem:[%s11 + $0x1d0] sm:$0xf]
    %v2318 = vld [vmem:[%s11 + $0x1d4] sm:$0xf]
    %v2319 = vld [vmem:[%s11 + $0x1d8] sm:$0xf]
    %v2320 = vld [vmem:[%s11 + $0x1dc] sm:$0xf]
    %v2321 = vld [vmem:[%s11 + $0x1e0] sm:$0xf]
    %v2322 = vld [vmem:[%s11 + $0x1e4] sm:$0xf]
    %v2323 = vld [vmem:[%s11 + $0x1e8] sm:$0xf]
    %v2324 = vld [vmem:[%s11 + $0x1ec] sm:$0xf]
    %v2325 = vld [vmem:[%s11 + $0x1f0] sm:$0xf]
    %v2326 = vld [vmem:[%s11 + $0x1f4] sm:$0xf]
    %v2327 = vld [vmem:[%s11 + $0x1f8] sm:$0xf]
    %v2328 = vld [vmem:[%s11 + $0x1fc] sm:$0xf]
    %v2345 = vunpack.c.l.b16 %v2313
    %v2346 = vunpack.c.l.b16 %v2314
    %v2347 = vunpack.c.l.b16 %v2315
    %v2348 = vunpack.c.l.b16 %v2316
    %v2349 = vunpack.c.l.b16 %v2317
    %v2350 = vunpack.c.l.b16 %v2318
    %v2351 = vunpack.c.l.b16 %v2319
    %v2352 = vunpack.c.l.b16 %v2320
    %v2353 = vunpack.c.l.b16 %v2321
    %v2354 = vunpack.c.l.b16 %v2322
    %v2355 = vunpack.c.l.b16 %v2323
    %v2356 = vunpack.c.l.b16 %v2324
    %v2357 = vunpack.c.l.b16 %v2325
    %v2358 = vunpack.c.l.b16 %v2326
    %v2359 = vunpack.c.l.b16 %v2327
    %v2360 = vunpack.c.l.b16 %v2328
    %v2361 = vpack.c.b16 %v2346, %v2345
    %v2362 = vpack.c.b16 %v2348, %v2347
    %v2363 = vpack.c.b16 %v2350, %v2349
    %v2364 = vpack.c.b16 %v2352, %v2351
    %v2365 = vpack.c.b16 %v2354, %v2353
    %v2366 = vpack.c.b16 %v2356, %v2355
    %v2367 = vpack.c.b16 %v2358, %v2357
    %v2368 = vpack.c.b16 %v2360, %v2359
    %2377 = vmatpush.bf16.msra.mxu0 %v2368
    %2378 = vmatpush.bf16.msra.mxu0 %v2367
    %2379 = vmatpush.bf16.msra.mxu0 %v2366
    %2380 = vmatpush.bf16.msra.mxu0 %v2365
    %2381 = vmatpush.bf16.msra.mxu0 %v2364
    %2382 = vmatpush.bf16.msra.mxu0 %v2363
    %2383 = vmatpush.bf16.msra.mxu0 %v2362
    %2384 = vmatpush.bf16.msra.mxu0 %v2361
    %2385 = vmatmul.bf16.gmra.mxu0 %v1767
    %v2386 = vpop.f32.mrf.mxu0
    %v2387 = vadd.f32 0.0, %v2386
    %v2388 = vpop.f32.mrf.mxu0
    %2389 = vdwg.mxu0
    %v2390 = vadd.f32 %v2312, %v2387
    %v2391 = vld [vmem:[%s11 + $0x200] sm:$0xf]
    %v2392 = vld [vmem:[%s11 + $0x204] sm:$0xf]
    %v2393 = vld [vmem:[%s11 + $0x208] sm:$0xf]
    %v2394 = vld [vmem:[%s11 + $0x20c] sm:$0xf]
    %v2395 = vld [vmem:[%s11 + $0x210] sm:$0xf]
    %v2396 = vld [vmem:[%s11 + $0x214] sm:$0xf]
    %v2397 = vld [vmem:[%s11 + $0x218] sm:$0xf]
    %v2398 = vld [vmem:[%s11 + $0x21c] sm:$0xf]
    %v2399 = vld [vmem:[%s11 + $0x220] sm:$0xf]
    %v2400 = vld [vmem:[%s11 + $0x224] sm:$0xf]
    %v2401 = vld [vmem:[%s11 + $0x228] sm:$0xf]
    %v2402 = vld [vmem:[%s11 + $0x22c] sm:$0xf]
    %v2403 = vld [vmem:[%s11 + $0x230] sm:$0xf]
    %v2404 = vld [vmem:[%s11 + $0x234] sm:$0xf]
    %v2405 = vld [vmem:[%s11 + $0x238] sm:$0xf]
    %v2406 = vld [vmem:[%s11 + $0x23c] sm:$0xf]
    %v2423 = vunpack.c.l.b16 %v2391
    %v2424 = vunpack.c.l.b16 %v2392
    %v2425 = vunpack.c.l.b16 %v2393
    %v2426 = vunpack.c.l.b16 %v2394
    %v2427 = vunpack.c.l.b16 %v2395
    %v2428 = vunpack.c.l.b16 %v2396
    %v2429 = vunpack.c.l.b16 %v2397
    %v2430 = vunpack.c.l.b16 %v2398
    %v2431 = vunpack.c.l.b16 %v2399
    %v2432 = vunpack.c.l.b16 %v2400
    %v2433 = vunpack.c.l.b16 %v2401
    %v2434 = vunpack.c.l.b16 %v2402
    %v2435 = vunpack.c.l.b16 %v2403
    %v2436 = vunpack.c.l.b16 %v2404
    %v2437 = vunpack.c.l.b16 %v2405
    %v2438 = vunpack.c.l.b16 %v2406
    %v2439 = vpack.c.b16 %v2424, %v2423
    %v2440 = vpack.c.b16 %v2426, %v2425
    %v2441 = vpack.c.b16 %v2428, %v2427
    %v2442 = vpack.c.b16 %v2430, %v2429
    %v2443 = vpack.c.b16 %v2432, %v2431
    %v2444 = vpack.c.b16 %v2434, %v2433
    %v2445 = vpack.c.b16 %v2436, %v2435
    %v2446 = vpack.c.b16 %v2438, %v2437
    %2455 = vmatpush.bf16.msra.mxu0 %v2446
    %2456 = vmatpush.bf16.msra.mxu0 %v2445
    %2457 = vmatpush.bf16.msra.mxu0 %v2444
    %2458 = vmatpush.bf16.msra.mxu0 %v2443
    %2459 = vmatpush.bf16.msra.mxu0 %v2442
    %2460 = vmatpush.bf16.msra.mxu0 %v2441
    %2461 = vmatpush.bf16.msra.mxu0 %v2440
    %2462 = vmatpush.bf16.msra.mxu0 %v2439
    %2463 = vmatmul.bf16.gmra.mxu0 %v1768
    %v2464 = vpop.f32.mrf.mxu0
    %v2465 = vadd.f32 0.0, %v2464
    %v2466 = vpop.f32.mrf.mxu0
    %2467 = vdwg.mxu0
    %v2468 = vadd.f32 %v2390, %v2465
    %v2469 = vld [vmem:[%s12] sm:$0x1]
    %v2470 = vld [vmem:[%s13] sm:$0x1]
    %v2471 = vld [vmem:[%s14] sm:$0x1]
    %v2473 = vperm.slane %v2469, 0
    %v2475 = vadd.f32 %v2468, %v2473
    %v2476 = vmax.f32 %v2475, 0.0
    %v2477 = vrot.slane %v2476, 4
    %v2478 = vadd.f32 %v2476, %v2477
    %v2479 = vrot.slane %v2478, 2
    %v2480 = vadd.f32 %v2478, %v2479
    %v2481 = vrot.slane %v2480, 1
    %v2482 = vadd.f32 %v2480, %v2481
    %v2483 = vrcp.pop 8.0
    %v2484 = vmul.f32 8.0, %v2483
    %v2485 = vsub.f32 1.0, %v2484
    %v2486 = vmul.f32 %v2483, %v2485
    %v2487 = vadd.f32 %v2483, %v2486
    %vm2488 = vweird.f32 %v2483
    %v2489 = vsel %vm2488, %v2483, %v2487
    %v2490 = vmul.f32 %v2482, %v2489
    %v2491 = vsub.f32 %v2476, %v2490
    %v2492 = vmul.f32 %v2491, %v2491
    %v2493 = vrot.slane %v2492, 4
    %v2494 = vadd.f32 %v2492, %v2493
    %v2495 = vrot.slane %v2494, 2
    %v2496 = vadd.f32 %v2494, %v2495
    %v2497 = vrot.slane %v2496, 1
    %v2498 = vadd.f32 %v2496, %v2497
    %v2499 = vmul.f32 %v2498, %v2489
    %v2500 = vadd.f32 %v2499, 1e-05
    %v2501 = vrsqrt.pop %v2500
    %v2502 = vmul.f32 %v2501, %v2500
    %v2503 = vmul.f32 %v2502, %v2501
    %v2504 = vmul.f32 0.5, %v2503
    %v2505 = vsub.f32 1.5, %v2504
    %v2506 = vmul.f32 %v2501, %v2505
    %vm2507 = vweird.f32 %v2500
    %vm2508 = vweird.f32 %v2501
    %vm2509 = vmor %vm2507, %vm2508
    %v2510 = vsel %vm2509, %v2501, %v2506
    %v2511 = vmul.f32 %v2491, %v2510
    %v2513 = vperm.slane %v2470, 0
    %v2515 = vmul.f32 %v2511, %v2513
    %v2517 = vperm.slane %v2471, 0
    %v2519 = vadd.f32 %v2515, %v2517
    %v2520 = vpack.c.bf16 %v2519, %v2519
    %v2521 = vld [vmem:[%s15] sm:$0xf]
    %v2522 = vld [vmem:[%s15 + $0x4] sm:$0xf]
    %v2523 = vld [vmem:[%s15 + $0x8] sm:$0xf]
    %v2524 = vld [vmem:[%s15 + $0xc] sm:$0xf]
    %v2525 = vld [vmem:[%s15 + $0x10] sm:$0xf]
    %v2526 = vld [vmem:[%s15 + $0x14] sm:$0xf]
    %v2527 = vld [vmem:[%s15 + $0x18] sm:$0xf]
    %v2528 = vld [vmem:[%s15 + $0x1c] sm:$0xf]
    %v2529 = vld [vmem:[%s15 + $0x20] sm:$0xf]
    %v2539 = vunpack.c.l.b16 %v2521
    %v2540 = vunpack.c.l.b16 %v2522
    %v2541 = vunpack.c.l.b16 %v2523
    %v2542 = vunpack.c.l.b16 %v2524
    %v2543 = vunpack.c.l.b16 %v2525
    %v2544 = vunpack.c.l.b16 %v2526
    %v2545 = vunpack.c.l.b16 %v2527
    %v2546 = vunpack.c.l.b16 %v2528
    %v2547 = vunpack.c.l.b16 %v2529
    %v2548 = vpack.c.b16 %v2540, %v2539
    %v2549 = vpack.c.b16 %v2542, %v2541
    %v2550 = vpack.c.b16 %v2544, %v2543
    %v2551 = vpack.c.b16 %v2546, %v2545
    %v2552 = vpack.c.b16 %v2547, %v2547
    %vm2553 = vcmask 64512
    %v2555 = vsel %vm2553, %v2548, 0
    %v2558 = vsel %vm2553, %v2549, 0
    %v2561 = vsel %vm2553, %v2550, 0
    %v2564 = vsel %vm2553, %v2551, 0
    %v2567 = vsel %vm2553, %v2552, 0
    %vm2569 = vcmask 1043456
    %v2571 = vsel %vm2569, %v2520, 0
    %2573 = vmatpush.bf16.msra.mxu0 0
    %2574 = vmatpush.bf16.msra.mxu0 0
    %2575 = vmatpush.bf16.msra.mxu0 0
    %2576 = vmatpush.bf16.msra.mxu0 0
    %2577 = vmatpush.bf16.msra.mxu0 0
    %2578 = vmatpush.bf16.msra.mxu0 0
    %2579 = vmatpush.bf16.msra.mxu0 0
    %2580 = vmatpush.bf16.msra.mxu0 %v2571
    %2581 = vmatmul.bf16.gmra.mxu0 %v2555
    %v2582 = vpop.f32.mrf.mxu0
    %v2583 = vadd.f32 0.0, %v2582
    %v2584 = vpop.f32.mrf.mxu0
    %v2585 = vadd.f32 0.0, %v2584
    %2586 = vmatmul.bf16.gmra.mxu0 %v2558
    %v2587 = vpop.f32.mrf.mxu0
    %v2588 = vadd.f32 0.0, %v2587
    %v2589 = vpop.f32.mrf.mxu0
    %v2590 = vadd.f32 0.0, %v2589
    %2591 = vmatmul.bf16.gmra.mxu0 %v2561
    %v2592 = vpop.f32.mrf.mxu0
    %v2593 = vadd.f32 0.0, %v2592
    %v2594 = vpop.f32.mrf.mxu0
    %v2595 = vadd.f32 0.0, %v2594
    %2596 = vmatmul.bf16.gmra.mxu0 %v2564
    %v2597 = vpop.f32.mrf.mxu0
    %v2598 = vadd.f32 0.0, %v2597
    %v2599 = vpop.f32.mrf.mxu0
    %v2600 = vadd.f32 0.0, %v2599
    %2601 = vmatmul.bf16.gmra.mxu0 %v2567
    %v2602 = vpop.f32.mrf.mxu0
    %v2603 = vadd.f32 0.0, %v2602
    %v2604 = vpop.f32.mrf.mxu0
    %2605 = vdwg.mxu0
    %v2606 = vpack.c.bf16 %v2583, %v2583
    %v2607 = vpack.c.bf16 %v2585, %v2585
    %v2608 = vpack.c.bf16 %v2588, %v2588
    %v2609 = vpack.c.bf16 %v2590, %v2590
    %v2610 = vpack.c.bf16 %v2593, %v2593
    %v2611 = vpack.c.bf16 %v2595, %v2595
    %v2612 = vpack.c.bf16 %v2598, %v2598
    %v2613 = vpack.c.bf16 %v2600, %v2600
    %v2614 = vpack.c.bf16 %v2603, %v2603
    %v2615 = vld [vmem:[%s16] sm:$0xf]
    %v2616 = vld [vmem:[%s16 + $0x4] sm:$0xf]
    %v2617 = vld [vmem:[%s16 + $0x8] sm:$0xf]
    %v2618 = vld [vmem:[%s16 + $0xc] sm:$0xf]
    %v2619 = vld [vmem:[%s16 + $0x10] sm:$0xf]
    %v2620 = vld [vmem:[%s16 + $0x14] sm:$0xf]
    %v2621 = vld [vmem:[%s16 + $0x18] sm:$0xf]
    %v2622 = vld [vmem:[%s16 + $0x1c] sm:$0xf]
    %v2623 = vld [vmem:[%s16 + $0x20] sm:$0xf]
    %v2624 = vld [vmem:[%s16 + $0x24] sm:$0xf]
    %v2625 = vld [vmem:[%s16 + $0x28] sm:$0xf]
    %v2626 = vld [vmem:[%s16 + $0x2c] sm:$0xf]
    %v2627 = vld [vmem:[%s16 + $0x30] sm:$0xf]
    %v2628 = vld [vmem:[%s16 + $0x34] sm:$0xf]
    %v2629 = vld [vmem:[%s16 + $0x38] sm:$0xf]
    %v2630 = vld [vmem:[%s16 + $0x3c] sm:$0xf]
    %v2631 = vld [vmem:[%s16 + $0x40] sm:$0xf]
    %v2632 = vld [vmem:[%s16 + $0x44] sm:$0xf]
    %v2633 = vld [vmem:[%s16 + $0x48] sm:$0xf]
    %v2634 = vld [vmem:[%s16 + $0x4c] sm:$0xf]
    %v2635 = vld [vmem:[%s16 + $0x50] sm:$0xf]
    %v2636 = vld [vmem:[%s16 + $0x54] sm:$0xf]
    %v2637 = vld [vmem:[%s16 + $0x58] sm:$0xf]
    %v2638 = vld [vmem:[%s16 + $0x5c] sm:$0xf]
    %v2639 = vld [vmem:[%s16 + $0x60] sm:$0xf]
    %v2640 = vld [vmem:[%s16 + $0x64] sm:$0xf]
    %v2641 = vld [vmem:[%s16 + $0x68] sm:$0xf]
    %v2642 = vld [vmem:[%s16 + $0x6c] sm:$0xf]
    %v2643 = vld [vmem:[%s16 + $0x70] sm:$0xf]
    %v2644 = vld [vmem:[%s16 + $0x74] sm:$0xf]
    %v2645 = vld [vmem:[%s16 + $0x78] sm:$0xf]
    %v2646 = vld [vmem:[%s16 + $0x7c] sm:$0xf]
    %v2663 = vunpack.c.l.b16 %v2631
    %v2664 = vunpack.c.l.b16 %v2632
    %v2665 = vunpack.c.l.b16 %v2633
    %v2666 = vunpack.c.l.b16 %v2634
    %v2667 = vunpack.c.l.b16 %v2635
    %v2668 = vunpack.c.l.b16 %v2636
    %v2669 = vunpack.c.l.b16 %v2637
    %v2670 = vunpack.c.l.b16 %v2638
    %v2671 = vunpack.c.l.b16 %v2639
    %v2672 = vunpack.c.l.b16 %v2640
    %v2673 = vunpack.c.l.b16 %v2641
    %v2674 = vunpack.c.l.b16 %v2642
    %v2675 = vunpack.c.l.b16 %v2643
    %v2676 = vunpack.c.l.b16 %v2644
    %v2677 = vunpack.c.l.b16 %v2645
    %v2678 = vunpack.c.l.b16 %v2646
    %v2679 = vpack.c.b16 %v2664, %v2663
    %v2680 = vpack.c.b16 %v2666, %v2665
    %v2681 = vpack.c.b16 %v2668, %v2667
    %v2682 = vpack.c.b16 %v2670, %v2669
    %v2683 = vpack.c.b16 %v2672, %v2671
    %v2684 = vpack.c.b16 %v2674, %v2673
    %v2685 = vpack.c.b16 %v2676, %v2675
    %v2686 = vpack.c.b16 %v2678, %v2677
    %2695 = vmatpush.bf16.msra.mxu0 %v2686
    %2696 = vmatpush.bf16.msra.mxu0 %v2685
    %2697 = vmatpush.bf16.msra.mxu0 %v2684
    %2698 = vmatpush.bf16.msra.mxu0 %v2683
    %2699 = vmatpush.bf16.msra.mxu0 %v2682
    %2700 = vmatpush.bf16.msra.mxu0 %v2681
    %2701 = vmatpush.bf16.msra.mxu0 %v2680
    %2702 = vmatpush.bf16.msra.mxu0 %v2679
    %2703 = vmatmul.bf16.gmra.mxu0 %v2607
    %v2704 = vpop.f32.mrf.mxu0
    %v2705 = vadd.f32 0.0, %v2704
    %v2706 = vpop.f32.mrf.mxu0
    %2707 = vdwg.mxu0
    %v2724 = vunpack.c.l.b16 %v2615
    %v2725 = vunpack.c.l.b16 %v2616
    %v2726 = vunpack.c.l.b16 %v2617
    %v2727 = vunpack.c.l.b16 %v2618
    %v2728 = vunpack.c.l.b16 %v2619
    %v2729 = vunpack.c.l.b16 %v2620
    %v2730 = vunpack.c.l.b16 %v2621
    %v2731 = vunpack.c.l.b16 %v2622
    %v2732 = vunpack.c.l.b16 %v2623
    %v2733 = vunpack.c.l.b16 %v2624
    %v2734 = vunpack.c.l.b16 %v2625
    %v2735 = vunpack.c.l.b16 %v2626
    %v2736 = vunpack.c.l.b16 %v2627
    %v2737 = vunpack.c.l.b16 %v2628
    %v2738 = vunpack.c.l.b16 %v2629
    %v2739 = vunpack.c.l.b16 %v2630
    %v2740 = vpack.c.b16 %v2725, %v2724
    %v2741 = vpack.c.b16 %v2727, %v2726
    %v2742 = vpack.c.b16 %v2729, %v2728
    %v2743 = vpack.c.b16 %v2731, %v2730
    %v2744 = vpack.c.b16 %v2733, %v2732
    %v2745 = vpack.c.b16 %v2735, %v2734
    %v2746 = vpack.c.b16 %v2737, %v2736
    %v2747 = vpack.c.b16 %v2739, %v2738
    %2756 = vmatpush.bf16.msra.mxu0 %v2747
    %2757 = vmatpush.bf16.msra.mxu0 %v2746
    %2758 = vmatpush.bf16.msra.mxu0 %v2745
    %2759 = vmatpush.bf16.msra.mxu0 %v2744
    %2760 = vmatpush.bf16.msra.mxu0 %v2743
    %2761 = vmatpush.bf16.msra.mxu0 %v2742
    %2762 = vmatpush.bf16.msra.mxu0 %v2741
    %2763 = vmatpush.bf16.msra.mxu0 %v2740
    %2764 = vmatmul.bf16.gmra.mxu0 %v2606
    %v2765 = vpop.f32.mrf.mxu0
    %v2766 = vadd.f32 %v2705, %v2765
    %v2767 = vpop.f32.mrf.mxu0
    %2768 = vdwg.mxu0
    %v2769 = vld [vmem:[%s16 + $0x80] sm:$0xf]
    %v2770 = vld [vmem:[%s16 + $0x84] sm:$0xf]
    %v2771 = vld [vmem:[%s16 + $0x88] sm:$0xf]
    %v2772 = vld [vmem:[%s16 + $0x8c] sm:$0xf]
    %v2773 = vld [vmem:[%s16 + $0x90] sm:$0xf]
    %v2774 = vld [vmem:[%s16 + $0x94] sm:$0xf]
    %v2775 = vld [vmem:[%s16 + $0x98] sm:$0xf]
    %v2776 = vld [vmem:[%s16 + $0x9c] sm:$0xf]
    %v2777 = vld [vmem:[%s16 + $0xa0] sm:$0xf]
    %v2778 = vld [vmem:[%s16 + $0xa4] sm:$0xf]
    %v2779 = vld [vmem:[%s16 + $0xa8] sm:$0xf]
    %v2780 = vld [vmem:[%s16 + $0xac] sm:$0xf]
    %v2781 = vld [vmem:[%s16 + $0xb0] sm:$0xf]
    %v2782 = vld [vmem:[%s16 + $0xb4] sm:$0xf]
    %v2783 = vld [vmem:[%s16 + $0xb8] sm:$0xf]
    %v2784 = vld [vmem:[%s16 + $0xbc] sm:$0xf]
    %v2801 = vunpack.c.l.b16 %v2769
    %v2802 = vunpack.c.l.b16 %v2770
    %v2803 = vunpack.c.l.b16 %v2771
    %v2804 = vunpack.c.l.b16 %v2772
    %v2805 = vunpack.c.l.b16 %v2773
    %v2806 = vunpack.c.l.b16 %v2774
    %v2807 = vunpack.c.l.b16 %v2775
    %v2808 = vunpack.c.l.b16 %v2776
    %v2809 = vunpack.c.l.b16 %v2777
    %v2810 = vunpack.c.l.b16 %v2778
    %v2811 = vunpack.c.l.b16 %v2779
    %v2812 = vunpack.c.l.b16 %v2780
    %v2813 = vunpack.c.l.b16 %v2781
    %v2814 = vunpack.c.l.b16 %v2782
    %v2815 = vunpack.c.l.b16 %v2783
    %v2816 = vunpack.c.l.b16 %v2784
    %v2817 = vpack.c.b16 %v2802, %v2801
    %v2818 = vpack.c.b16 %v2804, %v2803
    %v2819 = vpack.c.b16 %v2806, %v2805
    %v2820 = vpack.c.b16 %v2808, %v2807
    %v2821 = vpack.c.b16 %v2810, %v2809
    %v2822 = vpack.c.b16 %v2812, %v2811
    %v2823 = vpack.c.b16 %v2814, %v2813
    %v2824 = vpack.c.b16 %v2816, %v2815
    %2833 = vmatpush.bf16.msra.mxu0 %v2824
    %2834 = vmatpush.bf16.msra.mxu0 %v2823
    %2835 = vmatpush.bf16.msra.mxu0 %v2822
    %2836 = vmatpush.bf16.msra.mxu0 %v2821
    %2837 = vmatpush.bf16.msra.mxu0 %v2820
    %2838 = vmatpush.bf16.msra.mxu0 %v2819
    %2839 = vmatpush.bf16.msra.mxu0 %v2818
    %2840 = vmatpush.bf16.msra.mxu0 %v2817
    %2841 = vmatmul.bf16.gmra.mxu0 %v2608
    %v2842 = vpop.f32.mrf.mxu0
    %v2843 = vadd.f32 0.0, %v2842
    %v2844 = vpop.f32.mrf.mxu0
    %2845 = vdwg.mxu0
    %v2846 = vadd.f32 %v2766, %v2843
    %v2847 = vld [vmem:[%s16 + $0xc0] sm:$0xf]
    %v2848 = vld [vmem:[%s16 + $0xc4] sm:$0xf]
    %v2849 = vld [vmem:[%s16 + $0xc8] sm:$0xf]
    %v2850 = vld [vmem:[%s16 + $0xcc] sm:$0xf]
    %v2851 = vld [vmem:[%s16 + $0xd0] sm:$0xf]
    %v2852 = vld [vmem:[%s16 + $0xd4] sm:$0xf]
    %v2853 = vld [vmem:[%s16 + $0xd8] sm:$0xf]
    %v2854 = vld [vmem:[%s16 + $0xdc] sm:$0xf]
    %v2855 = vld [vmem:[%s16 + $0xe0] sm:$0xf]
    %v2856 = vld [vmem:[%s16 + $0xe4] sm:$0xf]
    %v2857 = vld [vmem:[%s16 + $0xe8] sm:$0xf]
    %v2858 = vld [vmem:[%s16 + $0xec] sm:$0xf]
    %v2859 = vld [vmem:[%s16 + $0xf0] sm:$0xf]
    %v2860 = vld [vmem:[%s16 + $0xf4] sm:$0xf]
    %v2861 = vld [vmem:[%s16 + $0xf8] sm:$0xf]
    %v2862 = vld [vmem:[%s16 + $0xfc] sm:$0xf]
    %v2879 = vunpack.c.l.b16 %v2847
    %v2880 = vunpack.c.l.b16 %v2848
    %v2881 = vunpack.c.l.b16 %v2849
    %v2882 = vunpack.c.l.b16 %v2850
    %v2883 = vunpack.c.l.b16 %v2851
    %v2884 = vunpack.c.l.b16 %v2852
    %v2885 = vunpack.c.l.b16 %v2853
    %v2886 = vunpack.c.l.b16 %v2854
    %v2887 = vunpack.c.l.b16 %v2855
    %v2888 = vunpack.c.l.b16 %v2856
    %v2889 = vunpack.c.l.b16 %v2857
    %v2890 = vunpack.c.l.b16 %v2858
    %v2891 = vunpack.c.l.b16 %v2859
    %v2892 = vunpack.c.l.b16 %v2860
    %v2893 = vunpack.c.l.b16 %v2861
    %v2894 = vunpack.c.l.b16 %v2862
    %v2895 = vpack.c.b16 %v2880, %v2879
    %v2896 = vpack.c.b16 %v2882, %v2881
    %v2897 = vpack.c.b16 %v2884, %v2883
    %v2898 = vpack.c.b16 %v2886, %v2885
    %v2899 = vpack.c.b16 %v2888, %v2887
    %v2900 = vpack.c.b16 %v2890, %v2889
    %v2901 = vpack.c.b16 %v2892, %v2891
    %v2902 = vpack.c.b16 %v2894, %v2893
    %2911 = vmatpush.bf16.msra.mxu0 %v2902
    %2912 = vmatpush.bf16.msra.mxu0 %v2901
    %2913 = vmatpush.bf16.msra.mxu0 %v2900
    %2914 = vmatpush.bf16.msra.mxu0 %v2899
    %2915 = vmatpush.bf16.msra.mxu0 %v2898
    %2916 = vmatpush.bf16.msra.mxu0 %v2897
    %2917 = vmatpush.bf16.msra.mxu0 %v2896
    %2918 = vmatpush.bf16.msra.mxu0 %v2895
    %2919 = vmatmul.bf16.gmra.mxu0 %v2609
    %v2920 = vpop.f32.mrf.mxu0
    %v2921 = vadd.f32 0.0, %v2920
    %v2922 = vpop.f32.mrf.mxu0
    %2923 = vdwg.mxu0
    %v2924 = vadd.f32 %v2846, %v2921
    %v2925 = vld [vmem:[%s16 + $0x100] sm:$0xf]
    %v2926 = vld [vmem:[%s16 + $0x104] sm:$0xf]
    %v2927 = vld [vmem:[%s16 + $0x108] sm:$0xf]
    %v2928 = vld [vmem:[%s16 + $0x10c] sm:$0xf]
    %v2929 = vld [vmem:[%s16 + $0x110] sm:$0xf]
    %v2930 = vld [vmem:[%s16 + $0x114] sm:$0xf]
    %v2931 = vld [vmem:[%s16 + $0x118] sm:$0xf]
    %v2932 = vld [vmem:[%s16 + $0x11c] sm:$0xf]
    %v2933 = vld [vmem:[%s16 + $0x120] sm:$0xf]
    %v2934 = vld [vmem:[%s16 + $0x124] sm:$0xf]
    %v2935 = vld [vmem:[%s16 + $0x128] sm:$0xf]
    %v2936 = vld [vmem:[%s16 + $0x12c] sm:$0xf]
    %v2937 = vld [vmem:[%s16 + $0x130] sm:$0xf]
    %v2938 = vld [vmem:[%s16 + $0x134] sm:$0xf]
    %v2939 = vld [vmem:[%s16 + $0x138] sm:$0xf]
    %v2940 = vld [vmem:[%s16 + $0x13c] sm:$0xf]
    %v2957 = vunpack.c.l.b16 %v2925
    %v2958 = vunpack.c.l.b16 %v2926
    %v2959 = vunpack.c.l.b16 %v2927
    %v2960 = vunpack.c.l.b16 %v2928
    %v2961 = vunpack.c.l.b16 %v2929
    %v2962 = vunpack.c.l.b16 %v2930
    %v2963 = vunpack.c.l.b16 %v2931
    %v2964 = vunpack.c.l.b16 %v2932
    %v2965 = vunpack.c.l.b16 %v2933
    %v2966 = vunpack.c.l.b16 %v2934
    %v2967 = vunpack.c.l.b16 %v2935
    %v2968 = vunpack.c.l.b16 %v2936
    %v2969 = vunpack.c.l.b16 %v2937
    %v2970 = vunpack.c.l.b16 %v2938
    %v2971 = vunpack.c.l.b16 %v2939
    %v2972 = vunpack.c.l.b16 %v2940
    %v2973 = vpack.c.b16 %v2958, %v2957
    %v2974 = vpack.c.b16 %v2960, %v2959
    %v2975 = vpack.c.b16 %v2962, %v2961
    %v2976 = vpack.c.b16 %v2964, %v2963
    %v2977 = vpack.c.b16 %v2966, %v2965
    %v2978 = vpack.c.b16 %v2968, %v2967
    %v2979 = vpack.c.b16 %v2970, %v2969
    %v2980 = vpack.c.b16 %v2972, %v2971
    %2989 = vmatpush.bf16.msra.mxu0 %v2980
    %2990 = vmatpush.bf16.msra.mxu0 %v2979
    %2991 = vmatpush.bf16.msra.mxu0 %v2978
    %2992 = vmatpush.bf16.msra.mxu0 %v2977
    %2993 = vmatpush.bf16.msra.mxu0 %v2976
    %2994 = vmatpush.bf16.msra.mxu0 %v2975
    %2995 = vmatpush.bf16.msra.mxu0 %v2974
    %2996 = vmatpush.bf16.msra.mxu0 %v2973
    %2997 = vmatmul.bf16.gmra.mxu0 %v2610
    %v2998 = vpop.f32.mrf.mxu0
    %v2999 = vadd.f32 0.0, %v2998
    %v3000 = vpop.f32.mrf.mxu0
    %3001 = vdwg.mxu0
    %v3002 = vadd.f32 %v2924, %v2999
    %v3003 = vld [vmem:[%s16 + $0x140] sm:$0xf]
    %v3004 = vld [vmem:[%s16 + $0x144] sm:$0xf]
    %v3005 = vld [vmem:[%s16 + $0x148] sm:$0xf]
    %v3006 = vld [vmem:[%s16 + $0x14c] sm:$0xf]
    %v3007 = vld [vmem:[%s16 + $0x150] sm:$0xf]
    %v3008 = vld [vmem:[%s16 + $0x154] sm:$0xf]
    %v3009 = vld [vmem:[%s16 + $0x158] sm:$0xf]
    %v3010 = vld [vmem:[%s16 + $0x15c] sm:$0xf]
    %v3011 = vld [vmem:[%s16 + $0x160] sm:$0xf]
    %v3012 = vld [vmem:[%s16 + $0x164] sm:$0xf]
    %v3013 = vld [vmem:[%s16 + $0x168] sm:$0xf]
    %v3014 = vld [vmem:[%s16 + $0x16c] sm:$0xf]
    %v3015 = vld [vmem:[%s16 + $0x170] sm:$0xf]
    %v3016 = vld [vmem:[%s16 + $0x174] sm:$0xf]
    %v3017 = vld [vmem:[%s16 + $0x178] sm:$0xf]
    %v3018 = vld [vmem:[%s16 + $0x17c] sm:$0xf]
    %v3035 = vunpack.c.l.b16 %v3003
    %v3036 = vunpack.c.l.b16 %v3004
    %v3037 = vunpack.c.l.b16 %v3005
    %v3038 = vunpack.c.l.b16 %v3006
    %v3039 = vunpack.c.l.b16 %v3007
    %v3040 = vunpack.c.l.b16 %v3008
    %v3041 = vunpack.c.l.b16 %v3009
    %v3042 = vunpack.c.l.b16 %v3010
    %v3043 = vunpack.c.l.b16 %v3011
    %v3044 = vunpack.c.l.b16 %v3012
    %v3045 = vunpack.c.l.b16 %v3013
    %v3046 = vunpack.c.l.b16 %v3014
    %v3047 = vunpack.c.l.b16 %v3015
    %v3048 = vunpack.c.l.b16 %v3016
    %v3049 = vunpack.c.l.b16 %v3017
    %v3050 = vunpack.c.l.b16 %v3018
    %v3051 = vpack.c.b16 %v3036, %v3035
    %v3052 = vpack.c.b16 %v3038, %v3037
    %v3053 = vpack.c.b16 %v3040, %v3039
    %v3054 = vpack.c.b16 %v3042, %v3041
    %v3055 = vpack.c.b16 %v3044, %v3043
    %v3056 = vpack.c.b16 %v3046, %v3045
    %v3057 = vpack.c.b16 %v3048, %v3047
    %v3058 = vpack.c.b16 %v3050, %v3049
    %3067 = vmatpush.bf16.msra.mxu0 %v3058
    %3068 = vmatpush.bf16.msra.mxu0 %v3057
    %3069 = vmatpush.bf16.msra.mxu0 %v3056
    %3070 = vmatpush.bf16.msra.mxu0 %v3055
    %3071 = vmatpush.bf16.msra.mxu0 %v3054
    %3072 = vmatpush.bf16.msra.mxu0 %v3053
    %3073 = vmatpush.bf16.msra.mxu0 %v3052
    %3074 = vmatpush.bf16.msra.mxu0 %v3051
    %3075 = vmatmul.bf16.gmra.mxu0 %v2611
    %v3076 = vpop.f32.mrf.mxu0
    %v3077 = vadd.f32 0.0, %v3076
    %v3078 = vpop.f32.mrf.mxu0
    %3079 = vdwg.mxu0
    %v3080 = vadd.f32 %v3002, %v3077
    %v3081 = vld [vmem:[%s16 + $0x180] sm:$0xf]
    %v3082 = vld [vmem:[%s16 + $0x184] sm:$0xf]
    %v3083 = vld [vmem:[%s16 + $0x188] sm:$0xf]
    %v3084 = vld [vmem:[%s16 + $0x18c] sm:$0xf]
    %v3085 = vld [vmem:[%s16 + $0x190] sm:$0xf]
    %v3086 = vld [vmem:[%s16 + $0x194] sm:$0xf]
    %v3087 = vld [vmem:[%s16 + $0x198] sm:$0xf]
    %v3088 = vld [vmem:[%s16 + $0x19c] sm:$0xf]
    %v3089 = vld [vmem:[%s16 + $0x1a0] sm:$0xf]
    %v3090 = vld [vmem:[%s16 + $0x1a4] sm:$0xf]
    %v3091 = vld [vmem:[%s16 + $0x1a8] sm:$0xf]
    %v3092 = vld [vmem:[%s16 + $0x1ac] sm:$0xf]
    %v3093 = vld [vmem:[%s16 + $0x1b0] sm:$0xf]
    %v3094 = vld [vmem:[%s16 + $0x1b4] sm:$0xf]
    %v3095 = vld [vmem:[%s16 + $0x1b8] sm:$0xf]
    %v3096 = vld [vmem:[%s16 + $0x1bc] sm:$0xf]
    %v3113 = vunpack.c.l.b16 %v3081
    %v3114 = vunpack.c.l.b16 %v3082
    %v3115 = vunpack.c.l.b16 %v3083
    %v3116 = vunpack.c.l.b16 %v3084
    %v3117 = vunpack.c.l.b16 %v3085
    %v3118 = vunpack.c.l.b16 %v3086
    %v3119 = vunpack.c.l.b16 %v3087
    %v3120 = vunpack.c.l.b16 %v3088
    %v3121 = vunpack.c.l.b16 %v3089
    %v3122 = vunpack.c.l.b16 %v3090
    %v3123 = vunpack.c.l.b16 %v3091
    %v3124 = vunpack.c.l.b16 %v3092
    %v3125 = vunpack.c.l.b16 %v3093
    %v3126 = vunpack.c.l.b16 %v3094
    %v3127 = vunpack.c.l.b16 %v3095
    %v3128 = vunpack.c.l.b16 %v3096
    %v3129 = vpack.c.b16 %v3114, %v3113
    %v3130 = vpack.c.b16 %v3116, %v3115
    %v3131 = vpack.c.b16 %v3118, %v3117
    %v3132 = vpack.c.b16 %v3120, %v3119
    %v3133 = vpack.c.b16 %v3122, %v3121
    %v3134 = vpack.c.b16 %v3124, %v3123
    %v3135 = vpack.c.b16 %v3126, %v3125
    %v3136 = vpack.c.b16 %v3128, %v3127
    %3145 = vmatpush.bf16.msra.mxu0 %v3136
    %3146 = vmatpush.bf16.msra.mxu0 %v3135
    %3147 = vmatpush.bf16.msra.mxu0 %v3134
    %3148 = vmatpush.bf16.msra.mxu0 %v3133
    %3149 = vmatpush.bf16.msra.mxu0 %v3132
    %3150 = vmatpush.bf16.msra.mxu0 %v3131
    %3151 = vmatpush.bf16.msra.mxu0 %v3130
    %3152 = vmatpush.bf16.msra.mxu0 %v3129
    %3153 = vmatmul.bf16.gmra.mxu0 %v2612
    %v3154 = vpop.f32.mrf.mxu0
    %v3155 = vadd.f32 0.0, %v3154
    %v3156 = vpop.f32.mrf.mxu0
    %3157 = vdwg.mxu0
    %v3158 = vadd.f32 %v3080, %v3155
    %v3159 = vld [vmem:[%s16 + $0x1c0] sm:$0xf]
    %v3160 = vld [vmem:[%s16 + $0x1c4] sm:$0xf]
    %v3161 = vld [vmem:[%s16 + $0x1c8] sm:$0xf]
    %v3162 = vld [vmem:[%s16 + $0x1cc] sm:$0xf]
    %v3163 = vld [vmem:[%s16 + $0x1d0] sm:$0xf]
    %v3164 = vld [vmem:[%s16 + $0x1d4] sm:$0xf]
    %v3165 = vld [vmem:[%s16 + $0x1d8] sm:$0xf]
    %v3166 = vld [vmem:[%s16 + $0x1dc] sm:$0xf]
    %v3167 = vld [vmem:[%s16 + $0x1e0] sm:$0xf]
    %v3168 = vld [vmem:[%s16 + $0x1e4] sm:$0xf]
    %v3169 = vld [vmem:[%s16 + $0x1e8] sm:$0xf]
    %v3170 = vld [vmem:[%s16 + $0x1ec] sm:$0xf]
    %v3171 = vld [vmem:[%s16 + $0x1f0] sm:$0xf]
    %v3172 = vld [vmem:[%s16 + $0x1f4] sm:$0xf]
    %v3173 = vld [vmem:[%s16 + $0x1f8] sm:$0xf]
    %v3174 = vld [vmem:[%s16 + $0x1fc] sm:$0xf]
    %v3191 = vunpack.c.l.b16 %v3159
    %v3192 = vunpack.c.l.b16 %v3160
    %v3193 = vunpack.c.l.b16 %v3161
    %v3194 = vunpack.c.l.b16 %v3162
    %v3195 = vunpack.c.l.b16 %v3163
    %v3196 = vunpack.c.l.b16 %v3164
    %v3197 = vunpack.c.l.b16 %v3165
    %v3198 = vunpack.c.l.b16 %v3166
    %v3199 = vunpack.c.l.b16 %v3167
    %v3200 = vunpack.c.l.b16 %v3168
    %v3201 = vunpack.c.l.b16 %v3169
    %v3202 = vunpack.c.l.b16 %v3170
    %v3203 = vunpack.c.l.b16 %v3171
    %v3204 = vunpack.c.l.b16 %v3172
    %v3205 = vunpack.c.l.b16 %v3173
    %v3206 = vunpack.c.l.b16 %v3174
    %v3207 = vpack.c.b16 %v3192, %v3191
    %v3208 = vpack.c.b16 %v3194, %v3193
    %v3209 = vpack.c.b16 %v3196, %v3195
    %v3210 = vpack.c.b16 %v3198, %v3197
    %v3211 = vpack.c.b16 %v3200, %v3199
    %v3212 = vpack.c.b16 %v3202, %v3201
    %v3213 = vpack.c.b16 %v3204, %v3203
    %v3214 = vpack.c.b16 %v3206, %v3205
    %3223 = vmatpush.bf16.msra.mxu0 %v3214
    %3224 = vmatpush.bf16.msra.mxu0 %v3213
    %3225 = vmatpush.bf16.msra.mxu0 %v3212
    %3226 = vmatpush.bf16.msra.mxu0 %v3211
    %3227 = vmatpush.bf16.msra.mxu0 %v3210
    %3228 = vmatpush.bf16.msra.mxu0 %v3209
    %3229 = vmatpush.bf16.msra.mxu0 %v3208
    %3230 = vmatpush.bf16.msra.mxu0 %v3207
    %3231 = vmatmul.bf16.gmra.mxu0 %v2613
    %v3232 = vpop.f32.mrf.mxu0
    %v3233 = vadd.f32 0.0, %v3232
    %v3234 = vpop.f32.mrf.mxu0
    %3235 = vdwg.mxu0
    %v3236 = vadd.f32 %v3158, %v3233
    %v3237 = vld [vmem:[%s16 + $0x200] sm:$0xf]
    %v3238 = vld [vmem:[%s16 + $0x204] sm:$0xf]
    %v3239 = vld [vmem:[%s16 + $0x208] sm:$0xf]
    %v3240 = vld [vmem:[%s16 + $0x20c] sm:$0xf]
    %v3241 = vld [vmem:[%s16 + $0x210] sm:$0xf]
    %v3242 = vld [vmem:[%s16 + $0x214] sm:$0xf]
    %v3243 = vld [vmem:[%s16 + $0x218] sm:$0xf]
    %v3244 = vld [vmem:[%s16 + $0x21c] sm:$0xf]
    %v3245 = vld [vmem:[%s16 + $0x220] sm:$0xf]
    %v3246 = vld [vmem:[%s16 + $0x224] sm:$0xf]
    %v3247 = vld [vmem:[%s16 + $0x228] sm:$0xf]
    %v3248 = vld [vmem:[%s16 + $0x22c] sm:$0xf]
    %v3249 = vld [vmem:[%s16 + $0x230] sm:$0xf]
    %v3250 = vld [vmem:[%s16 + $0x234] sm:$0xf]
    %v3251 = vld [vmem:[%s16 + $0x238] sm:$0xf]
    %v3252 = vld [vmem:[%s16 + $0x23c] sm:$0xf]
    %v3269 = vunpack.c.l.b16 %v3237
    %v3270 = vunpack.c.l.b16 %v3238
    %v3271 = vunpack.c.l.b16 %v3239
    %v3272 = vunpack.c.l.b16 %v3240
    %v3273 = vunpack.c.l.b16 %v3241
    %v3274 = vunpack.c.l.b16 %v3242
    %v3275 = vunpack.c.l.b16 %v3243
    %v3276 = vunpack.c.l.b16 %v3244
    %v3277 = vunpack.c.l.b16 %v3245
    %v3278 = vunpack.c.l.b16 %v3246
    %v3279 = vunpack.c.l.b16 %v3247
    %v3280 = vunpack.c.l.b16 %v3248
    %v3281 = vunpack.c.l.b16 %v3249
    %v3282 = vunpack.c.l.b16 %v3250
    %v3283 = vunpack.c.l.b16 %v3251
    %v3284 = vunpack.c.l.b16 %v3252
    %v3285 = vpack.c.b16 %v3270, %v3269
    %v3286 = vpack.c.b16 %v3272, %v3271
    %v3287 = vpack.c.b16 %v3274, %v3273
    %v3288 = vpack.c.b16 %v3276, %v3275
    %v3289 = vpack.c.b16 %v3278, %v3277
    %v3290 = vpack.c.b16 %v3280, %v3279
    %v3291 = vpack.c.b16 %v3282, %v3281
    %v3292 = vpack.c.b16 %v3284, %v3283
    %3301 = vmatpush.bf16.msra.mxu0 %v3292
    %3302 = vmatpush.bf16.msra.mxu0 %v3291
    %3303 = vmatpush.bf16.msra.mxu0 %v3290
    %3304 = vmatpush.bf16.msra.mxu0 %v3289
    %3305 = vmatpush.bf16.msra.mxu0 %v3288
    %3306 = vmatpush.bf16.msra.mxu0 %v3287
    %3307 = vmatpush.bf16.msra.mxu0 %v3286
    %3308 = vmatpush.bf16.msra.mxu0 %v3285
    %3309 = vmatmul.bf16.gmra.mxu0 %v2614
    %v3310 = vpop.f32.mrf.mxu0
    %v3311 = vadd.f32 0.0, %v3310
    %v3312 = vpop.f32.mrf.mxu0
    %3313 = vdwg.mxu0
    %v3314 = vadd.f32 %v3236, %v3311
    %v3315 = vld [vmem:[%s17] sm:$0x1]
    %v3316 = vld [vmem:[%s18] sm:$0x1]
    %v3317 = vld [vmem:[%s19] sm:$0x1]
    %v3319 = vperm.slane %v3315, 0
    %v3321 = vadd.f32 %v3314, %v3319
    %v3322 = vmax.f32 %v3321, 0.0
    %vm3323 = vcmask 1041408
    %v3324 = vsel %vm3323, %v3322, 0.0
    %v3325 = vrot.slane %v3324, 4
    %v3326 = vadd.f32 %v3324, %v3325
    %v3327 = vrot.slane %v3326, 2
    %v3328 = vadd.f32 %v3326, %v3327
    %v3329 = vrot.slane %v3328, 1
    %v3330 = vadd.f32 %v3328, %v3329
    %v3331 = vrcp.pop 2.0
    %v3332 = vmul.f32 2.0, %v3331
    %v3333 = vsub.f32 1.0, %v3332
    %v3334 = vmul.f32 %v3331, %v3333
    %v3335 = vadd.f32 %v3331, %v3334
    %vm3336 = vweird.f32 %v3331
    %v3337 = vsel %vm3336, %v3331, %v3335
    %v3338 = vmul.f32 %v3330, %v3337
    %v3339 = vsub.f32 %v3322, %v3338
    %v3340 = vmul.f32 %v3339, %v3339
    %v3341 = vsel %vm3323, %v3340, 0.0
    %v3342 = vrot.slane %v3341, 4
    %v3343 = vadd.f32 %v3341, %v3342
    %v3344 = vrot.slane %v3343, 2
    %v3345 = vadd.f32 %v3343, %v3344
    %v3346 = vrot.slane %v3345, 1
    %v3347 = vadd.f32 %v3345, %v3346
    %v3348 = vmul.f32 %v3347, %v3337
    %v3349 = vadd.f32 %v3348, 1e-05
    %v3350 = vrsqrt.pop %v3349
    %v3351 = vmul.f32 %v3350, %v3349
    %v3352 = vmul.f32 %v3351, %v3350
    %v3353 = vmul.f32 0.5, %v3352
    %v3354 = vsub.f32 1.5, %v3353
    %v3355 = vmul.f32 %v3350, %v3354
    %vm3356 = vweird.f32 %v3349
    %vm3357 = vweird.f32 %v3350
    %vm3358 = vmor %vm3356, %vm3357
    %v3359 = vsel %vm3358, %v3350, %v3355
    %v3360 = vmul.f32 %v3339, %v3359
    %v3362 = vperm.slane %v3316, 0
    %v3364 = vmul.f32 %v3360, %v3362
    %v3366 = vperm.slane %v3317, 0
    %v3368 = vadd.f32 %v3364, %v3366
    %v3369 = vpack.c.bf16 %v3368, %v3368
    %v3370 = vld [vmem:[%s20] sm:$0xf]
    %v3371 = vld [vmem:[%s20 + $0x4] sm:$0xf]
    %v3372 = vld [vmem:[%s20 + $0x8] sm:$0xf]
    %v3373 = vld [vmem:[%s20 + $0xc] sm:$0xf]
    %v3374 = vld [vmem:[%s20 + $0x10] sm:$0xf]
    %v3375 = vld [vmem:[%s20 + $0x14] sm:$0xf]
    %v3376 = vld [vmem:[%s20 + $0x18] sm:$0xf]
    %v3377 = vld [vmem:[%s20 + $0x1c] sm:$0xf]
    %v3378 = vld [vmem:[%s20 + $0x20] sm:$0xf]
    %v3388 = vunpack.c.l.b16 %v3370
    %v3389 = vunpack.c.l.b16 %v3371
    %v3390 = vunpack.c.l.b16 %v3372
    %v3391 = vunpack.c.l.b16 %v3373
    %v3392 = vunpack.c.l.b16 %v3374
    %v3393 = vunpack.c.l.b16 %v3375
    %v3394 = vunpack.c.l.b16 %v3376
    %v3395 = vunpack.c.l.b16 %v3377
    %v3396 = vunpack.c.l.b16 %v3378
    %v3397 = vpack.c.b16 %v3389, %v3388
    %v3398 = vpack.c.b16 %v3391, %v3390
    %v3399 = vpack.c.b16 %v3393, %v3392
    %v3400 = vpack.c.b16 %v3395, %v3394
    %v3401 = vpack.c.b16 %v3396, %v3396
    %vm3402 = vcmask 15360
    %v3404 = vsel %vm3402, %v3397, 0
    %v3407 = vsel %vm3402, %v3398, 0
    %v3410 = vsel %vm3402, %v3399, 0
    %v3413 = vsel %vm3402, %v3400, 0
    %v3416 = vsel %vm3402, %v3401, 0
    %vm3418 = vcmask 1040384
    %v3420 = vsel %vm3418, %v3369, 0
    %3422 = vmatpush.bf16.msra.mxu0 0
    %3423 = vmatpush.bf16.msra.mxu0 0
    %3424 = vmatpush.bf16.msra.mxu0 0
    %3425 = vmatpush.bf16.msra.mxu0 0
    %3426 = vmatpush.bf16.msra.mxu0 0
    %3427 = vmatpush.bf16.msra.mxu0 0
    %3428 = vmatpush.bf16.msra.mxu0 0
    %3429 = vmatpush.bf16.msra.mxu0 %v3420
    %3430 = vmatmul.bf16.gmra.mxu0 %v3404
    %v3431 = vpop.f32.mrf.mxu0
    %v3432 = vadd.f32 0.0, %v3431
    %v3433 = vpop.f32.mrf.mxu0
    %v3434 = vadd.f32 0.0, %v3433
    %3435 = vmatmul.bf16.gmra.mxu0 %v3407
    %v3436 = vpop.f32.mrf.mxu0
    %v3437 = vadd.f32 0.0, %v3436
    %v3438 = vpop.f32.mrf.mxu0
    %v3439 = vadd.f32 0.0, %v3438
    %3440 = vmatmul.bf16.gmra.mxu0 %v3410
    %v3441 = vpop.f32.mrf.mxu0
    %v3442 = vadd.f32 0.0, %v3441
    %v3443 = vpop.f32.mrf.mxu0
    %v3444 = vadd.f32 0.0, %v3443
    %3445 = vmatmul.bf16.gmra.mxu0 %v3413
    %v3446 = vpop.f32.mrf.mxu0
    %v3447 = vadd.f32 0.0, %v3446
    %v3448 = vpop.f32.mrf.mxu0
    %v3449 = vadd.f32 0.0, %v3448
    %3450 = vmatmul.bf16.gmra.mxu0 %v3416
    %v3451 = vpop.f32.mrf.mxu0
    %v3452 = vadd.f32 0.0, %v3451
    %v3453 = vpop.f32.mrf.mxu0
    %3454 = vdwg.mxu0
    %v3455 = vpack.c.bf16 %v3432, %v3432
    %v3456 = vpack.c.bf16 %v3434, %v3434
    %v3457 = vpack.c.bf16 %v3437, %v3437
    %v3458 = vpack.c.bf16 %v3439, %v3439
    %v3459 = vpack.c.bf16 %v3442, %v3442
    %v3460 = vpack.c.bf16 %v3444, %v3444
    %v3461 = vpack.c.bf16 %v3447, %v3447
    %v3462 = vpack.c.bf16 %v3449, %v3449
    %v3463 = vpack.c.bf16 %v3452, %v3452
    %v3464 = vld [vmem:[%s21] sm:$0xf]
    %v3465 = vld [vmem:[%s21 + $0x4] sm:$0xf]
    %v3466 = vld [vmem:[%s21 + $0x8] sm:$0xf]
    %v3467 = vld [vmem:[%s21 + $0xc] sm:$0xf]
    %v3468 = vld [vmem:[%s21 + $0x10] sm:$0xf]
    %v3469 = vld [vmem:[%s21 + $0x14] sm:$0xf]
    %v3470 = vld [vmem:[%s21 + $0x18] sm:$0xf]
    %v3471 = vld [vmem:[%s21 + $0x1c] sm:$0xf]
    %v3472 = vld [vmem:[%s21 + $0x20] sm:$0xf]
    %v3473 = vld [vmem:[%s21 + $0x24] sm:$0xf]
    %v3474 = vld [vmem:[%s21 + $0x28] sm:$0xf]
    %v3475 = vld [vmem:[%s21 + $0x2c] sm:$0xf]
    %v3476 = vld [vmem:[%s21 + $0x30] sm:$0xf]
    %v3477 = vld [vmem:[%s21 + $0x34] sm:$0xf]
    %v3478 = vld [vmem:[%s21 + $0x38] sm:$0xf]
    %v3479 = vld [vmem:[%s21 + $0x3c] sm:$0xf]
    %v3480 = vld [vmem:[%s21 + $0x40] sm:$0xf]
    %v3481 = vld [vmem:[%s21 + $0x44] sm:$0xf]
    %v3482 = vld [vmem:[%s21 + $0x48] sm:$0xf]
    %v3483 = vld [vmem:[%s21 + $0x4c] sm:$0xf]
    %v3484 = vld [vmem:[%s21 + $0x50] sm:$0xf]
    %v3485 = vld [vmem:[%s21 + $0x54] sm:$0xf]
    %v3486 = vld [vmem:[%s21 + $0x58] sm:$0xf]
    %v3487 = vld [vmem:[%s21 + $0x5c] sm:$0xf]
    %v3488 = vld [vmem:[%s21 + $0x60] sm:$0xf]
    %v3489 = vld [vmem:[%s21 + $0x64] sm:$0xf]
    %v3490 = vld [vmem:[%s21 + $0x68] sm:$0xf]
    %v3491 = vld [vmem:[%s21 + $0x6c] sm:$0xf]
    %v3492 = vld [vmem:[%s21 + $0x70] sm:$0xf]
    %v3493 = vld [vmem:[%s21 + $0x74] sm:$0xf]
    %v3494 = vld [vmem:[%s21 + $0x78] sm:$0xf]
    %v3495 = vld [vmem:[%s21 + $0x7c] sm:$0xf]
    %v3512 = vunpack.c.l.b16 %v3480
    %v3513 = vunpack.c.l.b16 %v3481
    %v3514 = vunpack.c.l.b16 %v3482
    %v3515 = vunpack.c.l.b16 %v3483
    %v3516 = vunpack.c.l.b16 %v3484
    %v3517 = vunpack.c.l.b16 %v3485
    %v3518 = vunpack.c.l.b16 %v3486
    %v3519 = vunpack.c.l.b16 %v3487
    %v3520 = vunpack.c.l.b16 %v3488
    %v3521 = vunpack.c.l.b16 %v3489
    %v3522 = vunpack.c.l.b16 %v3490
    %v3523 = vunpack.c.l.b16 %v3491
    %v3524 = vunpack.c.l.b16 %v3492
    %v3525 = vunpack.c.l.b16 %v3493
    %v3526 = vunpack.c.l.b16 %v3494
    %v3527 = vunpack.c.l.b16 %v3495
    %v3528 = vpack.c.b16 %v3513, %v3512
    %v3529 = vpack.c.b16 %v3515, %v3514
    %v3530 = vpack.c.b16 %v3517, %v3516
    %v3531 = vpack.c.b16 %v3519, %v3518
    %v3532 = vpack.c.b16 %v3521, %v3520
    %v3533 = vpack.c.b16 %v3523, %v3522
    %v3534 = vpack.c.b16 %v3525, %v3524
    %v3535 = vpack.c.b16 %v3527, %v3526
    %3544 = vmatpush.bf16.msra.mxu0 %v3535
    %3545 = vmatpush.bf16.msra.mxu0 %v3534
    %3546 = vmatpush.bf16.msra.mxu0 %v3533
    %3547 = vmatpush.bf16.msra.mxu0 %v3532
    %3548 = vmatpush.bf16.msra.mxu0 %v3531
    %3549 = vmatpush.bf16.msra.mxu0 %v3530
    %3550 = vmatpush.bf16.msra.mxu0 %v3529
    %3551 = vmatpush.bf16.msra.mxu0 %v3528
    %3552 = vmatmul.bf16.gmra.mxu0 %v3456
    %v3553 = vpop.f32.mrf.mxu0
    %v3554 = vadd.f32 0.0, %v3553
    %v3555 = vpop.f32.mrf.mxu0
    %3556 = vdwg.mxu0
    %v3573 = vunpack.c.l.b16 %v3464
    %v3574 = vunpack.c.l.b16 %v3465
    %v3575 = vunpack.c.l.b16 %v3466
    %v3576 = vunpack.c.l.b16 %v3467
    %v3577 = vunpack.c.l.b16 %v3468
    %v3578 = vunpack.c.l.b16 %v3469
    %v3579 = vunpack.c.l.b16 %v3470
    %v3580 = vunpack.c.l.b16 %v3471
    %v3581 = vunpack.c.l.b16 %v3472
    %v3582 = vunpack.c.l.b16 %v3473
    %v3583 = vunpack.c.l.b16 %v3474
    %v3584 = vunpack.c.l.b16 %v3475
    %v3585 = vunpack.c.l.b16 %v3476
    %v3586 = vunpack.c.l.b16 %v3477
    %v3587 = vunpack.c.l.b16 %v3478
    %v3588 = vunpack.c.l.b16 %v3479
    %v3589 = vpack.c.b16 %v3574, %v3573
    %v3590 = vpack.c.b16 %v3576, %v3575
    %v3591 = vpack.c.b16 %v3578, %v3577
    %v3592 = vpack.c.b16 %v3580, %v3579
    %v3593 = vpack.c.b16 %v3582, %v3581
    %v3594 = vpack.c.b16 %v3584, %v3583
    %v3595 = vpack.c.b16 %v3586, %v3585
    %v3596 = vpack.c.b16 %v3588, %v3587
    %3605 = vmatpush.bf16.msra.mxu0 %v3596
    %3606 = vmatpush.bf16.msra.mxu0 %v3595
    %3607 = vmatpush.bf16.msra.mxu0 %v3594
    %3608 = vmatpush.bf16.msra.mxu0 %v3593
    %3609 = vmatpush.bf16.msra.mxu0 %v3592
    %3610 = vmatpush.bf16.msra.mxu0 %v3591
    %3611 = vmatpush.bf16.msra.mxu0 %v3590
    %3612 = vmatpush.bf16.msra.mxu0 %v3589
    %3613 = vmatmul.bf16.gmra.mxu0 %v3455
    %v3614 = vpop.f32.mrf.mxu0
    %v3615 = vadd.f32 %v3554, %v3614
    %v3616 = vpop.f32.mrf.mxu0
    %3617 = vdwg.mxu0
    %v3618 = vld [vmem:[%s21 + $0x80] sm:$0xf]
    %v3619 = vld [vmem:[%s21 + $0x84] sm:$0xf]
    %v3620 = vld [vmem:[%s21 + $0x88] sm:$0xf]
    %v3621 = vld [vmem:[%s21 + $0x8c] sm:$0xf]
    %v3622 = vld [vmem:[%s21 + $0x90] sm:$0xf]
    %v3623 = vld [vmem:[%s21 + $0x94] sm:$0xf]
    %v3624 = vld [vmem:[%s21 + $0x98] sm:$0xf]
    %v3625 = vld [vmem:[%s21 + $0x9c] sm:$0xf]
    %v3626 = vld [vmem:[%s21 + $0xa0] sm:$0xf]
    %v3627 = vld [vmem:[%s21 + $0xa4] sm:$0xf]
    %v3628 = vld [vmem:[%s21 + $0xa8] sm:$0xf]
    %v3629 = vld [vmem:[%s21 + $0xac] sm:$0xf]
    %v3630 = vld [vmem:[%s21 + $0xb0] sm:$0xf]
    %v3631 = vld [vmem:[%s21 + $0xb4] sm:$0xf]
    %v3632 = vld [vmem:[%s21 + $0xb8] sm:$0xf]
    %v3633 = vld [vmem:[%s21 + $0xbc] sm:$0xf]
    %v3650 = vunpack.c.l.b16 %v3618
    %v3651 = vunpack.c.l.b16 %v3619
    %v3652 = vunpack.c.l.b16 %v3620
    %v3653 = vunpack.c.l.b16 %v3621
    %v3654 = vunpack.c.l.b16 %v3622
    %v3655 = vunpack.c.l.b16 %v3623
    %v3656 = vunpack.c.l.b16 %v3624
    %v3657 = vunpack.c.l.b16 %v3625
    %v3658 = vunpack.c.l.b16 %v3626
    %v3659 = vunpack.c.l.b16 %v3627
    %v3660 = vunpack.c.l.b16 %v3628
    %v3661 = vunpack.c.l.b16 %v3629
    %v3662 = vunpack.c.l.b16 %v3630
    %v3663 = vunpack.c.l.b16 %v3631
    %v3664 = vunpack.c.l.b16 %v3632
    %v3665 = vunpack.c.l.b16 %v3633
    %v3666 = vpack.c.b16 %v3651, %v3650
    %v3667 = vpack.c.b16 %v3653, %v3652
    %v3668 = vpack.c.b16 %v3655, %v3654
    %v3669 = vpack.c.b16 %v3657, %v3656
    %v3670 = vpack.c.b16 %v3659, %v3658
    %v3671 = vpack.c.b16 %v3661, %v3660
    %v3672 = vpack.c.b16 %v3663, %v3662
    %v3673 = vpack.c.b16 %v3665, %v3664
    %3682 = vmatpush.bf16.msra.mxu0 %v3673
    %3683 = vmatpush.bf16.msra.mxu0 %v3672
    %3684 = vmatpush.bf16.msra.mxu0 %v3671
    %3685 = vmatpush.bf16.msra.mxu0 %v3670
    %3686 = vmatpush.bf16.msra.mxu0 %v3669
    %3687 = vmatpush.bf16.msra.mxu0 %v3668
    %3688 = vmatpush.bf16.msra.mxu0 %v3667
    %3689 = vmatpush.bf16.msra.mxu0 %v3666
    %3690 = vmatmul.bf16.gmra.mxu0 %v3457
    %v3691 = vpop.f32.mrf.mxu0
    %v3692 = vadd.f32 0.0, %v3691
    %v3693 = vpop.f32.mrf.mxu0
    %3694 = vdwg.mxu0
    %v3695 = vadd.f32 %v3615, %v3692
    %v3696 = vld [vmem:[%s21 + $0xc0] sm:$0xf]
    %v3697 = vld [vmem:[%s21 + $0xc4] sm:$0xf]
    %v3698 = vld [vmem:[%s21 + $0xc8] sm:$0xf]
    %v3699 = vld [vmem:[%s21 + $0xcc] sm:$0xf]
    %v3700 = vld [vmem:[%s21 + $0xd0] sm:$0xf]
    %v3701 = vld [vmem:[%s21 + $0xd4] sm:$0xf]
    %v3702 = vld [vmem:[%s21 + $0xd8] sm:$0xf]
    %v3703 = vld [vmem:[%s21 + $0xdc] sm:$0xf]
    %v3704 = vld [vmem:[%s21 + $0xe0] sm:$0xf]
    %v3705 = vld [vmem:[%s21 + $0xe4] sm:$0xf]
    %v3706 = vld [vmem:[%s21 + $0xe8] sm:$0xf]
    %v3707 = vld [vmem:[%s21 + $0xec] sm:$0xf]
    %v3708 = vld [vmem:[%s21 + $0xf0] sm:$0xf]
    %v3709 = vld [vmem:[%s21 + $0xf4] sm:$0xf]
    %v3710 = vld [vmem:[%s21 + $0xf8] sm:$0xf]
    %v3711 = vld [vmem:[%s21 + $0xfc] sm:$0xf]
    %v3728 = vunpack.c.l.b16 %v3696
    %v3729 = vunpack.c.l.b16 %v3697
    %v3730 = vunpack.c.l.b16 %v3698
    %v3731 = vunpack.c.l.b16 %v3699
    %v3732 = vunpack.c.l.b16 %v3700
    %v3733 = vunpack.c.l.b16 %v3701
    %v3734 = vunpack.c.l.b16 %v3702
    %v3735 = vunpack.c.l.b16 %v3703
    %v3736 = vunpack.c.l.b16 %v3704
    %v3737 = vunpack.c.l.b16 %v3705
    %v3738 = vunpack.c.l.b16 %v3706
    %v3739 = vunpack.c.l.b16 %v3707
    %v3740 = vunpack.c.l.b16 %v3708
    %v3741 = vunpack.c.l.b16 %v3709
    %v3742 = vunpack.c.l.b16 %v3710
    %v3743 = vunpack.c.l.b16 %v3711
    %v3744 = vpack.c.b16 %v3729, %v3728
    %v3745 = vpack.c.b16 %v3731, %v3730
    %v3746 = vpack.c.b16 %v3733, %v3732
    %v3747 = vpack.c.b16 %v3735, %v3734
    %v3748 = vpack.c.b16 %v3737, %v3736
    %v3749 = vpack.c.b16 %v3739, %v3738
    %v3750 = vpack.c.b16 %v3741, %v3740
    %v3751 = vpack.c.b16 %v3743, %v3742
    %3760 = vmatpush.bf16.msra.mxu0 %v3751
    %3761 = vmatpush.bf16.msra.mxu0 %v3750
    %3762 = vmatpush.bf16.msra.mxu0 %v3749
    %3763 = vmatpush.bf16.msra.mxu0 %v3748
    %3764 = vmatpush.bf16.msra.mxu0 %v3747
    %3765 = vmatpush.bf16.msra.mxu0 %v3746
    %3766 = vmatpush.bf16.msra.mxu0 %v3745
    %3767 = vmatpush.bf16.msra.mxu0 %v3744
    %3768 = vmatmul.bf16.gmra.mxu0 %v3458
    %v3769 = vpop.f32.mrf.mxu0
    %v3770 = vadd.f32 0.0, %v3769
    %v3771 = vpop.f32.mrf.mxu0
    %3772 = vdwg.mxu0
    %v3773 = vadd.f32 %v3695, %v3770
    %v3774 = vld [vmem:[%s21 + $0x100] sm:$0xf]
    %v3775 = vld [vmem:[%s21 + $0x104] sm:$0xf]
    %v3776 = vld [vmem:[%s21 + $0x108] sm:$0xf]
    %v3777 = vld [vmem:[%s21 + $0x10c] sm:$0xf]
    %v3778 = vld [vmem:[%s21 + $0x110] sm:$0xf]
    %v3779 = vld [vmem:[%s21 + $0x114] sm:$0xf]
    %v3780 = vld [vmem:[%s21 + $0x118] sm:$0xf]
    %v3781 = vld [vmem:[%s21 + $0x11c] sm:$0xf]
    %v3782 = vld [vmem:[%s21 + $0x120] sm:$0xf]
    %v3783 = vld [vmem:[%s21 + $0x124] sm:$0xf]
    %v3784 = vld [vmem:[%s21 + $0x128] sm:$0xf]
    %v3785 = vld [vmem:[%s21 + $0x12c] sm:$0xf]
    %v3786 = vld [vmem:[%s21 + $0x130] sm:$0xf]
    %v3787 = vld [vmem:[%s21 + $0x134] sm:$0xf]
    %v3788 = vld [vmem:[%s21 + $0x138] sm:$0xf]
    %v3789 = vld [vmem:[%s21 + $0x13c] sm:$0xf]
    %v3806 = vunpack.c.l.b16 %v3774
    %v3807 = vunpack.c.l.b16 %v3775
    %v3808 = vunpack.c.l.b16 %v3776
    %v3809 = vunpack.c.l.b16 %v3777
    %v3810 = vunpack.c.l.b16 %v3778
    %v3811 = vunpack.c.l.b16 %v3779
    %v3812 = vunpack.c.l.b16 %v3780
    %v3813 = vunpack.c.l.b16 %v3781
    %v3814 = vunpack.c.l.b16 %v3782
    %v3815 = vunpack.c.l.b16 %v3783
    %v3816 = vunpack.c.l.b16 %v3784
    %v3817 = vunpack.c.l.b16 %v3785
    %v3818 = vunpack.c.l.b16 %v3786
    %v3819 = vunpack.c.l.b16 %v3787
    %v3820 = vunpack.c.l.b16 %v3788
    %v3821 = vunpack.c.l.b16 %v3789
    %v3822 = vpack.c.b16 %v3807, %v3806
    %v3823 = vpack.c.b16 %v3809, %v3808
    %v3824 = vpack.c.b16 %v3811, %v3810
    %v3825 = vpack.c.b16 %v3813, %v3812
    %v3826 = vpack.c.b16 %v3815, %v3814
    %v3827 = vpack.c.b16 %v3817, %v3816
    %v3828 = vpack.c.b16 %v3819, %v3818
    %v3829 = vpack.c.b16 %v3821, %v3820
    %3838 = vmatpush.bf16.msra.mxu0 %v3829
    %3839 = vmatpush.bf16.msra.mxu0 %v3828
    %3840 = vmatpush.bf16.msra.mxu0 %v3827
    %3841 = vmatpush.bf16.msra.mxu0 %v3826
    %3842 = vmatpush.bf16.msra.mxu0 %v3825
    %3843 = vmatpush.bf16.msra.mxu0 %v3824
    %3844 = vmatpush.bf16.msra.mxu0 %v3823
    %3845 = vmatpush.bf16.msra.mxu0 %v3822
    %3846 = vmatmul.bf16.gmra.mxu0 %v3459
    %v3847 = vpop.f32.mrf.mxu0
    %v3848 = vadd.f32 0.0, %v3847
    %v3849 = vpop.f32.mrf.mxu0
    %3850 = vdwg.mxu0
    %v3851 = vadd.f32 %v3773, %v3848
    %v3852 = vld [vmem:[%s21 + $0x140] sm:$0xf]
    %v3853 = vld [vmem:[%s21 + $0x144] sm:$0xf]
    %v3854 = vld [vmem:[%s21 + $0x148] sm:$0xf]
    %v3855 = vld [vmem:[%s21 + $0x14c] sm:$0xf]
    %v3856 = vld [vmem:[%s21 + $0x150] sm:$0xf]
    %v3857 = vld [vmem:[%s21 + $0x154] sm:$0xf]
    %v3858 = vld [vmem:[%s21 + $0x158] sm:$0xf]
    %v3859 = vld [vmem:[%s21 + $0x15c] sm:$0xf]
    %v3860 = vld [vmem:[%s21 + $0x160] sm:$0xf]
    %v3861 = vld [vmem:[%s21 + $0x164] sm:$0xf]
    %v3862 = vld [vmem:[%s21 + $0x168] sm:$0xf]
    %v3863 = vld [vmem:[%s21 + $0x16c] sm:$0xf]
    %v3864 = vld [vmem:[%s21 + $0x170] sm:$0xf]
    %v3865 = vld [vmem:[%s21 + $0x174] sm:$0xf]
    %v3866 = vld [vmem:[%s21 + $0x178] sm:$0xf]
    %v3867 = vld [vmem:[%s21 + $0x17c] sm:$0xf]
    %v3884 = vunpack.c.l.b16 %v3852
    %v3885 = vunpack.c.l.b16 %v3853
    %v3886 = vunpack.c.l.b16 %v3854
    %v3887 = vunpack.c.l.b16 %v3855
    %v3888 = vunpack.c.l.b16 %v3856
    %v3889 = vunpack.c.l.b16 %v3857
    %v3890 = vunpack.c.l.b16 %v3858
    %v3891 = vunpack.c.l.b16 %v3859
    %v3892 = vunpack.c.l.b16 %v3860
    %v3893 = vunpack.c.l.b16 %v3861
    %v3894 = vunpack.c.l.b16 %v3862
    %v3895 = vunpack.c.l.b16 %v3863
    %v3896 = vunpack.c.l.b16 %v3864
    %v3897 = vunpack.c.l.b16 %v3865
    %v3898 = vunpack.c.l.b16 %v3866
    %v3899 = vunpack.c.l.b16 %v3867
    %v3900 = vpack.c.b16 %v3885, %v3884
    %v3901 = vpack.c.b16 %v3887, %v3886
    %v3902 = vpack.c.b16 %v3889, %v3888
    %v3903 = vpack.c.b16 %v3891, %v3890
    %v3904 = vpack.c.b16 %v3893, %v3892
    %v3905 = vpack.c.b16 %v3895, %v3894
    %v3906 = vpack.c.b16 %v3897, %v3896
    %v3907 = vpack.c.b16 %v3899, %v3898
    %3916 = vmatpush.bf16.msra.mxu0 %v3907
    %3917 = vmatpush.bf16.msra.mxu0 %v3906
    %3918 = vmatpush.bf16.msra.mxu0 %v3905
    %3919 = vmatpush.bf16.msra.mxu0 %v3904
    %3920 = vmatpush.bf16.msra.mxu0 %v3903
    %3921 = vmatpush.bf16.msra.mxu0 %v3902
    %3922 = vmatpush.bf16.msra.mxu0 %v3901
    %3923 = vmatpush.bf16.msra.mxu0 %v3900
    %3924 = vmatmul.bf16.gmra.mxu0 %v3460
    %v3925 = vpop.f32.mrf.mxu0
    %v3926 = vadd.f32 0.0, %v3925
    %v3927 = vpop.f32.mrf.mxu0
    %3928 = vdwg.mxu0
    %v3929 = vadd.f32 %v3851, %v3926
    %v3930 = vld [vmem:[%s21 + $0x180] sm:$0xf]
    %v3931 = vld [vmem:[%s21 + $0x184] sm:$0xf]
    %v3932 = vld [vmem:[%s21 + $0x188] sm:$0xf]
    %v3933 = vld [vmem:[%s21 + $0x18c] sm:$0xf]
    %v3934 = vld [vmem:[%s21 + $0x190] sm:$0xf]
    %v3935 = vld [vmem:[%s21 + $0x194] sm:$0xf]
    %v3936 = vld [vmem:[%s21 + $0x198] sm:$0xf]
    %v3937 = vld [vmem:[%s21 + $0x19c] sm:$0xf]
    %v3938 = vld [vmem:[%s21 + $0x1a0] sm:$0xf]
    %v3939 = vld [vmem:[%s21 + $0x1a4] sm:$0xf]
    %v3940 = vld [vmem:[%s21 + $0x1a8] sm:$0xf]
    %v3941 = vld [vmem:[%s21 + $0x1ac] sm:$0xf]
    %v3942 = vld [vmem:[%s21 + $0x1b0] sm:$0xf]
    %v3943 = vld [vmem:[%s21 + $0x1b4] sm:$0xf]
    %v3944 = vld [vmem:[%s21 + $0x1b8] sm:$0xf]
    %v3945 = vld [vmem:[%s21 + $0x1bc] sm:$0xf]
    %v3962 = vunpack.c.l.b16 %v3930
    %v3963 = vunpack.c.l.b16 %v3931
    %v3964 = vunpack.c.l.b16 %v3932
    %v3965 = vunpack.c.l.b16 %v3933
    %v3966 = vunpack.c.l.b16 %v3934
    %v3967 = vunpack.c.l.b16 %v3935
    %v3968 = vunpack.c.l.b16 %v3936
    %v3969 = vunpack.c.l.b16 %v3937
    %v3970 = vunpack.c.l.b16 %v3938
    %v3971 = vunpack.c.l.b16 %v3939
    %v3972 = vunpack.c.l.b16 %v3940
    %v3973 = vunpack.c.l.b16 %v3941
    %v3974 = vunpack.c.l.b16 %v3942
    %v3975 = vunpack.c.l.b16 %v3943
    %v3976 = vunpack.c.l.b16 %v3944
    %v3977 = vunpack.c.l.b16 %v3945
    %v3978 = vpack.c.b16 %v3963, %v3962
    %v3979 = vpack.c.b16 %v3965, %v3964
    %v3980 = vpack.c.b16 %v3967, %v3966
    %v3981 = vpack.c.b16 %v3969, %v3968
    %v3982 = vpack.c.b16 %v3971, %v3970
    %v3983 = vpack.c.b16 %v3973, %v3972
    %v3984 = vpack.c.b16 %v3975, %v3974
    %v3985 = vpack.c.b16 %v3977, %v3976
    %3994 = vmatpush.bf16.msra.mxu0 %v3985
    %3995 = vmatpush.bf16.msra.mxu0 %v3984
    %3996 = vmatpush.bf16.msra.mxu0 %v3983
    %3997 = vmatpush.bf16.msra.mxu0 %v3982
    %3998 = vmatpush.bf16.msra.mxu0 %v3981
    %3999 = vmatpush.bf16.msra.mxu0 %v3980
    %4000 = vmatpush.bf16.msra.mxu0 %v3979
    %4001 = vmatpush.bf16.msra.mxu0 %v3978
    %4002 = vmatmul.bf16.gmra.mxu0 %v3461
    %v4003 = vpop.f32.mrf.mxu0
    %v4004 = vadd.f32 0.0, %v4003
    %v4005 = vpop.f32.mrf.mxu0
    %4006 = vdwg.mxu0
    %v4007 = vadd.f32 %v3929, %v4004
    %v4008 = vld [vmem:[%s21 + $0x1c0] sm:$0xf]
    %v4009 = vld [vmem:[%s21 + $0x1c4] sm:$0xf]
    %v4010 = vld [vmem:[%s21 + $0x1c8] sm:$0xf]
    %v4011 = vld [vmem:[%s21 + $0x1cc] sm:$0xf]
    %v4012 = vld [vmem:[%s21 + $0x1d0] sm:$0xf]
    %v4013 = vld [vmem:[%s21 + $0x1d4] sm:$0xf]
    %v4014 = vld [vmem:[%s21 + $0x1d8] sm:$0xf]
    %v4015 = vld [vmem:[%s21 + $0x1dc] sm:$0xf]
    %v4016 = vld [vmem:[%s21 + $0x1e0] sm:$0xf]
    %v4017 = vld [vmem:[%s21 + $0x1e4] sm:$0xf]
    %v4018 = vld [vmem:[%s21 + $0x1e8] sm:$0xf]
    %v4019 = vld [vmem:[%s21 + $0x1ec] sm:$0xf]
    %v4020 = vld [vmem:[%s21 + $0x1f0] sm:$0xf]
    %v4021 = vld [vmem:[%s21 + $0x1f4] sm:$0xf]
    %v4022 = vld [vmem:[%s21 + $0x1f8] sm:$0xf]
    %v4023 = vld [vmem:[%s21 + $0x1fc] sm:$0xf]
    %v4040 = vunpack.c.l.b16 %v4008
    %v4041 = vunpack.c.l.b16 %v4009
    %v4042 = vunpack.c.l.b16 %v4010
    %v4043 = vunpack.c.l.b16 %v4011
    %v4044 = vunpack.c.l.b16 %v4012
    %v4045 = vunpack.c.l.b16 %v4013
    %v4046 = vunpack.c.l.b16 %v4014
    %v4047 = vunpack.c.l.b16 %v4015
    %v4048 = vunpack.c.l.b16 %v4016
    %v4049 = vunpack.c.l.b16 %v4017
    %v4050 = vunpack.c.l.b16 %v4018
    %v4051 = vunpack.c.l.b16 %v4019
    %v4052 = vunpack.c.l.b16 %v4020
    %v4053 = vunpack.c.l.b16 %v4021
    %v4054 = vunpack.c.l.b16 %v4022
    %v4055 = vunpack.c.l.b16 %v4023
    %v4056 = vpack.c.b16 %v4041, %v4040
    %v4057 = vpack.c.b16 %v4043, %v4042
    %v4058 = vpack.c.b16 %v4045, %v4044
    %v4059 = vpack.c.b16 %v4047, %v4046
    %v4060 = vpack.c.b16 %v4049, %v4048
    %v4061 = vpack.c.b16 %v4051, %v4050
    %v4062 = vpack.c.b16 %v4053, %v4052
    %v4063 = vpack.c.b16 %v4055, %v4054
    %4072 = vmatpush.bf16.msra.mxu0 %v4063
    %4073 = vmatpush.bf16.msra.mxu0 %v4062
    %4074 = vmatpush.bf16.msra.mxu0 %v4061
    %4075 = vmatpush.bf16.msra.mxu0 %v4060
    %4076 = vmatpush.bf16.msra.mxu0 %v4059
    %4077 = vmatpush.bf16.msra.mxu0 %v4058
    %4078 = vmatpush.bf16.msra.mxu0 %v4057
    %4079 = vmatpush.bf16.msra.mxu0 %v4056
    %4080 = vmatmul.bf16.gmra.mxu0 %v3462
    %v4081 = vpop.f32.mrf.mxu0
    %v4082 = vadd.f32 0.0, %v4081
    %v4083 = vpop.f32.mrf.mxu0
    %4084 = vdwg.mxu0
    %v4085 = vadd.f32 %v4007, %v4082
    %v4086 = vld [vmem:[%s21 + $0x200] sm:$0xf]
    %v4087 = vld [vmem:[%s21 + $0x204] sm:$0xf]
    %v4088 = vld [vmem:[%s21 + $0x208] sm:$0xf]
    %v4089 = vld [vmem:[%s21 + $0x20c] sm:$0xf]
    %v4090 = vld [vmem:[%s21 + $0x210] sm:$0xf]
    %v4091 = vld [vmem:[%s21 + $0x214] sm:$0xf]
    %v4092 = vld [vmem:[%s21 + $0x218] sm:$0xf]
    %v4093 = vld [vmem:[%s21 + $0x21c] sm:$0xf]
    %v4094 = vld [vmem:[%s21 + $0x220] sm:$0xf]
    %v4095 = vld [vmem:[%s21 + $0x224] sm:$0xf]
    %v4096 = vld [vmem:[%s21 + $0x228] sm:$0xf]
    %v4097 = vld [vmem:[%s21 + $0x22c] sm:$0xf]
    %v4098 = vld [vmem:[%s21 + $0x230] sm:$0xf]
    %v4099 = vld [vmem:[%s21 + $0x234] sm:$0xf]
    %v4100 = vld [vmem:[%s21 + $0x238] sm:$0xf]
    %v4101 = vld [vmem:[%s21 + $0x23c] sm:$0xf]
    %v4118 = vunpack.c.l.b16 %v4086
    %v4119 = vunpack.c.l.b16 %v4087
    %v4120 = vunpack.c.l.b16 %v4088
    %v4121 = vunpack.c.l.b16 %v4089
    %v4122 = vunpack.c.l.b16 %v4090
    %v4123 = vunpack.c.l.b16 %v4091
    %v4124 = vunpack.c.l.b16 %v4092
    %v4125 = vunpack.c.l.b16 %v4093
    %v4126 = vunpack.c.l.b16 %v4094
    %v4127 = vunpack.c.l.b16 %v4095
    %v4128 = vunpack.c.l.b16 %v4096
    %v4129 = vunpack.c.l.b16 %v4097
    %v4130 = vunpack.c.l.b16 %v4098
    %v4131 = vunpack.c.l.b16 %v4099
    %v4132 = vunpack.c.l.b16 %v4100
    %v4133 = vunpack.c.l.b16 %v4101
    %v4134 = vpack.c.b16 %v4119, %v4118
    %v4135 = vpack.c.b16 %v4121, %v4120
    %v4136 = vpack.c.b16 %v4123, %v4122
    %v4137 = vpack.c.b16 %v4125, %v4124
    %v4138 = vpack.c.b16 %v4127, %v4126
    %v4139 = vpack.c.b16 %v4129, %v4128
    %v4140 = vpack.c.b16 %v4131, %v4130
    %v4141 = vpack.c.b16 %v4133, %v4132
    %4150 = vmatpush.bf16.msra.mxu0 %v4141
    %4151 = vmatpush.bf16.msra.mxu0 %v4140
    %4152 = vmatpush.bf16.msra.mxu0 %v4139
    %4153 = vmatpush.bf16.msra.mxu0 %v4138
    %4154 = vmatpush.bf16.msra.mxu0 %v4137
    %4155 = vmatpush.bf16.msra.mxu0 %v4136
    %4156 = vmatpush.bf16.msra.mxu0 %v4135
    %4157 = vmatpush.bf16.msra.mxu0 %v4134
    %4158 = vmatmul.bf16.gmra.mxu0 %v3463
    %v4159 = vpop.f32.mrf.mxu0
    %v4160 = vadd.f32 0.0, %v4159
    %v4161 = vpop.f32.mrf.mxu0
    %4162 = vdwg.mxu0
    %v4163 = vadd.f32 %v4085, %v4160
    %v4164 = vld [vmem:[%s22] sm:$0x1]
    %v4165 = vld [vmem:[%s23] sm:$0x1]
    %v4166 = vld [vmem:[%s24] sm:$0x1]
    %v4168 = vperm.slane %v4164, 0
    %v4170 = vadd.f32 %v4163, %v4168
    %v4171 = vmax.f32 %v4170, 0.0
    %v4172 = vsel %vm3323, %v4171, 0.0
    %v4173 = vrot.slane %v4172, 4
    %v4174 = vadd.f32 %v4172, %v4173
    %v4175 = vrot.slane %v4174, 2
    %v4176 = vadd.f32 %v4174, %v4175
    %v4177 = vrot.slane %v4176, 1
    %v4178 = vadd.f32 %v4176, %v4177
    %v4179 = vmul.f32 %v4178, %v3337
    %v4180 = vsub.f32 %v4171, %v4179
    %v4181 = vmul.f32 %v4180, %v4180
    %v4182 = vsel %vm3323, %v4181, 0.0
    %v4183 = vrot.slane %v4182, 4
    %v4184 = vadd.f32 %v4182, %v4183
    %v4185 = vrot.slane %v4184, 2
    %v4186 = vadd.f32 %v4184, %v4185
    %v4187 = vrot.slane %v4186, 1
    %v4188 = vadd.f32 %v4186, %v4187
    %v4189 = vmul.f32 %v4188, %v3337
    %v4190 = vadd.f32 %v4189, 1e-05
    %v4191 = vrsqrt.pop %v4190
    %v4192 = vmul.f32 %v4191, %v4190
    %v4193 = vmul.f32 %v4192, %v4191
    %v4194 = vmul.f32 0.5, %v4193
    %v4195 = vsub.f32 1.5, %v4194
    %v4196 = vmul.f32 %v4191, %v4195
    %vm4197 = vweird.f32 %v4190
    %vm4198 = vweird.f32 %v4191
    %vm4199 = vmor %vm4197, %vm4198
    %v4200 = vsel %vm4199, %v4191, %v4196
    %v4201 = vmul.f32 %v4180, %v4200
    %v4203 = vperm.slane %v4165, 0
    %v4205 = vmul.f32 %v4201, %v4203
    %v4207 = vperm.slane %v4166, 0
    %v4209 = vadd.f32 %v4205, %v4207
    %4210 = vst [vmem:[#allocation2] sm:$0x3] %v4209
    // Predicated region
    $region102: #{_lambda_.1} parent=1 // pred_check
      _
    $region103: #{_lambda_.1} parent=1 // pred_check_branch
      %4212 = sbr.rel (0) target = $region105
    $region104: #{_lambda_.1} parent=1 // pred_region
      %4214 = vsyncadd [#allocation3], 0
      %s4216 = sshll.u32 [#allocation2], 4
      %s4217 = int_to_ptr.vmem [resolvable:$true] %s4216
      %s4218 = sshll.u32 %s25, 4
      %s4219 = int_to_ptr.hbm [resolvable:$true] %s4218
      %4221 = dma.vmem_to_hbm [thread:$0]  %s4217, 32, %s4219, [#allocation3]
    $region105: #{_lambda_.1} parent=1 // pred_fallthru
      _
    // Predicated region
    $region106: #{_lambda_.1} parent=1 // pred_check
      _
    $region107: #{_lambda_.1} parent=1 // pred_check_branch
      %4223 = sbr.rel (0) target = $region109
    $region108: #{_lambda_.1} parent=1 // pred_region
      %4225 = dma.done [#allocation3], 32
    $region109: #{_lambda_.1} parent=1 // pred_fallthru
      _
    %4226 = vsyncpa [#allocation3], 1

</llo_original>
